<compile_context>
chip_gen: v7x
topology: tpu7x:2x2x1
jax: 0.10.0
libtpu: 0.0.40
codegen_flags: <defaults>
</compile_context>

<pallas_src>
import jax
import jax.numpy as jnp
from jax import lax
from jax.experimental import pallas as pl
from jax.experimental.pallas import tpu as pltpu


def _round_up(x, m):
    return ((x + m - 1) // m) * m


# ----------------------------------------------------------------------------
# Pallas kernel: one bidirectional GRU layer, both directions interleaved in a
# single time loop (two independent recurrence chains per step).
# ----------------------------------------------------------------------------
def _bigru_layer_kernel(x_ref, lens_ref, w_ih_ref, w_hh_f_ref, w_hh_b_ref,
                        b_gi_ref, b_hn_ref, h0_ref, out_ref, hN_ref, gi_scr):
    # x_ref:     (T, Bp, Dp)    bf16 time-major input (padded)
    # lens_ref:  (Bp, 1)        int32 per-example seq lens (0 for padded rows)
    # w_ih_ref:  (Dp, 6*Hp)     bf16, cols = [fwd(r,z,n) | bwd(r,z,n)]
    # w_hh_f/b:  (Hp, 3*Hp)     bf16 per direction
    # b_gi_ref:  (1, 6*Hp)      f32  [b_ir+b_hr, b_iz+b_hz, b_in] per direction
    # b_hn_ref:  (1, 2*Hp)      f32  [b_hn_fwd | b_hn_bwd]
    # h0_ref:    (2, Bp, Hp)    f32  initial hidden (fwd, bwd)
    # out_ref:   (T, Bp, 2*Hp)  bf16 per-step outputs, [fwd | bwd] along lanes
    # hN_ref:    (2, Bp, Hp)    f32  final hidden per direction
    # gi_scr:    (T, Bp, 6*Hp)  f32  hoisted input projection (both directions)
    T, Bp, Dp = x_ref.shape
    Hp = hN_ref.shape[-1]

    # Hoisted input projection for BOTH directions: one big bf16 MXU matmul
    # (M = T*Bp, N = 6*Hp) with f32 accumulation; r/z biases pre-fused.
    x_all = x_ref[...].reshape(T * Bp, Dp)
    gi_all = jnp.dot(x_all, w_ih_ref[...], preferred_element_type=jnp.float32)
    gi_scr[...] = (gi_all + b_gi_ref[...]).reshape(T, Bp, 6 * Hp)

    lens = lens_ref[...]                       # (Bp, 1) int32, hoisted
    b_hn_f = b_hn_ref[:, :Hp]                  # (1, Hp) f32, hoisted
    b_hn_b = b_hn_ref[:, Hp:]

    def gru_cell(gi, gh, b_hn, h):
        # All elementwise math in f32 (v5e VPU/EUP have no bf16).
        r = jax.nn.sigmoid(gi[:, :Hp] + gh[:, :Hp])
        z = jax.nn.sigmoid(gi[:, Hp:2 * Hp] + gh[:, Hp:2 * Hp])
        n = jnp.tanh(gi[:, 2 * Hp:] + r * (gh[:, 2 * Hp:] + b_hn))
        return h + (1.0 - z) * (n - h)         # == (1-z)*n + z*h

    def step(t, carry):
        hf, hb = carry                         # (Bp, Hp) f32 each
        tb = T - 1 - t                         # backward walks padded time reversed

        gi_f = gi_scr[t, :, :3 * Hp]           # (Bp, 3Hp)
        gi_b = gi_scr[tb, :, 3 * Hp:]
        m_f = (t < lens).astype(jnp.float32)   # (Bp, 1) on-the-fly mask
        m_b = (tb < lens).astype(jnp.float32)

        # Two independent recurrent matmuls per step -> fills MXU/EUP pipelines.
        gh_f = jnp.dot(hf.astype(jnp.bfloat16), w_hh_f_ref[...],
                       preferred_element_type=jnp.float32)
        gh_b = jnp.dot(hb.astype(jnp.bfloat16), w_hh_b_ref[...],
                       preferred_element_type=jnp.float32)

        hf_new = gru_cell(gi_f, gh_f, b_hn_f, hf)
        hb_new = gru_cell(gi_b, gh_b, b_hn_b, hb)

        hf_upd = hf + m_f * (hf_new - hf)      # hold hidden past seq_len
        hb_upd = hb + m_b * (hb_new - hb)

        # Write straight into the fused [fwd | bwd] output slab (zero when padded).
        out_ref[t, :, :Hp] = (m_f * hf_upd).astype(out_ref.dtype)
        out_ref[tb, :, Hp:] = (m_b * hb_upd).astype(out_ref.dtype)
        # TODO(synk): if a v5e bundle dump shows vst-slot saturation, stage the
        # output rows in a small VMEM buffer and flush every k steps.
        return (hf_upd, hb_upd)

    h0 = h0_ref[...]
    hf_N, hb_N = lax.fori_loop(0, T, step, (h0[0], h0[1]),
                               unroll=True if T <= 32 else 8)
    hN_ref[0] = hf_N
    hN_ref[1] = hb_N


def bigru_layer(x_tbd, lens, w_ih, w_hh_f, w_hh_b, b_gi, b_hn, h0):
    """One bidirectional GRU layer. Inputs already padded / time-major / bf16."""
    T, Bp, Dp = x_tbd.shape
    Hp = h0.shape[-1]
    out, hN = pl.pallas_call(
        _bigru_layer_kernel,
        out_shape=(jax.ShapeDtypeStruct((T, Bp, 2 * Hp), jnp.bfloat16),
                   jax.ShapeDtypeStruct((2, Bp, Hp), jnp.float32)),
        scratch_shapes=[pltpu.VMEM((T, Bp, 6 * Hp), jnp.float32)],
        compiler_params=pltpu.CompilerParams(
            vmem_limit_bytes=48 * 1024 * 1024,   # < v7x 64 MiB physical, raises v5e/v6e defaults
        ),
    )(x_tbd, lens, w_ih, w_hh_f, w_hh_b, b_gi, b_hn, h0)
    return out, hN
    # TODO(synk): for very long T, chunk the time axis (grid over T/Tc marked
    # "arbitrary", h carried in scratch, reversed chunk order for the backward
    # direction) to bound gi_scr/x/out VMEM residency on v7x (64 MiB/TC); full-T
    # residency is fine at these sizes.
    # TODO(synk): for large batches on v7x, shard Bp across the two TensorCores
    # via pltpu.CORE_PARALLEL / pl.core_map; moot at Bp=8.


# ----------------------------------------------------------------------------
# Parameter init (deterministic, mirrors nn.GRU shapes; gate order r, z, n)
# plus prepacked fused/padded bf16 tensors for the kernel.
# ----------------------------------------------------------------------------
def init_params(key, input_size, hidden_size, num_layers, lane=128):
    H = hidden_size
    bound = 1.0 / (H ** 0.5)
    raw_layers = []
    for l in range(num_layers):
        d_in = input_size if l == 0 else 2 * H
        layer = {}
        for dname in ("fwd", "bwd"):
            key, k1, k2, k3, k4 = jax.random.split(key, 5)
            w_ih = jax.random.uniform(k1, (3, d_in, H), jnp.float32, -bound, bound)
            w_hh = jax.random.uniform(k2, (3, H, H), jnp.float32, -bound, bound)
            b_ih = jax.random.uniform(k3, (3, H), jnp.float32, -bound, bound)
            b_hh = jax.random.uniform(k4, (3, H), jnp.float32, -bound, bound)
            layer[dname] = (w_ih, w_hh, b_ih, b_hh)
        raw_layers.append(layer)
    init_h = jnp.zeros((2 * num_layers, 1, H), jnp.float32)  # matches torch.zeros param

    Hp = _round_up(H, lane)
    Din0p = _round_up(input_size, lane)
    padded_layers = []
    for l in range(num_layers):
        d_in = input_size if l == 0 else 2 * H
        d_in_pad = Din0p if l == 0 else 2 * Hp
        w_ih_p = jnp.zeros((d_in_pad, 6 * Hp), jnp.float32)
        w_hh_f_p = jnp.zeros((Hp, 3 * Hp), jnp.float32)
        w_hh_b_p = jnp.zeros((Hp, 3 * Hp), jnp.float32)
        b_gi_p = jnp.zeros((1, 6 * Hp), jnp.float32)
        b_hn_p = jnp.zeros((1, 2 * Hp), jnp.float32)
        for d, dname in enumerate(("fwd", "bwd")):
            w_ih, w_hh, b_ih, b_hh = raw_layers[l][dname]
            off = d * 3 * Hp
            for g in range(3):  # gates r, z, n
                col = slice(off + g * Hp, off + g * Hp + H)
                if l == 0:
                    w_ih_p = w_ih_p.at[:d_in, col].set(w_ih[g])
                else:
                    # inter-layer input layout: [fwd block Hp | bwd block Hp],
                    # real features in the first H columns of each block
                    w_ih_p = w_ih_p.at[:H, col].set(w_ih[g, :H])
                    w_ih_p = w_ih_p.at[Hp:Hp + H, col].set(w_ih[g, H:])
                colh = slice(g * Hp, g * Hp + H)
                if d == 0:
                    w_hh_f_p = w_hh_f_p.at[:H, colh].set(w_hh[g])
                else:
                    w_hh_b_p = w_hh_b_p.at[:H, colh].set(w_hh[g])
            # fused gi bias: r,z get b_ih+b_hh; n gets b_ih only (b_hh_n stays
            # inside the r * (.) term, so it cannot be merged).
            b_gi_p = b_gi_p.at[0, off + 0 * Hp: off + 0 * Hp + H].set(b_ih[0] + b_hh[0])
            b_gi_p = b_gi_p.at[0, off + 1 * Hp: off + 1 * Hp + H].set(b_ih[1] + b_hh[1])
            b_gi_p = b_gi_p.at[0, off + 2 * Hp: off + 2 * Hp + H].set(b_ih[2])
            b_hn_p = b_hn_p.at[0, d * Hp: d * Hp + H].set(b_hh[2])
        padded_layers.append({"w_ih": w_ih_p.astype(jnp.bfloat16),
                              "w_hh_f": w_hh_f_p.astype(jnp.bfloat16),
                              "w_hh_b": w_hh_b_p.astype(jnp.bfloat16),
                              "b_gi": b_gi_p, "b_hn": b_hn_p})

    return {"layers": raw_layers, "init_h": init_h,
            "hidden_size": H, "num_layers": num_layers, "input_size": input_size,
            "padded_layers": padded_layers, "padded_hidden": Hp, "padded_in": Din0p}


# ----------------------------------------------------------------------------
# Forward pass equivalent to MultiBiGRU.forward (eval mode).
# ----------------------------------------------------------------------------
def multi_bi_gru_forward(params, x, seq_lens, init_h=None):
    # x: (B, T, input_size) float32, seq_lens: (B,) int (all >= 1)
    B, T, Din = x.shape
    H = params["hidden_size"]
    L = params["num_layers"]
    Hp = params["padded_hidden"]
    Din0p = params["padded_in"]
    Bp = _round_up(B, 8)
    # NOTE: the per-step (Bp,Hp)x(Hp,3Hp) matmul only fills the MXU if Bp is
    # large; batch many sequences per call (Bp >= 128/256) in deployment.

    if init_h is None:
        init_h = jnp.tile(params["init_h"], (1, B, 1))            # (2L, B, H)

    lens = jnp.zeros((Bp, 1), jnp.int32).at[:B, 0].set(seq_lens.astype(jnp.int32))

    # single transpose to time-major + padding; activations stay time-major and
    # bf16 across all layers (no per-layer transposes, gathers, or concats).
    x_t = jnp.transpose(x, (1, 0, 2))                             # (T, B, Din)
    x_t = jnp.pad(x_t, ((0, 0), (0, Bp - B), (0, Din0p - Din)))
    layer_in = x_t.astype(jnp.bfloat16)                           # (T, Bp, Din0p)

    hiddens = []
    for l in range(L):
        pw = params["padded_layers"][l]
        h0 = jnp.zeros((2, Bp, Hp), jnp.float32)
        h0 = h0.at[0, :B, :H].set(init_h[2 * l])
        h0 = h0.at[1, :B, :H].set(init_h[2 * l + 1])

        out, hN = bigru_layer(layer_in, lens, pw["w_ih"], pw["w_hh_f"], pw["w_hh_b"],
                              pw["b_gi"], pw["b_hn"], h0)
        layer_in = out                       # (T, Bp, 2*Hp) bf16, fed directly
        hiddens += [hN[0, :B, :H], hN[1, :B, :H]]
        # TODO(synk): inter-layer dropout is train-only in nn.GRU; eval forward omits it.

    hidden = jnp.concatenate(hiddens, axis=-1)                    # (B, 2*L*H) f32
    out_f = layer_in[:, :B, :H].astype(jnp.float32)
    out_b = layer_in[:, :B, Hp:Hp + H].astype(jnp.float32)
    outputs = jnp.transpose(jnp.concatenate([out_f, out_b], axis=-1), (1, 0, 2))
    return hidden, outputs                                        # (B,2LH), (B,T,2H)


# ----------------------------------------------------------------------------
# Pure-JAX f32 reference (independent path: explicit per-example reversal) used
# to sanity-check the kernel numerics in the demo.
# ----------------------------------------------------------------------------
def _gru_ref_dir(x_tbd, mask_tb, w_ih, w_hh, b_ih, b_hh, h0):
    def step(h, xm):
        x_t, m_t = xm
        r = jax.nn.sigmoid(x_t @ w_ih[0] + b_ih[0] + h @ w_hh[0] + b_hh[0])
        z = jax.nn.sigmoid(x_t @ w_ih[1] + b_ih[1] + h @ w_hh[1] + b_hh[1])
        n = jnp.tanh(x_t @ w_ih[2] + b_ih[2] + r * (h @ w_hh[2] + b_hh[2]))
        h_new = (1.0 - z) * n + z * h
        m = m_t[:, None]
        h_upd = m * h_new + (1.0 - m) * h
        return h_upd, m * h_upd
    hN, out = lax.scan(step, h0, (x_tbd, mask_tb))
    return out, hN


def multi_bi_gru_reference(params, x, seq_lens, init_h=None):
    B, T, _ = x.shape
    L = params["num_layers"]
    if init_h is None:
        init_h = jnp.tile(params["init_h"], (1, B, 1))
    t_idx = jnp.arange(T)
    mask_bt = (t_idx[None, :] < seq_lens[:, None]).astype(jnp.float32)
    mask_tb = mask_bt.T
    rev_idx = jnp.clip(seq_lens[:, None] - 1 - t_idx[None, :], 0, T - 1)
    layer_in = x
    hiddens = []
    for l in range(L):
        wl = params["layers"][l]
        x_tbd = jnp.transpose(layer_in, (1, 0, 2))
        out_f_t, hN_f = _gru_ref_dir(x_tbd, mask_tb, *wl["fwd"], init_h[2 * l])
        out_f = jnp.transpose(out_f_t, (1, 0, 2))
        x_rev = jnp.take_along_axis(layer_in, rev_idx[:, :, None], axis=1)
        out_b_rev_t, hN_b = _gru_ref_dir(jnp.transpose(x_rev, (1, 0, 2)), mask_tb,
                                         *wl["bwd"], init_h[2 * l + 1])
        out_b_rev = jnp.transpose(out_b_rev_t, (1, 0, 2))
        out_b = jnp.take_along_axis(out_b_rev, rev_idx[:, :, None], axis=1) \
                * mask_bt[:, :, None]
        layer_in = jnp.concatenate([out_f, out_b], axis=-1)
        hiddens += [hN_f, hN_b]
    return jnp.concatenate(hiddens, axis=-1), layer_in


if __name__ == "__main__":
    key = jax.random.PRNGKey(0)
    B, T, input_size, hidden_size, num_layers = 4, 8, 16, 32, 2

    kx, kp = jax.random.split(key)
    x = jax.random.normal(kx, (B, T, input_size), jnp.float32)
    seq_lens = jnp.array([8, 5, 3, 6], dtype=jnp.int32)   # max == T
    params = init_params(kp, input_size, hidden_size, num_layers)

    hidden, outputs = multi_bi_gru_forward(params, x, seq_lens)
    # pad_packed_sequence pads only up to max(seq_lens)
    max_len = int(jax.device_get(seq_lens).max())
    outputs = outputs[:, :max_len]
    jax.block_until_ready((hidden, outputs))

    assert hidden.shape == (B, 2 * num_layers * hidden_size)
    assert outputs.shape == (B, max_len, 2 * hidden_size)

    # numerics check against the pure-f32 JAX reference (kernel uses bf16 MXU
    # operands and bf16 inter-layer activations, hence the looser tolerance).
    ref_hidden, ref_outputs = multi_bi_gru_reference(params, x, seq_lens)
    ref_outputs = ref_outputs[:, :max_len]
    assert float(jnp.max(jnp.abs(hidden - ref_hidden))) < 8e-2
    assert float(jnp.max(jnp.abs(outputs - ref_outputs))) < 8e-2

    print("KERNEL_OK")
</pallas_src>

<mosaic_0001>
module attributes {stable_mosaic.version = 11 : i64} {
  func.func @_bigru_layer_kernel(%arg0: memref<8x8x128xbf16, #tpu.memory_space<vmem>>, %arg1: memref<8x1xi32, #tpu.memory_space<vmem>>, %arg2: memref<128x768xbf16, #tpu.memory_space<vmem>>, %arg3: memref<128x384xbf16, #tpu.memory_space<vmem>>, %arg4: memref<128x384xbf16, #tpu.memory_space<vmem>>, %arg5: memref<1x768xf32, #tpu.memory_space<vmem>>, %arg6: memref<1x256xf32, #tpu.memory_space<vmem>>, %arg7: memref<2x8x128xf32, #tpu.memory_space<vmem>>, %arg8: memref<8x8x256xbf16, #tpu.memory_space<vmem>>, %arg9: memref<2x8x128xf32, #tpu.memory_space<vmem>>, %arg10: memref<8x8x768xf32, #tpu.memory_space<vmem>>) attributes {dimension_semantics = [], scalar_prefetch = 0 : i64, scratch_operands = 1 : i64, tpu.core_type = #tpu.core_type<tc>} {
    %c0 = arith.constant 0 : index
    %c0_0 = arith.constant 0 : index
    %c0_1 = arith.constant 0 : index
    %0 = vector.load %arg0[%c0, %c0_0, %c0_1] : memref<8x8x128xbf16, #tpu.memory_space<vmem>>, vector<8x8x128xbf16>
    %1 = vector.shape_cast %0 : vector<8x8x128xbf16> to vector<64x128xbf16>
    %c0_2 = arith.constant 0 : index
    %c0_3 = arith.constant 0 : index
    %2 = vector.load %arg2[%c0_2, %c0_3] : memref<128x768xbf16, #tpu.memory_space<vmem>>, vector<128x768xbf16>
    %cst = arith.constant dense<0.000000e+00> : vector<64x768xf32>
    %3 = tpu.matmul %1, %2, %cst {dimension_numbers = #tpu.dot_dimension_numbers<[1], [0], [0], [1], [0, 0, 1, 1], [], []>} : vector<64x128xbf16>, vector<128x768xbf16>, vector<64x768xf32> -> vector<64x768xf32>
    %c0_4 = arith.constant 0 : index
    %c0_5 = arith.constant 0 : index
    %4 = vector.load %arg5[%c0_4, %c0_5] : memref<1x768xf32, #tpu.memory_space<vmem>>, vector<1x768xf32>
    %5 = vector.broadcast %4 : vector<1x768xf32> to vector<64x768xf32>
    %6 = arith.addf %3, %5 : vector<64x768xf32>
    %7 = vector.shape_cast %6 : vector<64x768xf32> to vector<8x8x768xf32>
    %c0_6 = arith.constant 0 : index
    %c0_7 = arith.constant 0 : index
    %c0_8 = arith.constant 0 : index
    %8 = vector.load %arg10[%c0_6, %c0_7, %c0_8] : memref<8x8x768xf32, #tpu.memory_space<vmem>>, vector<8x8x768xf32>
    tpu.vector_store %arg10[%c0_6, %c0_7, %c0_8], %7 {strides = array<i32>} : memref<8x8x768xf32, #tpu.memory_space<vmem>>, vector<8x8x768xf32>,
    %c0_9 = arith.constant 0 : index
    %c0_10 = arith.constant 0 : index
    %9 = vector.load %arg1[%c0_9, %c0_10] : memref<8x1xi32, #tpu.memory_space<vmem>>, vector<8x1xi32>
    %c0_11 = arith.constant 0 : index
    %c0_12 = arith.constant 0 : index
    %10 = vector.load %arg6[%c0_11, %c0_12] : memref<1x256xf32, #tpu.memory_space<vmem>>, vector<1x128xf32>
    %c0_13 = arith.constant 0 : index
    %c128 = arith.constant 128 : index
    %11 = vector.load %arg6[%c0_13, %c128] : memref<1x256xf32, #tpu.memory_space<vmem>>, vector<1x128xf32>
    %c0_14 = arith.constant 0 : index
    %c0_15 = arith.constant 0 : index
    %c0_16 = arith.constant 0 : index
    %12 = vector.load %arg7[%c0_14, %c0_15, %c0_16] : memref<2x8x128xf32, #tpu.memory_space<vmem>>, vector<2x8x128xf32>
    %13 = vector.extract_strided_slice %12 {offsets = [0, 0, 0], sizes = [1, 8, 128], strides = [1, 1, 1]} : vector<2x8x128xf32> to vector<1x8x128xf32>
    %14 = vector.shape_cast %13 : vector<1x8x128xf32> to vector<8x128xf32>
    %15 = vector.extract_strided_slice %12 {offsets = [1, 0, 0], sizes = [1, 8, 128], strides = [1, 1, 1]} : vector<2x8x128xf32> to vector<1x8x128xf32>
    %16 = vector.shape_cast %15 : vector<1x8x128xf32> to vector<8x128xf32>
    %c0_i32 = arith.constant 0 : i32
    %c7_i32 = arith.constant 7 : i32
    %17 = arith.subi %c7_i32, %c0_i32 : i32
    %18 = arith.index_cast %c0_i32 : i32 to index
    %c0_17 = arith.constant 0 : index
    %c0_18 = arith.constant 0 : index
    %19 = vector.load %arg10[%18, %c0_17, %c0_18] : memref<8x8x768xf32, #tpu.memory_space<vmem>>, vector<1x8x384xf32>
    %20 = vector.shape_cast %19 : vector<1x8x384xf32> to vector<8x384xf32>
    %21 = arith.index_cast %17 : i32 to index
    %c0_19 = arith.constant 0 : index
    %c384 = arith.constant 384 : index
    %22 = vector.load %arg10[%21, %c0_19, %c384] : memref<8x8x768xf32, #tpu.memory_space<vmem>>, vector<1x8x384xf32>
    %23 = vector.shape_cast %22 : vector<1x8x384xf32> to vector<8x384xf32>
    %24 = vector.broadcast %c0_i32 : i32 to vector<8x1xi32>
    %25 = arith.cmpi slt, %24, %9 : vector<8x1xi32>
    %26 = arith.extui %25 : vector<8x1xi1> to vector<8x1xi32>
    %27 = arith.sitofp %26 : vector<8x1xi32> to vector<8x1xf32>
    %28 = vector.broadcast %17 : i32 to vector<8x1xi32>
    %29 = arith.cmpi slt, %28, %9 : vector<8x1xi32>
    %30 = arith.extui %29 : vector<8x1xi1> to vector<8x1xi32>
    %31 = arith.sitofp %30 : vector<8x1xi32> to vector<8x1xf32>
    %32 = arith.truncf %14 : vector<8x128xf32> to vector<8x128xbf16>
    %c0_20 = arith.constant 0 : index
    %c0_21 = arith.constant 0 : index
    %33 = vector.load %arg3[%c0_20, %c0_21] : memref<128x384xbf16, #tpu.memory_space<vmem>>, vector<128x384xbf16>
    %cst_22 = arith.constant dense<0.000000e+00> : vector<8x384xf32>
    %34 = tpu.matmul %32, %33, %cst_22 {dimension_numbers = #tpu.dot_dimension_numbers<[1], [0], [0], [1], [0, 0, 1, 1], [], []>} : vector<8x128xbf16>, vector<128x384xbf16>, vector<8x384xf32> -> vector<8x384xf32>
    %35 = arith.truncf %16 : vector<8x128xf32> to vector<8x128xbf16>
    %c0_23 = arith.constant 0 : index
    %c0_24 = arith.constant 0 : index
    %36 = vector.load %arg4[%c0_23, %c0_24] : memref<128x384xbf16, #tpu.memory_space<vmem>>, vector<128x384xbf16>
    %cst_25 = arith.constant dense<0.000000e+00> : vector<8x384xf32>
    %37 = tpu.matmul %35, %36, %cst_25 {dimension_numbers = #tpu.dot_dimension_numbers<[1], [0], [0], [1], [0, 0, 1, 1], [], []>} : vector<8x128xbf16>, vector<128x384xbf16>, vector<8x384xf32> -> vector<8x384xf32>
    %38 = vector.extract_strided_slice %20 {offsets = [0, 0], sizes = [8, 128], strides = [1, 1]} : vector<8x384xf32> to vector<8x128xf32>
    %39 = vector.extract_strided_slice %34 {offsets = [0, 0], sizes = [8, 128], strides = [1, 1]} : vector<8x384xf32> to vector<8x128xf32>
    %40 = arith.addf %38, %39 : vector<8x128xf32>
    %41 = arith.negf %40 : vector<8x128xf32>
    %42 = math.exp %41 : vector<8x128xf32>
    %cst_26 = arith.constant 1.000000e+00 : f32
    %43 = vector.broadcast %cst_26 : f32 to vector<8x128xf32>
    %44 = arith.addf %43, %42 : vector<8x128xf32>
    %45 = arith.divf %43, %44 : vector<8x128xf32>
    %46 = vector.extract_strided_slice %20 {offsets = [0, 128], sizes = [8, 128], strides = [1, 1]} : vector<8x384xf32> to vector<8x128xf32>
    %47 = vector.extract_strided_slice %34 {offsets = [0, 128], sizes = [8, 128], strides = [1, 1]} : vector<8x384xf32> to vector<8x128xf32>
    %48 = arith.addf %46, %47 : vector<8x128xf32>
    %49 = arith.negf %48 : vector<8x128xf32>
    %50 = math.exp %49 : vector<8x128xf32>
    %cst_27 = arith.constant 1.000000e+00 : f32
    %51 = vector.broadcast %cst_27 : f32 to vector<8x128xf32>
    %52 = arith.addf %51, %50 : vector<8x128xf32>
    %53 = arith.divf %51, %52 : vector<8x128xf32>
    %54 = vector.extract_strided_slice %20 {offsets = [0, 256], sizes = [8, 128], strides = [1, 1]} : vector<8x384xf32> to vector<8x128xf32>
    %55 = vector.extract_strided_slice %34 {offsets = [0, 256], sizes = [8, 128], strides = [1, 1]} : vector<8x384xf32> to vector<8x128xf32>
    %56 = vector.broadcast %10 : vector<1x128xf32> to vector<8x128xf32>
    %57 = arith.addf %55, %56 : vector<8x128xf32>
    %58 = arith.mulf %45, %57 : vector<8x128xf32>
    %59 = arith.addf %54, %58 : vector<8x128xf32>
    %60 = math.tanh %59 : vector<8x128xf32>
    %cst_28 = arith.constant 1.000000e+00 : f32
    %61 = vector.broadcast %cst_28 : f32 to vector<8x128xf32>
    %62 = arith.subf %61, %53 : vector<8x128xf32>
    %63 = arith.subf %60, %14 : vector<8x128xf32>
    %64 = arith.mulf %62, %63 : vector<8x128xf32>
    %65 = arith.addf %14, %64 : vector<8x128xf32>
    %66 = vector.extract_strided_slice %23 {offsets = [0, 0], sizes = [8, 128], strides = [1, 1]} : vector<8x384xf32> to vector<8x128xf32>
    %67 = vector.extract_strided_slice %37 {offsets = [0, 0], sizes = [8, 128], strides = [1, 1]} : vector<8x384xf32> to vector<8x128xf32>
    %68 = arith.addf %66, %67 : vector<8x128xf32>
    %69 = arith.negf %68 : vector<8x128xf32>
    %70 = math.exp %69 : vector<8x128xf32>
    %cst_29 = arith.constant 1.000000e+00 : f32
    %71 = vector.broadcast %cst_29 : f32 to vector<8x128xf32>
    %72 = arith.addf %71, %70 : vector<8x128xf32>
    %73 = arith.divf %71, %72 : vector<8x128xf32>
    %74 = vector.extract_strided_slice %23 {offsets = [0, 128], sizes = [8, 128], strides = [1, 1]} : vector<8x384xf32> to vector<8x128xf32>
    %75 = vector.extract_strided_slice %37 {offsets = [0, 128], sizes = [8, 128], strides = [1, 1]} : vector<8x384xf32> to vector<8x128xf32>
    %76 = arith.addf %74, %75 : vector<8x128xf32>
    %77 = arith.negf %76 : vector<8x128xf32>
    %78 = math.exp %77 : vector<8x128xf32>
    %cst_30 = arith.constant 1.000000e+00 : f32
    %79 = vector.broadcast %cst_30 : f32 to vector<8x128xf32>
    %80 = arith.addf %79, %78 : vector<8x128xf32>
    %81 = arith.divf %79, %80 : vector<8x128xf32>
    %82 = vector.extract_strided_slice %23 {offsets = [0, 256], sizes = [8, 128], strides = [1, 1]} : vector<8x384xf32> to vector<8x128xf32>
    %83 = vector.extract_strided_slice %37 {offsets = [0, 256], sizes = [8, 128], strides = [1, 1]} : vector<8x384xf32> to vector<8x128xf32>
    %84 = vector.broadcast %11 : vector<1x128xf32> to vector<8x128xf32>
    %85 = arith.addf %83, %84 : vector<8x128xf32>
    %86 = arith.mulf %73, %85 : vector<8x128xf32>
    %87 = arith.addf %82, %86 : vector<8x128xf32>
    %88 = math.tanh %87 : vector<8x128xf32>
    %cst_31 = arith.constant 1.000000e+00 : f32
    %89 = vector.broadcast %cst_31 : f32 to vector<8x128xf32>
    %90 = arith.subf %89, %81 : vector<8x128xf32>
    %91 = arith.subf %88, %16 : vector<8x128xf32>
    %92 = arith.mulf %90, %91 : vector<8x128xf32>
    %93 = arith.addf %16, %92 : vector<8x128xf32>
    %94 = arith.subf %65, %14 : vector<8x128xf32>
    %95 = vector.broadcast %27 : vector<8x1xf32> to vector<8x128xf32>
    %96 = arith.mulf %95, %94 : vector<8x128xf32>
    %97 = arith.addf %14, %96 : vector<8x128xf32>
    %98 = arith.subf %93, %16 : vector<8x128xf32>
    %99 = vector.broadcast %31 : vector<8x1xf32> to vector<8x128xf32>
    %100 = arith.mulf %99, %98 : vector<8x128xf32>
    %101 = arith.addf %16, %100 : vector<8x128xf32>
    %102 = vector.broadcast %27 : vector<8x1xf32> to vector<8x128xf32>
    %103 = arith.mulf %102, %97 : vector<8x128xf32>
    %104 = arith.truncf %103 : vector<8x128xf32> to vector<8x128xbf16>
    %105 = arith.index_cast %c0_i32 : i32 to index
    %c0_32 = arith.constant 0 : index
    %c0_33 = arith.constant 0 : index
    %106 = vector.load %arg8[%105, %c0_32, %c0_33] : memref<8x8x256xbf16, #tpu.memory_space<vmem>>, vector<1x8x128xbf16>
    %107 = vector.shape_cast %106 : vector<1x8x128xbf16> to vector<8x128xbf16>
    %108 = vector.shape_cast %104 : vector<8x128xbf16> to vector<1x8x128xbf16>
    tpu.vector_store %arg8[%105, %c0_32, %c0_33], %108 {strides = array<i32>} : memref<8x8x256xbf16, #tpu.memory_space<vmem>>, vector<1x8x128xbf16>,
    %109 = vector.broadcast %31 : vector<8x1xf32> to vector<8x128xf32>
    %110 = arith.mulf %109, %101 : vector<8x128xf32>
    %111 = arith.truncf %110 : vector<8x128xf32> to vector<8x128xbf16>
    %112 = arith.index_cast %17 : i32 to index
    %c0_34 = arith.constant 0 : index
    %c128_35 = arith.constant 128 : index
    %113 = vector.load %arg8[%112, %c0_34, %c128_35] : memref<8x8x256xbf16, #tpu.memory_space<vmem>>, vector<1x8x128xbf16>
    %114 = vector.shape_cast %113 : vector<1x8x128xbf16> to vector<8x128xbf16>
    %115 = vector.shape_cast %111 : vector<8x128xbf16> to vector<1x8x128xbf16>
    tpu.vector_store %arg8[%112, %c0_34, %c128_35], %115 {strides = array<i32>} : memref<8x8x256xbf16, #tpu.memory_space<vmem>>, vector<1x8x128xbf16>,
    %c1_i32 = arith.constant 1 : i32
    %c7_i32_36 = arith.constant 7 : i32
    %116 = arith.subi %c7_i32_36, %c1_i32 : i32
    %117 = arith.index_cast %c1_i32 : i32 to index
    %c0_37 = arith.constant 0 : index
    %c0_38 = arith.constant 0 : index
    %118 = vector.load %arg10[%117, %c0_37, %c0_38] : memref<8x8x768xf32, #tpu.memory_space<vmem>>, vector<1x8x384xf32>
    %119 = vector.shape_cast %118 : vector<1x8x384xf32> to vector<8x384xf32>
    %120 = arith.index_cast %116 : i32 to index
    %c0_39 = arith.constant 0 : index
    %c384_40 = arith.constant 384 : index
    %121 = vector.load %arg10[%120, %c0_39, %c384_40] : memref<8x8x768xf32, #tpu.memory_space<vmem>>, vector<1x8x384xf32>
    %122 = vector.shape_cast %121 : vector<1x8x384xf32> to vector<8x384xf32>
    %123 = vector.broadcast %c1_i32 : i32 to vector<8x1xi32>
    %124 = arith.cmpi slt, %123, %9 : vector<8x1xi32>
    %125 = arith.extui %124 : vector<8x1xi1> to vector<8x1xi32>
    %126 = arith.sitofp %125 : vector<8x1xi32> to vector<8x1xf32>
    %127 = vector.broadcast %116 : i32 to vector<8x1xi32>
    %128 = arith.cmpi slt, %127, %9 : vector<8x1xi32>
    %129 = arith.extui %128 : vector<8x1xi1> to vector<8x1xi32>
    %130 = arith.sitofp %129 : vector<8x1xi32> to vector<8x1xf32>
    %131 = arith.truncf %97 : vector<8x128xf32> to vector<8x128xbf16>
    %c0_41 = arith.constant 0 : index
    %c0_42 = arith.constant 0 : index
    %132 = vector.load %arg3[%c0_41, %c0_42] : memref<128x384xbf16, #tpu.memory_space<vmem>>, vector<128x384xbf16>
    %cst_43 = arith.constant dense<0.000000e+00> : vector<8x384xf32>
    %133 = tpu.matmul %131, %132, %cst_43 {dimension_numbers = #tpu.dot_dimension_numbers<[1], [0], [0], [1], [0, 0, 1, 1], [], []>} : vector<8x128xbf16>, vector<128x384xbf16>, vector<8x384xf32> -> vector<8x384xf32>
    %134 = arith.truncf %101 : vector<8x128xf32> to vector<8x128xbf16>
    %c0_44 = arith.constant 0 : index
    %c0_45 = arith.constant 0 : index
    %135 = vector.load %arg4[%c0_44, %c0_45] : memref<128x384xbf16, #tpu.memory_space<vmem>>, vector<128x384xbf16>
    %cst_46 = arith.constant dense<0.000000e+00> : vector<8x384xf32>
    %136 = tpu.matmul %134, %135, %cst_46 {dimension_numbers = #tpu.dot_dimension_numbers<[1], [0], [0], [1], [0, 0, 1, 1], [], []>} : vector<8x128xbf16>, vector<128x384xbf16>, vector<8x384xf32> -> vector<8x384xf32>
    %137 = vector.extract_strided_slice %119 {offsets = [0, 0], sizes = [8, 128], strides = [1, 1]} : vector<8x384xf32> to vector<8x128xf32>
    %138 = vector.extract_strided_slice %133 {offsets = [0, 0], sizes = [8, 128], strides = [1, 1]} : vector<8x384xf32> to vector<8x128xf32>
    %139 = arith.addf %137, %138 : vector<8x128xf32>
    %140 = arith.negf %139 : vector<8x128xf32>
    %141 = math.exp %140 : vector<8x128xf32>
    %cst_47 = arith.constant 1.000000e+00 : f32
    %142 = vector.broadcast %cst_47 : f32 to vector<8x128xf32>
    %143 = arith.addf %142, %141 : vector<8x128xf32>
    %144 = arith.divf %142, %143 : vector<8x128xf32>
    %145 = vector.extract_strided_slice %119 {offsets = [0, 128], sizes = [8, 128], strides = [1, 1]} : vector<8x384xf32> to vector<8x128xf32>
    %146 = vector.extract_strided_slice %133 {offsets = [0, 128], sizes = [8, 128], strides = [1, 1]} : vector<8x384xf32> to vector<8x128xf32>
    %147 = arith.addf %145, %146 : vector<8x128xf32>
    %148 = arith.negf %147 : vector<8x128xf32>
    %149 = math.exp %148 : vector<8x128xf32>
    %cst_48 = arith.constant 1.000000e+00 : f32
    %150 = vector.broadcast %cst_48 : f32 to vector<8x128xf32>
    %151 = arith.addf %150, %149 : vector<8x128xf32>
    %152 = arith.divf %150, %151 : vector<8x128xf32>
    %153 = vector.extract_strided_slice %119 {offsets = [0, 256], sizes = [8, 128], strides = [1, 1]} : vector<8x384xf32> to vector<8x128xf32>
    %154 = vector.extract_strided_slice %133 {offsets = [0, 256], sizes = [8, 128], strides = [1, 1]} : vector<8x384xf32> to vector<8x128xf32>
    %155 = vector.broadcast %10 : vector<1x128xf32> to vector<8x128xf32>
    %156 = arith.addf %154, %155 : vector<8x128xf32>
    %157 = arith.mulf %144, %156 : vector<8x128xf32>
    %158 = arith.addf %153, %157 : vector<8x128xf32>
    %159 = math.tanh %158 : vector<8x128xf32>
    %cst_49 = arith.constant 1.000000e+00 : f32
    %160 = vector.broadcast %cst_49 : f32 to vector<8x128xf32>
    %161 = arith.subf %160, %152 : vector<8x128xf32>
    %162 = arith.subf %159, %97 : vector<8x128xf32>
    %163 = arith.mulf %161, %162 : vector<8x128xf32>
    %164 = arith.addf %97, %163 : vector<8x128xf32>
    %165 = vector.extract_strided_slice %122 {offsets = [0, 0], sizes = [8, 128], strides = [1, 1]} : vector<8x384xf32> to vector<8x128xf32>
    %166 = vector.extract_strided_slice %136 {offsets = [0, 0], sizes = [8, 128], strides = [1, 1]} : vector<8x384xf32> to vector<8x128xf32>
    %167 = arith.addf %165, %166 : vector<8x128xf32>
    %168 = arith.negf %167 : vector<8x128xf32>
    %169 = math.exp %168 : vector<8x128xf32>
    %cst_50 = arith.constant 1.000000e+00 : f32
    %170 = vector.broadcast %cst_50 : f32 to vector<8x128xf32>
    %171 = arith.addf %170, %169 : vector<8x128xf32>
    %172 = arith.divf %170, %171 : vector<8x128xf32>
    %173 = vector.extract_strided_slice %122 {offsets = [0, 128], sizes = [8, 128], strides = [1, 1]} : vector<8x384xf32> to vector<8x128xf32>
    %174 = vector.extract_strided_slice %136 {offsets = [0, 128], sizes = [8, 128], strides = [1, 1]} : vector<8x384xf32> to vector<8x128xf32>
    %175 = arith.addf %173, %174 : vector<8x128xf32>
    %176 = arith.negf %175 : vector<8x128xf32>
    %177 = math.exp %176 : vector<8x128xf32>
    %cst_51 = arith.constant 1.000000e+00 : f32
    %178 = vector.broadcast %cst_51 : f32 to vector<8x128xf32>
    %179 = arith.addf %178, %177 : vector<8x128xf32>
    %180 = arith.divf %178, %179 : vector<8x128xf32>
    %181 = vector.extract_strided_slice %122 {offsets = [0, 256], sizes = [8, 128], strides = [1, 1]} : vector<8x384xf32> to vector<8x128xf32>
    %182 = vector.extract_strided_slice %136 {offsets = [0, 256], sizes = [8, 128], strides = [1, 1]} : vector<8x384xf32> to vector<8x128xf32>
    %183 = vector.broadcast %11 : vector<1x128xf32> to vector<8x128xf32>
    %184 = arith.addf %182, %183 : vector<8x128xf32>
    %185 = arith.mulf %172, %184 : vector<8x128xf32>
    %186 = arith.addf %181, %185 : vector<8x128xf32>
    %187 = math.tanh %186 : vector<8x128xf32>
    %cst_52 = arith.constant 1.000000e+00 : f32
    %188 = vector.broadcast %cst_52 : f32 to vector<8x128xf32>
    %189 = arith.subf %188, %180 : vector<8x128xf32>
    %190 = arith.subf %187, %101 : vector<8x128xf32>
    %191 = arith.mulf %189, %190 : vector<8x128xf32>
    %192 = arith.addf %101, %191 : vector<8x128xf32>
    %193 = arith.subf %164, %97 : vector<8x128xf32>
    %194 = vector.broadcast %126 : vector<8x1xf32> to vector<8x128xf32>
    %195 = arith.mulf %194, %193 : vector<8x128xf32>
    %196 = arith.addf %97, %195 : vector<8x128xf32>
    %197 = arith.subf %192, %101 : vector<8x128xf32>
    %198 = vector.broadcast %130 : vector<8x1xf32> to vector<8x128xf32>
    %199 = arith.mulf %198, %197 : vector<8x128xf32>
    %200 = arith.addf %101, %199 : vector<8x128xf32>
    %201 = vector.broadcast %126 : vector<8x1xf32> to vector<8x128xf32>
    %202 = arith.mulf %201, %196 : vector<8x128xf32>
    %203 = arith.truncf %202 : vector<8x128xf32> to vector<8x128xbf16>
    %204 = arith.index_cast %c1_i32 : i32 to index
    %c0_53 = arith.constant 0 : index
    %c0_54 = arith.constant 0 : index
    %205 = vector.load %arg8[%204, %c0_53, %c0_54] : memref<8x8x256xbf16, #tpu.memory_space<vmem>>, vector<1x8x128xbf16>
    %206 = vector.shape_cast %205 : vector<1x8x128xbf16> to vector<8x128xbf16>
    %207 = vector.shape_cast %203 : vector<8x128xbf16> to vector<1x8x128xbf16>
    tpu.vector_store %arg8[%204, %c0_53, %c0_54], %207 {strides = array<i32>} : memref<8x8x256xbf16, #tpu.memory_space<vmem>>, vector<1x8x128xbf16>,
    %208 = vector.broadcast %130 : vector<8x1xf32> to vector<8x128xf32>
    %209 = arith.mulf %208, %200 : vector<8x128xf32>
    %210 = arith.truncf %209 : vector<8x128xf32> to vector<8x128xbf16>
    %211 = arith.index_cast %116 : i32 to index
    %c0_55 = arith.constant 0 : index
    %c128_56 = arith.constant 128 : index
    %212 = vector.load %arg8[%211, %c0_55, %c128_56] : memref<8x8x256xbf16, #tpu.memory_space<vmem>>, vector<1x8x128xbf16>
    %213 = vector.shape_cast %212 : vector<1x8x128xbf16> to vector<8x128xbf16>
    %214 = vector.shape_cast %210 : vector<8x128xbf16> to vector<1x8x128xbf16>
    tpu.vector_store %arg8[%211, %c0_55, %c128_56], %214 {strides = array<i32>} : memref<8x8x256xbf16, #tpu.memory_space<vmem>>, vector<1x8x128xbf16>,
    %c2_i32 = arith.constant 2 : i32
    %c7_i32_57 = arith.constant 7 : i32
    %215 = arith.subi %c7_i32_57, %c2_i32 : i32
    %216 = arith.index_cast %c2_i32 : i32 to index
    %c0_58 = arith.constant 0 : index
    %c0_59 = arith.constant 0 : index
    %217 = vector.load %arg10[%216, %c0_58, %c0_59] : memref<8x8x768xf32, #tpu.memory_space<vmem>>, vector<1x8x384xf32>
    %218 = vector.shape_cast %217 : vector<1x8x384xf32> to vector<8x384xf32>
    %219 = arith.index_cast %215 : i32 to index
    %c0_60 = arith.constant 0 : index
    %c384_61 = arith.constant 384 : index
    %220 = vector.load %arg10[%219, %c0_60, %c384_61] : memref<8x8x768xf32, #tpu.memory_space<vmem>>, vector<1x8x384xf32>
    %221 = vector.shape_cast %220 : vector<1x8x384xf32> to vector<8x384xf32>
    %222 = vector.broadcast %c2_i32 : i32 to vector<8x1xi32>
    %223 = arith.cmpi slt, %222, %9 : vector<8x1xi32>
    %224 = arith.extui %223 : vector<8x1xi1> to vector<8x1xi32>
    %225 = arith.sitofp %224 : vector<8x1xi32> to vector<8x1xf32>
    %226 = vector.broadcast %215 : i32 to vector<8x1xi32>
    %227 = arith.cmpi slt, %226, %9 : vector<8x1xi32>
    %228 = arith.extui %227 : vector<8x1xi1> to vector<8x1xi32>
    %229 = arith.sitofp %228 : vector<8x1xi32> to vector<8x1xf32>
    %230 = arith.truncf %196 : vector<8x128xf32> to vector<8x128xbf16>
    %c0_62 = arith.constant 0 : index
    %c0_63 = arith.constant 0 : index
    %231 = vector.load %arg3[%c0_62, %c0_63] : memref<128x384xbf16, #tpu.memory_space<vmem>>, vector<128x384xbf16>
    %cst_64 = arith.constant dense<0.000000e+00> : vector<8x384xf32>
    %232 = tpu.matmul %230, %231, %cst_64 {dimension_numbers = #tpu.dot_dimension_numbers<[1], [0], [0], [1], [0, 0, 1, 1], [], []>} : vector<8x128xbf16>, vector<128x384xbf16>, vector<8x384xf32> -> vector<8x384xf32>
    %233 = arith.truncf %200 : vector<8x128xf32> to vector<8x128xbf16>
    %c0_65 = arith.constant 0 : index
    %c0_66 = arith.constant 0 : index
    %234 = vector.load %arg4[%c0_65, %c0_66] : memref<128x384xbf16, #tpu.memory_space<vmem>>, vector<128x384xbf16>
    %cst_67 = arith.constant dense<0.000000e+00> : vector<8x384xf32>
    %235 = tpu.matmul %233, %234, %cst_67 {dimension_numbers = #tpu.dot_dimension_numbers<[1], [0], [0], [1], [0, 0, 1, 1], [], []>} : vector<8x128xbf16>, vector<128x384xbf16>, vector<8x384xf32> -> vector<8x384xf32>
    %236 = vector.extract_strided_slice %218 {offsets = [0, 0], sizes = [8, 128], strides = [1, 1]} : vector<8x384xf32> to vector<8x128xf32>
    %237 = vector.extract_strided_slice %232 {offsets = [0, 0], sizes = [8, 128], strides = [1, 1]} : vector<8x384xf32> to vector<8x128xf32>
    %238 = arith.addf %236, %237 : vector<8x128xf32>
    %239 = arith.negf %238 : vector<8x128xf32>
    %240 = math.exp %239 : vector<8x128xf32>
    %cst_68 = arith.constant 1.000000e+00 : f32
    %241 = vector.broadcast %cst_68 : f32 to vector<8x128xf32>
    %242 = arith.addf %241, %240 : vector<8x128xf32>
    %243 = arith.divf %241, %242 : vector<8x128xf32>
    %244 = vector.extract_strided_slice %218 {offsets = [0, 128], sizes = [8, 128], strides = [1, 1]} : vector<8x384xf32> to vector<8x128xf32>
    %245 = vector.extract_strided_slice %232 {offsets = [0, 128], sizes = [8, 128], strides = [1, 1]} : vector<8x384xf32> to vector<8x128xf32>
    %246 = arith.addf %244, %245 : vector<8x128xf32>
    %247 = arith.negf %246 : vector<8x128xf32>
    %248 = math.exp %247 : vector<8x128xf32>
    %cst_69 = arith.constant 1.000000e+00 : f32
    %249 = vector.broadcast %cst_69 : f32 to vector<8x128xf32>
    %250 = arith.addf %249, %248 : vector<8x128xf32>
    %251 = arith.divf %249, %250 : vector<8x128xf32>
    %252 = vector.extract_strided_slice %218 {offsets = [0, 256], sizes = [8, 128], strides = [1, 1]} : vector<8x384xf32> to vector<8x128xf32>
    %253 = vector.extract_strided_slice %232 {offsets = [0, 256], sizes = [8, 128], strides = [1, 1]} : vector<8x384xf32> to vector<8x128xf32>
    %254 = vector.broadcast %10 : vector<1x128xf32> to vector<8x128xf32>
    %255 = arith.addf %253, %254 : vector<8x128xf32>
    %256 = arith.mulf %243, %255 : vector<8x128xf32>
    %257 = arith.addf %252, %256 : vector<8x128xf32>
    %258 = math.tanh %257 : vector<8x128xf32>
    %cst_70 = arith.constant 1.000000e+00 : f32
    %259 = vector.broadcast %cst_70 : f32 to vector<8x128xf32>
    %260 = arith.subf %259, %251 : vector<8x128xf32>
    %261 = arith.subf %258, %196 : vector<8x128xf32>
    %262 = arith.mulf %260, %261 : vector<8x128xf32>
    %263 = arith.addf %196, %262 : vector<8x128xf32>
    %264 = vector.extract_strided_slice %221 {offsets = [0, 0], sizes = [8, 128], strides = [1, 1]} : vector<8x384xf32> to vector<8x128xf32>
    %265 = vector.extract_strided_slice %235 {offsets = [0, 0], sizes = [8, 128], strides = [1, 1]} : vector<8x384xf32> to vector<8x128xf32>
    %266 = arith.addf %264, %265 : vector<8x128xf32>
    %267 = arith.negf %266 : vector<8x128xf32>
    %268 = math.exp %267 : vector<8x128xf32>
    %cst_71 = arith.constant 1.000000e+00 : f32
    %269 = vector.broadcast %cst_71 : f32 to vector<8x128xf32>
    %270 = arith.addf %269, %268 : vector<8x128xf32>
    %271 = arith.divf %269, %270 : vector<8x128xf32>
    %272 = vector.extract_strided_slice %221 {offsets = [0, 128], sizes = [8, 128], strides = [1, 1]} : vector<8x384xf32> to vector<8x128xf32>
    %273 = vector.extract_strided_slice %235 {offsets = [0, 128], sizes = [8, 128], strides = [1, 1]} : vector<8x384xf32> to vector<8x128xf32>
    %274 = arith.addf %272, %273 : vector<8x128xf32>
    %275 = arith.negf %274 : vector<8x128xf32>
    %276 = math.exp %275 : vector<8x128xf32>
    %cst_72 = arith.constant 1.000000e+00 : f32
    %277 = vector.broadcast %cst_72 : f32 to vector<8x128xf32>
    %278 = arith.addf %277, %276 : vector<8x128xf32>
    %279 = arith.divf %277, %278 : vector<8x128xf32>
    %280 = vector.extract_strided_slice %221 {offsets = [0, 256], sizes = [8, 128], strides = [1, 1]} : vector<8x384xf32> to vector<8x128xf32>
    %281 = vector.extract_strided_slice %235 {offsets = [0, 256], sizes = [8, 128], strides = [1, 1]} : vector<8x384xf32> to vector<8x128xf32>
    %282 = vector.broadcast %11 : vector<1x128xf32> to vector<8x128xf32>
    %283 = arith.addf %281, %282 : vector<8x128xf32>
    %284 = arith.mulf %271, %283 : vector<8x128xf32>
    %285 = arith.addf %280, %284 : vector<8x128xf32>
    %286 = math.tanh %285 : vector<8x128xf32>
    %cst_73 = arith.constant 1.000000e+00 : f32
    %287 = vector.broadcast %cst_73 : f32 to vector<8x128xf32>
    %288 = arith.subf %287, %279 : vector<8x128xf32>
    %289 = arith.subf %286, %200 : vector<8x128xf32>
    %290 = arith.mulf %288, %289 : vector<8x128xf32>
    %291 = arith.addf %200, %290 : vector<8x128xf32>
    %292 = arith.subf %263, %196 : vector<8x128xf32>
    %293 = vector.broadcast %225 : vector<8x1xf32> to vector<8x128xf32>
    %294 = arith.mulf %293, %292 : vector<8x128xf32>
    %295 = arith.addf %196, %294 : vector<8x128xf32>
    %296 = arith.subf %291, %200 : vector<8x128xf32>
    %297 = vector.broadcast %229 : vector<8x1xf32> to vector<8x128xf32>
    %298 = arith.mulf %297, %296 : vector<8x128xf32>
    %299 = arith.addf %200, %298 : vector<8x128xf32>
    %300 = vector.broadcast %225 : vector<8x1xf32> to vector<8x128xf32>
    %301 = arith.mulf %300, %295 : vector<8x128xf32>
    %302 = arith.truncf %301 : vector<8x128xf32> to vector<8x128xbf16>
    %303 = arith.index_cast %c2_i32 : i32 to index
    %c0_74 = arith.constant 0 : index
    %c0_75 = arith.constant 0 : index
    %304 = vector.load %arg8[%303, %c0_74, %c0_75] : memref<8x8x256xbf16, #tpu.memory_space<vmem>>, vector<1x8x128xbf16>
    %305 = vector.shape_cast %304 : vector<1x8x128xbf16> to vector<8x128xbf16>
    %306 = vector.shape_cast %302 : vector<8x128xbf16> to vector<1x8x128xbf16>
    tpu.vector_store %arg8[%303, %c0_74, %c0_75], %306 {strides = array<i32>} : memref<8x8x256xbf16, #tpu.memory_space<vmem>>, vector<1x8x128xbf16>,
    %307 = vector.broadcast %229 : vector<8x1xf32> to vector<8x128xf32>
    %308 = arith.mulf %307, %299 : vector<8x128xf32>
    %309 = arith.truncf %308 : vector<8x128xf32> to vector<8x128xbf16>
    %310 = arith.index_cast %215 : i32 to index
    %c0_76 = arith.constant 0 : index
    %c128_77 = arith.constant 128 : index
    %311 = vector.load %arg8[%310, %c0_76, %c128_77] : memref<8x8x256xbf16, #tpu.memory_space<vmem>>, vector<1x8x128xbf16>
    %312 = vector.shape_cast %311 : vector<1x8x128xbf16> to vector<8x128xbf16>
    %313 = vector.shape_cast %309 : vector<8x128xbf16> to vector<1x8x128xbf16>
    tpu.vector_store %arg8[%310, %c0_76, %c128_77], %313 {strides = array<i32>} : memref<8x8x256xbf16, #tpu.memory_space<vmem>>, vector<1x8x128xbf16>,
    %c3_i32 = arith.constant 3 : i32
    %c7_i32_78 = arith.constant 7 : i32
    %314 = arith.subi %c7_i32_78, %c3_i32 : i32
    %315 = arith.index_cast %c3_i32 : i32 to index
    %c0_79 = arith.constant 0 : index
    %c0_80 = arith.constant 0 : index
    %316 = vector.load %arg10[%315, %c0_79, %c0_80] : memref<8x8x768xf32, #tpu.memory_space<vmem>>, vector<1x8x384xf32>
    %317 = vector.shape_cast %316 : vector<1x8x384xf32> to vector<8x384xf32>
    %318 = arith.index_cast %314 : i32 to index
    %c0_81 = arith.constant 0 : index
    %c384_82 = arith.constant 384 : index
    %319 = vector.load %arg10[%318, %c0_81, %c384_82] : memref<8x8x768xf32, #tpu.memory_space<vmem>>, vector<1x8x384xf32>
    %320 = vector.shape_cast %319 : vector<1x8x384xf32> to vector<8x384xf32>
    %321 = vector.broadcast %c3_i32 : i32 to vector<8x1xi32>
    %322 = arith.cmpi slt, %321, %9 : vector<8x1xi32>
    %323 = arith.extui %322 : vector<8x1xi1> to vector<8x1xi32>
    %324 = arith.sitofp %323 : vector<8x1xi32> to vector<8x1xf32>
    %325 = vector.broadcast %314 : i32 to vector<8x1xi32>
    %326 = arith.cmpi slt, %325, %9 : vector<8x1xi32>
    %327 = arith.extui %326 : vector<8x1xi1> to vector<8x1xi32>
    %328 = arith.sitofp %327 : vector<8x1xi32> to vector<8x1xf32>
    %329 = arith.truncf %295 : vector<8x128xf32> to vector<8x128xbf16>
    %c0_83 = arith.constant 0 : index
    %c0_84 = arith.constant 0 : index
    %330 = vector.load %arg3[%c0_83, %c0_84] : memref<128x384xbf16, #tpu.memory_space<vmem>>, vector<128x384xbf16>
    %cst_85 = arith.constant dense<0.000000e+00> : vector<8x384xf32>
    %331 = tpu.matmul %329, %330, %cst_85 {dimension_numbers = #tpu.dot_dimension_numbers<[1], [0], [0], [1], [0, 0, 1, 1], [], []>} : vector<8x128xbf16>, vector<128x384xbf16>, vector<8x384xf32> -> vector<8x384xf32>
    %332 = arith.truncf %299 : vector<8x128xf32> to vector<8x128xbf16>
    %c0_86 = arith.constant 0 : index
    %c0_87 = arith.constant 0 : index
    %333 = vector.load %arg4[%c0_86, %c0_87] : memref<128x384xbf16, #tpu.memory_space<vmem>>, vector<128x384xbf16>
    %cst_88 = arith.constant dense<0.000000e+00> : vector<8x384xf32>
    %334 = tpu.matmul %332, %333, %cst_88 {dimension_numbers = #tpu.dot_dimension_numbers<[1], [0], [0], [1], [0, 0, 1, 1], [], []>} : vector<8x128xbf16>, vector<128x384xbf16>, vector<8x384xf32> -> vector<8x384xf32>
    %335 = vector.extract_strided_slice %317 {offsets = [0, 0], sizes = [8, 128], strides = [1, 1]} : vector<8x384xf32> to vector<8x128xf32>
    %336 = vector.extract_strided_slice %331 {offsets = [0, 0], sizes = [8, 128], strides = [1, 1]} : vector<8x384xf32> to vector<8x128xf32>
    %337 = arith.addf %335, %336 : vector<8x128xf32>
    %338 = arith.negf %337 : vector<8x128xf32>
    %339 = math.exp %338 : vector<8x128xf32>
    %cst_89 = arith.constant 1.000000e+00 : f32
    %340 = vector.broadcast %cst_89 : f32 to vector<8x128xf32>
    %341 = arith.addf %340, %339 : vector<8x128xf32>
    %342 = arith.divf %340, %341 : vector<8x128xf32>
    %343 = vector.extract_strided_slice %317 {offsets = [0, 128], sizes = [8, 128], strides = [1, 1]} : vector<8x384xf32> to vector<8x128xf32>
    %344 = vector.extract_strided_slice %331 {offsets = [0, 128], sizes = [8, 128], strides = [1, 1]} : vector<8x384xf32> to vector<8x128xf32>
    %345 = arith.addf %343, %344 : vector<8x128xf32>
    %346 = arith.negf %345 : vector<8x128xf32>
    %347 = math.exp %346 : vector<8x128xf32>
    %cst_90 = arith.constant 1.000000e+00 : f32
    %348 = vector.broadcast %cst_90 : f32 to vector<8x128xf32>
    %349 = arith.addf %348, %347 : vector<8x128xf32>
    %350 = arith.divf %348, %349 : vector<8x128xf32>
    %351 = vector.extract_strided_slice %317 {offsets = [0, 256], sizes = [8, 128], strides = [1, 1]} : vector<8x384xf32> to vector<8x128xf32>
    %352 = vector.extract_strided_slice %331 {offsets = [0, 256], sizes = [8, 128], strides = [1, 1]} : vector<8x384xf32> to vector<8x128xf32>
    %353 = vector.broadcast %10 : vector<1x128xf32> to vector<8x128xf32>
    %354 = arith.addf %352, %353 : vector<8x128xf32>
    %355 = arith.mulf %342, %354 : vector<8x128xf32>
    %356 = arith.addf %351, %355 : vector<8x128xf32>
    %357 = math.tanh %356 : vector<8x128xf32>
    %cst_91 = arith.constant 1.000000e+00 : f32
    %358 = vector.broadcast %cst_91 : f32 to vector<8x128xf32>
    %359 = arith.subf %358, %350 : vector<8x128xf32>
    %360 = arith.subf %357, %295 : vector<8x128xf32>
    %361 = arith.mulf %359, %360 : vector<8x128xf32>
    %362 = arith.addf %295, %361 : vector<8x128xf32>
    %363 = vector.extract_strided_slice %320 {offsets = [0, 0], sizes = [8, 128], strides = [1, 1]} : vector<8x384xf32> to vector<8x128xf32>
    %364 = vector.extract_strided_slice %334 {offsets = [0, 0], sizes = [8, 128], strides = [1, 1]} : vector<8x384xf32> to vector<8x128xf32>
    %365 = arith.addf %363, %364 : vector<8x128xf32>
    %366 = arith.negf %365 : vector<8x128xf32>
    %367 = math.exp %366 : vector<8x128xf32>
    %cst_92 = arith.constant 1.000000e+00 : f32
    %368 = vector.broadcast %cst_92 : f32 to vector<8x128xf32>
    %369 = arith.addf %368, %367 : vector<8x128xf32>
    %370 = arith.divf %368, %369 : vector<8x128xf32>
    %371 = vector.extract_strided_slice %320 {offsets = [0, 128], sizes = [8, 128], strides = [1, 1]} : vector<8x384xf32> to vector<8x128xf32>
    %372 = vector.extract_strided_slice %334 {offsets = [0, 128], sizes = [8, 128], strides = [1, 1]} : vector<8x384xf32> to vector<8x128xf32>
    %373 = arith.addf %371, %372 : vector<8x128xf32>
    %374 = arith.negf %373 : vector<8x128xf32>
    %375 = math.exp %374 : vector<8x128xf32>
    %cst_93 = arith.constant 1.000000e+00 : f32
    %376 = vector.broadcast %cst_93 : f32 to vector<8x128xf32>
    %377 = arith.addf %376, %375 : vector<8x128xf32>
    %378 = arith.divf %376, %377 : vector<8x128xf32>
    %379 = vector.extract_strided_slice %320 {offsets = [0, 256], sizes = [8, 128], strides = [1, 1]} : vector<8x384xf32> to vector<8x128xf32>
    %380 = vector.extract_strided_slice %334 {offsets = [0, 256], sizes = [8, 128], strides = [1, 1]} : vector<8x384xf32> to vector<8x128xf32>
    %381 = vector.broadcast %11 : vector<1x128xf32> to vector<8x128xf32>
    %382 = arith.addf %380, %381 : vector<8x128xf32>
    %383 = arith.mulf %370, %382 : vector<8x128xf32>
    %384 = arith.addf %379, %383 : vector<8x128xf32>
    %385 = math.tanh %384 : vector<8x128xf32>
    %cst_94 = arith.constant 1.000000e+00 : f32
    %386 = vector.broadcast %cst_94 : f32 to vector<8x128xf32>
    %387 = arith.subf %386, %378 : vector<8x128xf32>
    %388 = arith.subf %385, %299 : vector<8x128xf32>
    %389 = arith.mulf %387, %388 : vector<8x128xf32>
    %390 = arith.addf %299, %389 : vector<8x128xf32>
    %391 = arith.subf %362, %295 : vector<8x128xf32>
    %392 = vector.broadcast %324 : vector<8x1xf32> to vector<8x128xf32>
    %393 = arith.mulf %392, %391 : vector<8x128xf32>
    %394 = arith.addf %295, %393 : vector<8x128xf32>
    %395 = arith.subf %390, %299 : vector<8x128xf32>
    %396 = vector.broadcast %328 : vector<8x1xf32> to vector<8x128xf32>
    %397 = arith.mulf %396, %395 : vector<8x128xf32>
    %398 = arith.addf %299, %397 : vector<8x128xf32>
    %399 = vector.broadcast %324 : vector<8x1xf32> to vector<8x128xf32>
    %400 = arith.mulf %399, %394 : vector<8x128xf32>
    %401 = arith.truncf %400 : vector<8x128xf32> to vector<8x128xbf16>
    %402 = arith.index_cast %c3_i32 : i32 to index
    %c0_95 = arith.constant 0 : index
    %c0_96 = arith.constant 0 : index
    %403 = vector.load %arg8[%402, %c0_95, %c0_96] : memref<8x8x256xbf16, #tpu.memory_space<vmem>>, vector<1x8x128xbf16>
    %404 = vector.shape_cast %403 : vector<1x8x128xbf16> to vector<8x128xbf16>
    %405 = vector.shape_cast %401 : vector<8x128xbf16> to vector<1x8x128xbf16>
    tpu.vector_store %arg8[%402, %c0_95, %c0_96], %405 {strides = array<i32>} : memref<8x8x256xbf16, #tpu.memory_space<vmem>>, vector<1x8x128xbf16>,
    %406 = vector.broadcast %328 : vector<8x1xf32> to vector<8x128xf32>
    %407 = arith.mulf %406, %398 : vector<8x128xf32>
    %408 = arith.truncf %407 : vector<8x128xf32> to vector<8x128xbf16>
    %409 = arith.index_cast %314 : i32 to index
    %c0_97 = arith.constant 0 : index
    %c128_98 = arith.constant 128 : index
    %410 = vector.load %arg8[%409, %c0_97, %c128_98] : memref<8x8x256xbf16, #tpu.memory_space<vmem>>, vector<1x8x128xbf16>
    %411 = vector.shape_cast %410 : vector<1x8x128xbf16> to vector<8x128xbf16>
    %412 = vector.shape_cast %408 : vector<8x128xbf16> to vector<1x8x128xbf16>
    tpu.vector_store %arg8[%409, %c0_97, %c128_98], %412 {strides = array<i32>} : memref<8x8x256xbf16, #tpu.memory_space<vmem>>, vector<1x8x128xbf16>,
    %c4_i32 = arith.constant 4 : i32
    %c7_i32_99 = arith.constant 7 : i32
    %413 = arith.subi %c7_i32_99, %c4_i32 : i32
    %414 = arith.index_cast %c4_i32 : i32 to index
    %c0_100 = arith.constant 0 : index
    %c0_101 = arith.constant 0 : index
    %415 = vector.load %arg10[%414, %c0_100, %c0_101] : memref<8x8x768xf32, #tpu.memory_space<vmem>>, vector<1x8x384xf32>
    %416 = vector.shape_cast %415 : vector<1x8x384xf32> to vector<8x384xf32>
    %417 = arith.index_cast %413 : i32 to index
    %c0_102 = arith.constant 0 : index
    %c384_103 = arith.constant 384 : index
    %418 = vector.load %arg10[%417, %c0_102, %c384_103] : memref<8x8x768xf32, #tpu.memory_space<vmem>>, vector<1x8x384xf32>
    %419 = vector.shape_cast %418 : vector<1x8x384xf32> to vector<8x384xf32>
    %420 = vector.broadcast %c4_i32 : i32 to vector<8x1xi32>
    %421 = arith.cmpi slt, %420, %9 : vector<8x1xi32>
    %422 = arith.extui %421 : vector<8x1xi1> to vector<8x1xi32>
    %423 = arith.sitofp %422 : vector<8x1xi32> to vector<8x1xf32>
    %424 = vector.broadcast %413 : i32 to vector<8x1xi32>
    %425 = arith.cmpi slt, %424, %9 : vector<8x1xi32>
    %426 = arith.extui %425 : vector<8x1xi1> to vector<8x1xi32>
    %427 = arith.sitofp %426 : vector<8x1xi32> to vector<8x1xf32>
    %428 = arith.truncf %394 : vector<8x128xf32> to vector<8x128xbf16>
    %c0_104 = arith.constant 0 : index
    %c0_105 = arith.constant 0 : index
    %429 = vector.load %arg3[%c0_104, %c0_105] : memref<128x384xbf16, #tpu.memory_space<vmem>>, vector<128x384xbf16>
    %cst_106 = arith.constant dense<0.000000e+00> : vector<8x384xf32>
    %430 = tpu.matmul %428, %429, %cst_106 {dimension_numbers = #tpu.dot_dimension_numbers<[1], [0], [0], [1], [0, 0, 1, 1], [], []>} : vector<8x128xbf16>, vector<128x384xbf16>, vector<8x384xf32> -> vector<8x384xf32>
    %431 = arith.truncf %398 : vector<8x128xf32> to vector<8x128xbf16>
    %c0_107 = arith.constant 0 : index
    %c0_108 = arith.constant 0 : index
    %432 = vector.load %arg4[%c0_107, %c0_108] : memref<128x384xbf16, #tpu.memory_space<vmem>>, vector<128x384xbf16>
    %cst_109 = arith.constant dense<0.000000e+00> : vector<8x384xf32>
    %433 = tpu.matmul %431, %432, %cst_109 {dimension_numbers = #tpu.dot_dimension_numbers<[1], [0], [0], [1], [0, 0, 1, 1], [], []>} : vector<8x128xbf16>, vector<128x384xbf16>, vector<8x384xf32> -> vector<8x384xf32>
    %434 = vector.extract_strided_slice %416 {offsets = [0, 0], sizes = [8, 128], strides = [1, 1]} : vector<8x384xf32> to vector<8x128xf32>
    %435 = vector.extract_strided_slice %430 {offsets = [0, 0], sizes = [8, 128], strides = [1, 1]} : vector<8x384xf32> to vector<8x128xf32>
    %436 = arith.addf %434, %435 : vector<8x128xf32>
    %437 = arith.negf %436 : vector<8x128xf32>
    %438 = math.exp %437 : vector<8x128xf32>
    %cst_110 = arith.constant 1.000000e+00 : f32
    %439 = vector.broadcast %cst_110 : f32 to vector<8x128xf32>
    %440 = arith.addf %439, %438 : vector<8x128xf32>
    %441 = arith.divf %439, %440 : vector<8x128xf32>
    %442 = vector.extract_strided_slice %416 {offsets = [0, 128], sizes = [8, 128], strides = [1, 1]} : vector<8x384xf32> to vector<8x128xf32>
    %443 = vector.extract_strided_slice %430 {offsets = [0, 128], sizes = [8, 128], strides = [1, 1]} : vector<8x384xf32> to vector<8x128xf32>
    %444 = arith.addf %442, %443 : vector<8x128xf32>
    %445 = arith.negf %444 : vector<8x128xf32>
    %446 = math.exp %445 : vector<8x128xf32>
    %cst_111 = arith.constant 1.000000e+00 : f32
    %447 = vector.broadcast %cst_111 : f32 to vector<8x128xf32>
    %448 = arith.addf %447, %446 : vector<8x128xf32>
    %449 = arith.divf %447, %448 : vector<8x128xf32>
    %450 = vector.extract_strided_slice %416 {offsets = [0, 256], sizes = [8, 128], strides = [1, 1]} : vector<8x384xf32> to vector<8x128xf32>
    %451 = vector.extract_strided_slice %430 {offsets = [0, 256], sizes = [8, 128], strides = [1, 1]} : vector<8x384xf32> to vector<8x128xf32>
    %452 = vector.broadcast %10 : vector<1x128xf32> to vector<8x128xf32>
    %453 = arith.addf %451, %452 : vector<8x128xf32>
    %454 = arith.mulf %441, %453 : vector<8x128xf32>
    %455 = arith.addf %450, %454 : vector<8x128xf32>
    %456 = math.tanh %455 : vector<8x128xf32>
    %cst_112 = arith.constant 1.000000e+00 : f32
    %457 = vector.broadcast %cst_112 : f32 to vector<8x128xf32>
    %458 = arith.subf %457, %449 : vector<8x128xf32>
    %459 = arith.subf %456, %394 : vector<8x128xf32>
    %460 = arith.mulf %458, %459 : vector<8x128xf32>
    %461 = arith.addf %394, %460 : vector<8x128xf32>
    %462 = vector.extract_strided_slice %419 {offsets = [0, 0], sizes = [8, 128], strides = [1, 1]} : vector<8x384xf32> to vector<8x128xf32>
    %463 = vector.extract_strided_slice %433 {offsets = [0, 0], sizes = [8, 128], strides = [1, 1]} : vector<8x384xf32> to vector<8x128xf32>
    %464 = arith.addf %462, %463 : vector<8x128xf32>
    %465 = arith.negf %464 : vector<8x128xf32>
    %466 = math.exp %465 : vector<8x128xf32>
    %cst_113 = arith.constant 1.000000e+00 : f32
    %467 = vector.broadcast %cst_113 : f32 to vector<8x128xf32>
    %468 = arith.addf %467, %466 : vector<8x128xf32>
    %469 = arith.divf %467, %468 : vector<8x128xf32>
    %470 = vector.extract_strided_slice %419 {offsets = [0, 128], sizes = [8, 128], strides = [1, 1]} : vector<8x384xf32> to vector<8x128xf32>
    %471 = vector.extract_strided_slice %433 {offsets = [0, 128], sizes = [8, 128], strides = [1, 1]} : vector<8x384xf32> to vector<8x128xf32>
    %472 = arith.addf %470, %471 : vector<8x128xf32>
    %473 = arith.negf %472 : vector<8x128xf32>
    %474 = math.exp %473 : vector<8x128xf32>
    %cst_114 = arith.constant 1.000000e+00 : f32
    %475 = vector.broadcast %cst_114 : f32 to vector<8x128xf32>
    %476 = arith.addf %475, %474 : vector<8x128xf32>
    %477 = arith.divf %475, %476 : vector<8x128xf32>
    %478 = vector.extract_strided_slice %419 {offsets = [0, 256], sizes = [8, 128], strides = [1, 1]} : vector<8x384xf32> to vector<8x128xf32>
    %479 = vector.extract_strided_slice %433 {offsets = [0, 256], sizes = [8, 128], strides = [1, 1]} : vector<8x384xf32> to vector<8x128xf32>
    %480 = vector.broadcast %11 : vector<1x128xf32> to vector<8x128xf32>
    %481 = arith.addf %479, %480 : vector<8x128xf32>
    %482 = arith.mulf %469, %481 : vector<8x128xf32>
    %483 = arith.addf %478, %482 : vector<8x128xf32>
    %484 = math.tanh %483 : vector<8x128xf32>
    %cst_115 = arith.constant 1.000000e+00 : f32
    %485 = vector.broadcast %cst_115 : f32 to vector<8x128xf32>
    %486 = arith.subf %485, %477 : vector<8x128xf32>
    %487 = arith.subf %484, %398 : vector<8x128xf32>
    %488 = arith.mulf %486, %487 : vector<8x128xf32>
    %489 = arith.addf %398, %488 : vector<8x128xf32>
    %490 = arith.subf %461, %394 : vector<8x128xf32>
    %491 = vector.broadcast %423 : vector<8x1xf32> to vector<8x128xf32>
    %492 = arith.mulf %491, %490 : vector<8x128xf32>
    %493 = arith.addf %394, %492 : vector<8x128xf32>
    %494 = arith.subf %489, %398 : vector<8x128xf32>
    %495 = vector.broadcast %427 : vector<8x1xf32> to vector<8x128xf32>
    %496 = arith.mulf %495, %494 : vector<8x128xf32>
    %497 = arith.addf %398, %496 : vector<8x128xf32>
    %498 = vector.broadcast %423 : vector<8x1xf32> to vector<8x128xf32>
    %499 = arith.mulf %498, %493 : vector<8x128xf32>
    %500 = arith.truncf %499 : vector<8x128xf32> to vector<8x128xbf16>
    %501 = arith.index_cast %c4_i32 : i32 to index
    %c0_116 = arith.constant 0 : index
    %c0_117 = arith.constant 0 : index
    %502 = vector.load %arg8[%501, %c0_116, %c0_117] : memref<8x8x256xbf16, #tpu.memory_space<vmem>>, vector<1x8x128xbf16>
    %503 = vector.shape_cast %502 : vector<1x8x128xbf16> to vector<8x128xbf16>
    %504 = vector.shape_cast %500 : vector<8x128xbf16> to vector<1x8x128xbf16>
    tpu.vector_store %arg8[%501, %c0_116, %c0_117], %504 {strides = array<i32>} : memref<8x8x256xbf16, #tpu.memory_space<vmem>>, vector<1x8x128xbf16>,
    %505 = vector.broadcast %427 : vector<8x1xf32> to vector<8x128xf32>
    %506 = arith.mulf %505, %497 : vector<8x128xf32>
    %507 = arith.truncf %506 : vector<8x128xf32> to vector<8x128xbf16>
    %508 = arith.index_cast %413 : i32 to index
    %c0_118 = arith.constant 0 : index
    %c128_119 = arith.constant 128 : index
    %509 = vector.load %arg8[%508, %c0_118, %c128_119] : memref<8x8x256xbf16, #tpu.memory_space<vmem>>, vector<1x8x128xbf16>
    %510 = vector.shape_cast %509 : vector<1x8x128xbf16> to vector<8x128xbf16>
    %511 = vector.shape_cast %507 : vector<8x128xbf16> to vector<1x8x128xbf16>
    tpu.vector_store %arg8[%508, %c0_118, %c128_119], %511 {strides = array<i32>} : memref<8x8x256xbf16, #tpu.memory_space<vmem>>, vector<1x8x128xbf16>,
    %c5_i32 = arith.constant 5 : i32
    %c7_i32_120 = arith.constant 7 : i32
    %512 = arith.subi %c7_i32_120, %c5_i32 : i32
    %513 = arith.index_cast %c5_i32 : i32 to index
    %c0_121 = arith.constant 0 : index
    %c0_122 = arith.constant 0 : index
    %514 = vector.load %arg10[%513, %c0_121, %c0_122] : memref<8x8x768xf32, #tpu.memory_space<vmem>>, vector<1x8x384xf32>
    %515 = vector.shape_cast %514 : vector<1x8x384xf32> to vector<8x384xf32>
    %516 = arith.index_cast %512 : i32 to index
    %c0_123 = arith.constant 0 : index
    %c384_124 = arith.constant 384 : index
    %517 = vector.load %arg10[%516, %c0_123, %c384_124] : memref<8x8x768xf32, #tpu.memory_space<vmem>>, vector<1x8x384xf32>
    %518 = vector.shape_cast %517 : vector<1x8x384xf32> to vector<8x384xf32>
    %519 = vector.broadcast %c5_i32 : i32 to vector<8x1xi32>
    %520 = arith.cmpi slt, %519, %9 : vector<8x1xi32>
    %521 = arith.extui %520 : vector<8x1xi1> to vector<8x1xi32>
    %522 = arith.sitofp %521 : vector<8x1xi32> to vector<8x1xf32>
    %523 = vector.broadcast %512 : i32 to vector<8x1xi32>
    %524 = arith.cmpi slt, %523, %9 : vector<8x1xi32>
    %525 = arith.extui %524 : vector<8x1xi1> to vector<8x1xi32>
    %526 = arith.sitofp %525 : vector<8x1xi32> to vector<8x1xf32>
    %527 = arith.truncf %493 : vector<8x128xf32> to vector<8x128xbf16>
    %c0_125 = arith.constant 0 : index
    %c0_126 = arith.constant 0 : index
    %528 = vector.load %arg3[%c0_125, %c0_126] : memref<128x384xbf16, #tpu.memory_space<vmem>>, vector<128x384xbf16>
    %cst_127 = arith.constant dense<0.000000e+00> : vector<8x384xf32>
    %529 = tpu.matmul %527, %528, %cst_127 {dimension_numbers = #tpu.dot_dimension_numbers<[1], [0], [0], [1], [0, 0, 1, 1], [], []>} : vector<8x128xbf16>, vector<128x384xbf16>, vector<8x384xf32> -> vector<8x384xf32>
    %530 = arith.truncf %497 : vector<8x128xf32> to vector<8x128xbf16>
    %c0_128 = arith.constant 0 : index
    %c0_129 = arith.constant 0 : index
    %531 = vector.load %arg4[%c0_128, %c0_129] : memref<128x384xbf16, #tpu.memory_space<vmem>>, vector<128x384xbf16>
    %cst_130 = arith.constant dense<0.000000e+00> : vector<8x384xf32>
    %532 = tpu.matmul %530, %531, %cst_130 {dimension_numbers = #tpu.dot_dimension_numbers<[1], [0], [0], [1], [0, 0, 1, 1], [], []>} : vector<8x128xbf16>, vector<128x384xbf16>, vector<8x384xf32> -> vector<8x384xf32>
    %533 = vector.extract_strided_slice %515 {offsets = [0, 0], sizes = [8, 128], strides = [1, 1]} : vector<8x384xf32> to vector<8x128xf32>
    %534 = vector.extract_strided_slice %529 {offsets = [0, 0], sizes = [8, 128], strides = [1, 1]} : vector<8x384xf32> to vector<8x128xf32>
    %535 = arith.addf %533, %534 : vector<8x128xf32>
    %536 = arith.negf %535 : vector<8x128xf32>
    %537 = math.exp %536 : vector<8x128xf32>
    %cst_131 = arith.constant 1.000000e+00 : f32
    %538 = vector.broadcast %cst_131 : f32 to vector<8x128xf32>
    %539 = arith.addf %538, %537 : vector<8x128xf32>
    %540 = arith.divf %538, %539 : vector<8x128xf32>
    %541 = vector.extract_strided_slice %515 {offsets = [0, 128], sizes = [8, 128], strides = [1, 1]} : vector<8x384xf32> to vector<8x128xf32>
    %542 = vector.extract_strided_slice %529 {offsets = [0, 128], sizes = [8, 128], strides = [1, 1]} : vector<8x384xf32> to vector<8x128xf32>
    %543 = arith.addf %541, %542 : vector<8x128xf32>
    %544 = arith.negf %543 : vector<8x128xf32>
    %545 = math.exp %544 : vector<8x128xf32>
    %cst_132 = arith.constant 1.000000e+00 : f32
    %546 = vector.broadcast %cst_132 : f32 to vector<8x128xf32>
    %547 = arith.addf %546, %545 : vector<8x128xf32>
    %548 = arith.divf %546, %547 : vector<8x128xf32>
    %549 = vector.extract_strided_slice %515 {offsets = [0, 256], sizes = [8, 128], strides = [1, 1]} : vector<8x384xf32> to vector<8x128xf32>
    %550 = vector.extract_strided_slice %529 {offsets = [0, 256], sizes = [8, 128], strides = [1, 1]} : vector<8x384xf32> to vector<8x128xf32>
    %551 = vector.broadcast %10 : vector<1x128xf32> to vector<8x128xf32>
    %552 = arith.addf %550, %551 : vector<8x128xf32>
    %553 = arith.mulf %540, %552 : vector<8x128xf32>
    %554 = arith.addf %549, %553 : vector<8x128xf32>
    %555 = math.tanh %554 : vector<8x128xf32>
    %cst_133 = arith.constant 1.000000e+00 : f32
    %556 = vector.broadcast %cst_133 : f32 to vector<8x128xf32>
    %557 = arith.subf %556, %548 : vector<8x128xf32>
    %558 = arith.subf %555, %493 : vector<8x128xf32>
    %559 = arith.mulf %557, %558 : vector<8x128xf32>
    %560 = arith.addf %493, %559 : vector<8x128xf32>
    %561 = vector.extract_strided_slice %518 {offsets = [0, 0], sizes = [8, 128], strides = [1, 1]} : vector<8x384xf32> to vector<8x128xf32>
    %562 = vector.extract_strided_slice %532 {offsets = [0, 0], sizes = [8, 128], strides = [1, 1]} : vector<8x384xf32> to vector<8x128xf32>
    %563 = arith.addf %561, %562 : vector<8x128xf32>
    %564 = arith.negf %563 : vector<8x128xf32>
    %565 = math.exp %564 : vector<8x128xf32>
    %cst_134 = arith.constant 1.000000e+00 : f32
    %566 = vector.broadcast %cst_134 : f32 to vector<8x128xf32>
    %567 = arith.addf %566, %565 : vector<8x128xf32>
    %568 = arith.divf %566, %567 : vector<8x128xf32>
    %569 = vector.extract_strided_slice %518 {offsets = [0, 128], sizes = [8, 128], strides = [1, 1]} : vector<8x384xf32> to vector<8x128xf32>
    %570 = vector.extract_strided_slice %532 {offsets = [0, 128], sizes = [8, 128], strides = [1, 1]} : vector<8x384xf32> to vector<8x128xf32>
    %571 = arith.addf %569, %570 : vector<8x128xf32>
    %572 = arith.negf %571 : vector<8x128xf32>
    %573 = math.exp %572 : vector<8x128xf32>
    %cst_135 = arith.constant 1.000000e+00 : f32
    %574 = vector.broadcast %cst_135 : f32 to vector<8x128xf32>
    %575 = arith.addf %574, %573 : vector<8x128xf32>
    %576 = arith.divf %574, %575 : vector<8x128xf32>
    %577 = vector.extract_strided_slice %518 {offsets = [0, 256], sizes = [8, 128], strides = [1, 1]} : vector<8x384xf32> to vector<8x128xf32>
    %578 = vector.extract_strided_slice %532 {offsets = [0, 256], sizes = [8, 128], strides = [1, 1]} : vector<8x384xf32> to vector<8x128xf32>
    %579 = vector.broadcast %11 : vector<1x128xf32> to vector<8x128xf32>
    %580 = arith.addf %578, %579 : vector<8x128xf32>
    %581 = arith.mulf %568, %580 : vector<8x128xf32>
    %582 = arith.addf %577, %581 : vector<8x128xf32>
    %583 = math.tanh %582 : vector<8x128xf32>
    %cst_136 = arith.constant 1.000000e+00 : f32
    %584 = vector.broadcast %cst_136 : f32 to vector<8x128xf32>
    %585 = arith.subf %584, %576 : vector<8x128xf32>
    %586 = arith.subf %583, %497 : vector<8x128xf32>
    %587 = arith.mulf %585, %586 : vector<8x128xf32>
    %588 = arith.addf %497, %587 : vector<8x128xf32>
    %589 = arith.subf %560, %493 : vector<8x128xf32>
    %590 = vector.broadcast %522 : vector<8x1xf32> to vector<8x128xf32>
    %591 = arith.mulf %590, %589 : vector<8x128xf32>
    %592 = arith.addf %493, %591 : vector<8x128xf32>
    %593 = arith.subf %588, %497 : vector<8x128xf32>
    %594 = vector.broadcast %526 : vector<8x1xf32> to vector<8x128xf32>
    %595 = arith.mulf %594, %593 : vector<8x128xf32>
    %596 = arith.addf %497, %595 : vector<8x128xf32>
    %597 = vector.broadcast %522 : vector<8x1xf32> to vector<8x128xf32>
    %598 = arith.mulf %597, %592 : vector<8x128xf32>
    %599 = arith.truncf %598 : vector<8x128xf32> to vector<8x128xbf16>
    %600 = arith.index_cast %c5_i32 : i32 to index
    %c0_137 = arith.constant 0 : index
    %c0_138 = arith.constant 0 : index
    %601 = vector.load %arg8[%600, %c0_137, %c0_138] : memref<8x8x256xbf16, #tpu.memory_space<vmem>>, vector<1x8x128xbf16>
    %602 = vector.shape_cast %601 : vector<1x8x128xbf16> to vector<8x128xbf16>
    %603 = vector.shape_cast %599 : vector<8x128xbf16> to vector<1x8x128xbf16>
    tpu.vector_store %arg8[%600, %c0_137, %c0_138], %603 {strides = array<i32>} : memref<8x8x256xbf16, #tpu.memory_space<vmem>>, vector<1x8x128xbf16>,
    %604 = vector.broadcast %526 : vector<8x1xf32> to vector<8x128xf32>
    %605 = arith.mulf %604, %596 : vector<8x128xf32>
    %606 = arith.truncf %605 : vector<8x128xf32> to vector<8x128xbf16>
    %607 = arith.index_cast %512 : i32 to index
    %c0_139 = arith.constant 0 : index
    %c128_140 = arith.constant 128 : index
    %608 = vector.load %arg8[%607, %c0_139, %c128_140] : memref<8x8x256xbf16, #tpu.memory_space<vmem>>, vector<1x8x128xbf16>
    %609 = vector.shape_cast %608 : vector<1x8x128xbf16> to vector<8x128xbf16>
    %610 = vector.shape_cast %606 : vector<8x128xbf16> to vector<1x8x128xbf16>
    tpu.vector_store %arg8[%607, %c0_139, %c128_140], %610 {strides = array<i32>} : memref<8x8x256xbf16, #tpu.memory_space<vmem>>, vector<1x8x128xbf16>,
    %c6_i32 = arith.constant 6 : i32
    %c7_i32_141 = arith.constant 7 : i32
    %611 = arith.subi %c7_i32_141, %c6_i32 : i32
    %612 = arith.index_cast %c6_i32 : i32 to index
    %c0_142 = arith.constant 0 : index
    %c0_143 = arith.constant 0 : index
    %613 = vector.load %arg10[%612, %c0_142, %c0_143] : memref<8x8x768xf32, #tpu.memory_space<vmem>>, vector<1x8x384xf32>
    %614 = vector.shape_cast %613 : vector<1x8x384xf32> to vector<8x384xf32>
    %615 = arith.index_cast %611 : i32 to index
    %c0_144 = arith.constant 0 : index
    %c384_145 = arith.constant 384 : index
    %616 = vector.load %arg10[%615, %c0_144, %c384_145] : memref<8x8x768xf32, #tpu.memory_space<vmem>>, vector<1x8x384xf32>
    %617 = vector.shape_cast %616 : vector<1x8x384xf32> to vector<8x384xf32>
    %618 = vector.broadcast %c6_i32 : i32 to vector<8x1xi32>
    %619 = arith.cmpi slt, %618, %9 : vector<8x1xi32>
    %620 = arith.extui %619 : vector<8x1xi1> to vector<8x1xi32>
    %621 = arith.sitofp %620 : vector<8x1xi32> to vector<8x1xf32>
    %622 = vector.broadcast %611 : i32 to vector<8x1xi32>
    %623 = arith.cmpi slt, %622, %9 : vector<8x1xi32>
    %624 = arith.extui %623 : vector<8x1xi1> to vector<8x1xi32>
    %625 = arith.sitofp %624 : vector<8x1xi32> to vector<8x1xf32>
    %626 = arith.truncf %592 : vector<8x128xf32> to vector<8x128xbf16>
    %c0_146 = arith.constant 0 : index
    %c0_147 = arith.constant 0 : index
    %627 = vector.load %arg3[%c0_146, %c0_147] : memref<128x384xbf16, #tpu.memory_space<vmem>>, vector<128x384xbf16>
    %cst_148 = arith.constant dense<0.000000e+00> : vector<8x384xf32>
    %628 = tpu.matmul %626, %627, %cst_148 {dimension_numbers = #tpu.dot_dimension_numbers<[1], [0], [0], [1], [0, 0, 1, 1], [], []>} : vector<8x128xbf16>, vector<128x384xbf16>, vector<8x384xf32> -> vector<8x384xf32>
    %629 = arith.truncf %596 : vector<8x128xf32> to vector<8x128xbf16>
    %c0_149 = arith.constant 0 : index
    %c0_150 = arith.constant 0 : index
    %630 = vector.load %arg4[%c0_149, %c0_150] : memref<128x384xbf16, #tpu.memory_space<vmem>>, vector<128x384xbf16>
    %cst_151 = arith.constant dense<0.000000e+00> : vector<8x384xf32>
    %631 = tpu.matmul %629, %630, %cst_151 {dimension_numbers = #tpu.dot_dimension_numbers<[1], [0], [0], [1], [0, 0, 1, 1], [], []>} : vector<8x128xbf16>, vector<128x384xbf16>, vector<8x384xf32> -> vector<8x384xf32>
    %632 = vector.extract_strided_slice %614 {offsets = [0, 0], sizes = [8, 128], strides = [1, 1]} : vector<8x384xf32> to vector<8x128xf32>
    %633 = vector.extract_strided_slice %628 {offsets = [0, 0], sizes = [8, 128], strides = [1, 1]} : vector<8x384xf32> to vector<8x128xf32>
    %634 = arith.addf %632, %633 : vector<8x128xf32>
    %635 = arith.negf %634 : vector<8x128xf32>
    %636 = math.exp %635 : vector<8x128xf32>
    %cst_152 = arith.constant 1.000000e+00 : f32
    %637 = vector.broadcast %cst_152 : f32 to vector<8x128xf32>
    %638 = arith.addf %637, %636 : vector<8x128xf32>
    %639 = arith.divf %637, %638 : vector<8x128xf32>
    %640 = vector.extract_strided_slice %614 {offsets = [0, 128], sizes = [8, 128], strides = [1, 1]} : vector<8x384xf32> to vector<8x128xf32>
    %641 = vector.extract_strided_slice %628 {offsets = [0, 128], sizes = [8, 128], strides = [1, 1]} : vector<8x384xf32> to vector<8x128xf32>
    %642 = arith.addf %640, %641 : vector<8x128xf32>
    %643 = arith.negf %642 : vector<8x128xf32>
    %644 = math.exp %643 : vector<8x128xf32>
    %cst_153 = arith.constant 1.000000e+00 : f32
    %645 = vector.broadcast %cst_153 : f32 to vector<8x128xf32>
    %646 = arith.addf %645, %644 : vector<8x128xf32>
    %647 = arith.divf %645, %646 : vector<8x128xf32>
    %648 = vector.extract_strided_slice %614 {offsets = [0, 256], sizes = [8, 128], strides = [1, 1]} : vector<8x384xf32> to vector<8x128xf32>
    %649 = vector.extract_strided_slice %628 {offsets = [0, 256], sizes = [8, 128], strides = [1, 1]} : vector<8x384xf32> to vector<8x128xf32>
    %650 = vector.broadcast %10 : vector<1x128xf32> to vector<8x128xf32>
    %651 = arith.addf %649, %650 : vector<8x128xf32>
    %652 = arith.mulf %639, %651 : vector<8x128xf32>
    %653 = arith.addf %648, %652 : vector<8x128xf32>
    %654 = math.tanh %653 : vector<8x128xf32>
    %cst_154 = arith.constant 1.000000e+00 : f32
    %655 = vector.broadcast %cst_154 : f32 to vector<8x128xf32>
    %656 = arith.subf %655, %647 : vector<8x128xf32>
    %657 = arith.subf %654, %592 : vector<8x128xf32>
    %658 = arith.mulf %656, %657 : vector<8x128xf32>
    %659 = arith.addf %592, %658 : vector<8x128xf32>
    %660 = vector.extract_strided_slice %617 {offsets = [0, 0], sizes = [8, 128], strides = [1, 1]} : vector<8x384xf32> to vector<8x128xf32>
    %661 = vector.extract_strided_slice %631 {offsets = [0, 0], sizes = [8, 128], strides = [1, 1]} : vector<8x384xf32> to vector<8x128xf32>
    %662 = arith.addf %660, %661 : vector<8x128xf32>
    %663 = arith.negf %662 : vector<8x128xf32>
    %664 = math.exp %663 : vector<8x128xf32>
    %cst_155 = arith.constant 1.000000e+00 : f32
    %665 = vector.broadcast %cst_155 : f32 to vector<8x128xf32>
    %666 = arith.addf %665, %664 : vector<8x128xf32>
    %667 = arith.divf %665, %666 : vector<8x128xf32>
    %668 = vector.extract_strided_slice %617 {offsets = [0, 128], sizes = [8, 128], strides = [1, 1]} : vector<8x384xf32> to vector<8x128xf32>
    %669 = vector.extract_strided_slice %631 {offsets = [0, 128], sizes = [8, 128], strides = [1, 1]} : vector<8x384xf32> to vector<8x128xf32>
    %670 = arith.addf %668, %669 : vector<8x128xf32>
    %671 = arith.negf %670 : vector<8x128xf32>
    %672 = math.exp %671 : vector<8x128xf32>
    %cst_156 = arith.constant 1.000000e+00 : f32
    %673 = vector.broadcast %cst_156 : f32 to vector<8x128xf32>
    %674 = arith.addf %673, %672 : vector<8x128xf32>
    %675 = arith.divf %673, %674 : vector<8x128xf32>
    %676 = vector.extract_strided_slice %617 {offsets = [0, 256], sizes = [8, 128], strides = [1, 1]} : vector<8x384xf32> to vector<8x128xf32>
    %677 = vector.extract_strided_slice %631 {offsets = [0, 256], sizes = [8, 128], strides = [1, 1]} : vector<8x384xf32> to vector<8x128xf32>
    %678 = vector.broadcast %11 : vector<1x128xf32> to vector<8x128xf32>
    %679 = arith.addf %677, %678 : vector<8x128xf32>
    %680 = arith.mulf %667, %679 : vector<8x128xf32>
    %681 = arith.addf %676, %680 : vector<8x128xf32>
    %682 = math.tanh %681 : vector<8x128xf32>
    %cst_157 = arith.constant 1.000000e+00 : f32
    %683 = vector.broadcast %cst_157 : f32 to vector<8x128xf32>
    %684 = arith.subf %683, %675 : vector<8x128xf32>
    %685 = arith.subf %682, %596 : vector<8x128xf32>
    %686 = arith.mulf %684, %685 : vector<8x128xf32>
    %687 = arith.addf %596, %686 : vector<8x128xf32>
    %688 = arith.subf %659, %592 : vector<8x128xf32>
    %689 = vector.broadcast %621 : vector<8x1xf32> to vector<8x128xf32>
    %690 = arith.mulf %689, %688 : vector<8x128xf32>
    %691 = arith.addf %592, %690 : vector<8x128xf32>
    %692 = arith.subf %687, %596 : vector<8x128xf32>
    %693 = vector.broadcast %625 : vector<8x1xf32> to vector<8x128xf32>
    %694 = arith.mulf %693, %692 : vector<8x128xf32>
    %695 = arith.addf %596, %694 : vector<8x128xf32>
    %696 = vector.broadcast %621 : vector<8x1xf32> to vector<8x128xf32>
    %697 = arith.mulf %696, %691 : vector<8x128xf32>
    %698 = arith.truncf %697 : vector<8x128xf32> to vector<8x128xbf16>
    %699 = arith.index_cast %c6_i32 : i32 to index
    %c0_158 = arith.constant 0 : index
    %c0_159 = arith.constant 0 : index
    %700 = vector.load %arg8[%699, %c0_158, %c0_159] : memref<8x8x256xbf16, #tpu.memory_space<vmem>>, vector<1x8x128xbf16>
    %701 = vector.shape_cast %700 : vector<1x8x128xbf16> to vector<8x128xbf16>
    %702 = vector.shape_cast %698 : vector<8x128xbf16> to vector<1x8x128xbf16>
    tpu.vector_store %arg8[%699, %c0_158, %c0_159], %702 {strides = array<i32>} : memref<8x8x256xbf16, #tpu.memory_space<vmem>>, vector<1x8x128xbf16>,
    %703 = vector.broadcast %625 : vector<8x1xf32> to vector<8x128xf32>
    %704 = arith.mulf %703, %695 : vector<8x128xf32>
    %705 = arith.truncf %704 : vector<8x128xf32> to vector<8x128xbf16>
    %706 = arith.index_cast %611 : i32 to index
    %c0_160 = arith.constant 0 : index
    %c128_161 = arith.constant 128 : index
    %707 = vector.load %arg8[%706, %c0_160, %c128_161] : memref<8x8x256xbf16, #tpu.memory_space<vmem>>, vector<1x8x128xbf16>
    %708 = vector.shape_cast %707 : vector<1x8x128xbf16> to vector<8x128xbf16>
    %709 = vector.shape_cast %705 : vector<8x128xbf16> to vector<1x8x128xbf16>
    tpu.vector_store %arg8[%706, %c0_160, %c128_161], %709 {strides = array<i32>} : memref<8x8x256xbf16, #tpu.memory_space<vmem>>, vector<1x8x128xbf16>,
    %c7_i32_162 = arith.constant 7 : i32
    %c7_i32_163 = arith.constant 7 : i32
    %710 = arith.subi %c7_i32_163, %c7_i32_162 : i32
    %711 = arith.index_cast %c7_i32_162 : i32 to index
    %c0_164 = arith.constant 0 : index
    %c0_165 = arith.constant 0 : index
    %712 = vector.load %arg10[%711, %c0_164, %c0_165] : memref<8x8x768xf32, #tpu.memory_space<vmem>>, vector<1x8x384xf32>
    %713 = vector.shape_cast %712 : vector<1x8x384xf32> to vector<8x384xf32>
    %714 = arith.index_cast %710 : i32 to index
    %c0_166 = arith.constant 0 : index
    %c384_167 = arith.constant 384 : index
    %715 = vector.load %arg10[%714, %c0_166, %c384_167] : memref<8x8x768xf32, #tpu.memory_space<vmem>>, vector<1x8x384xf32>
    %716 = vector.shape_cast %715 : vector<1x8x384xf32> to vector<8x384xf32>
    %717 = vector.broadcast %c7_i32_162 : i32 to vector<8x1xi32>
    %718 = arith.cmpi slt, %717, %9 : vector<8x1xi32>
    %719 = arith.extui %718 : vector<8x1xi1> to vector<8x1xi32>
    %720 = arith.sitofp %719 : vector<8x1xi32> to vector<8x1xf32>
    %721 = vector.broadcast %710 : i32 to vector<8x1xi32>
    %722 = arith.cmpi slt, %721, %9 : vector<8x1xi32>
    %723 = arith.extui %722 : vector<8x1xi1> to vector<8x1xi32>
    %724 = arith.sitofp %723 : vector<8x1xi32> to vector<8x1xf32>
    %725 = arith.truncf %691 : vector<8x128xf32> to vector<8x128xbf16>
    %c0_168 = arith.constant 0 : index
    %c0_169 = arith.constant 0 : index
    %726 = vector.load %arg3[%c0_168, %c0_169] : memref<128x384xbf16, #tpu.memory_space<vmem>>, vector<128x384xbf16>
    %cst_170 = arith.constant dense<0.000000e+00> : vector<8x384xf32>
    %727 = tpu.matmul %725, %726, %cst_170 {dimension_numbers = #tpu.dot_dimension_numbers<[1], [0], [0], [1], [0, 0, 1, 1], [], []>} : vector<8x128xbf16>, vector<128x384xbf16>, vector<8x384xf32> -> vector<8x384xf32>
    %728 = arith.truncf %695 : vector<8x128xf32> to vector<8x128xbf16>
    %c0_171 = arith.constant 0 : index
    %c0_172 = arith.constant 0 : index
    %729 = vector.load %arg4[%c0_171, %c0_172] : memref<128x384xbf16, #tpu.memory_space<vmem>>, vector<128x384xbf16>
    %cst_173 = arith.constant dense<0.000000e+00> : vector<8x384xf32>
    %730 = tpu.matmul %728, %729, %cst_173 {dimension_numbers = #tpu.dot_dimension_numbers<[1], [0], [0], [1], [0, 0, 1, 1], [], []>} : vector<8x128xbf16>, vector<128x384xbf16>, vector<8x384xf32> -> vector<8x384xf32>
    %731 = vector.extract_strided_slice %713 {offsets = [0, 0], sizes = [8, 128], strides = [1, 1]} : vector<8x384xf32> to vector<8x128xf32>
    %732 = vector.extract_strided_slice %727 {offsets = [0, 0], sizes = [8, 128], strides = [1, 1]} : vector<8x384xf32> to vector<8x128xf32>
    %733 = arith.addf %731, %732 : vector<8x128xf32>
    %734 = arith.negf %733 : vector<8x128xf32>
    %735 = math.exp %734 : vector<8x128xf32>
    %cst_174 = arith.constant 1.000000e+00 : f32
    %736 = vector.broadcast %cst_174 : f32 to vector<8x128xf32>
    %737 = arith.addf %736, %735 : vector<8x128xf32>
    %738 = arith.divf %736, %737 : vector<8x128xf32>
    %739 = vector.extract_strided_slice %713 {offsets = [0, 128], sizes = [8, 128], strides = [1, 1]} : vector<8x384xf32> to vector<8x128xf32>
    %740 = vector.extract_strided_slice %727 {offsets = [0, 128], sizes = [8, 128], strides = [1, 1]} : vector<8x384xf32> to vector<8x128xf32>
    %741 = arith.addf %739, %740 : vector<8x128xf32>
    %742 = arith.negf %741 : vector<8x128xf32>
    %743 = math.exp %742 : vector<8x128xf32>
    %cst_175 = arith.constant 1.000000e+00 : f32
    %744 = vector.broadcast %cst_175 : f32 to vector<8x128xf32>
    %745 = arith.addf %744, %743 : vector<8x128xf32>
    %746 = arith.divf %744, %745 : vector<8x128xf32>
    %747 = vector.extract_strided_slice %713 {offsets = [0, 256], sizes = [8, 128], strides = [1, 1]} : vector<8x384xf32> to vector<8x128xf32>
    %748 = vector.extract_strided_slice %727 {offsets = [0, 256], sizes = [8, 128], strides = [1, 1]} : vector<8x384xf32> to vector<8x128xf32>
    %749 = vector.broadcast %10 : vector<1x128xf32> to vector<8x128xf32>
    %750 = arith.addf %748, %749 : vector<8x128xf32>
    %751 = arith.mulf %738, %750 : vector<8x128xf32>
    %752 = arith.addf %747, %751 : vector<8x128xf32>
    %753 = math.tanh %752 : vector<8x128xf32>
    %cst_176 = arith.constant 1.000000e+00 : f32
    %754 = vector.broadcast %cst_176 : f32 to vector<8x128xf32>
    %755 = arith.subf %754, %746 : vector<8x128xf32>
    %756 = arith.subf %753, %691 : vector<8x128xf32>
    %757 = arith.mulf %755, %756 : vector<8x128xf32>
    %758 = arith.addf %691, %757 : vector<8x128xf32>
    %759 = vector.extract_strided_slice %716 {offsets = [0, 0], sizes = [8, 128], strides = [1, 1]} : vector<8x384xf32> to vector<8x128xf32>
    %760 = vector.extract_strided_slice %730 {offsets = [0, 0], sizes = [8, 128], strides = [1, 1]} : vector<8x384xf32> to vector<8x128xf32>
    %761 = arith.addf %759, %760 : vector<8x128xf32>
    %762 = arith.negf %761 : vector<8x128xf32>
    %763 = math.exp %762 : vector<8x128xf32>
    %cst_177 = arith.constant 1.000000e+00 : f32
    %764 = vector.broadcast %cst_177 : f32 to vector<8x128xf32>
    %765 = arith.addf %764, %763 : vector<8x128xf32>
    %766 = arith.divf %764, %765 : vector<8x128xf32>
    %767 = vector.extract_strided_slice %716 {offsets = [0, 128], sizes = [8, 128], strides = [1, 1]} : vector<8x384xf32> to vector<8x128xf32>
    %768 = vector.extract_strided_slice %730 {offsets = [0, 128], sizes = [8, 128], strides = [1, 1]} : vector<8x384xf32> to vector<8x128xf32>
    %769 = arith.addf %767, %768 : vector<8x128xf32>
    %770 = arith.negf %769 : vector<8x128xf32>
    %771 = math.exp %770 : vector<8x128xf32>
    %cst_178 = arith.constant 1.000000e+00 : f32
    %772 = vector.broadcast %cst_178 : f32 to vector<8x128xf32>
    %773 = arith.addf %772, %771 : vector<8x128xf32>
    %774 = arith.divf %772, %773 : vector<8x128xf32>
    %775 = vector.extract_strided_slice %716 {offsets = [0, 256], sizes = [8, 128], strides = [1, 1]} : vector<8x384xf32> to vector<8x128xf32>
    %776 = vector.extract_strided_slice %730 {offsets = [0, 256], sizes = [8, 128], strides = [1, 1]} : vector<8x384xf32> to vector<8x128xf32>
    %777 = vector.broadcast %11 : vector<1x128xf32> to vector<8x128xf32>
    %778 = arith.addf %776, %777 : vector<8x128xf32>
    %779 = arith.mulf %766, %778 : vector<8x128xf32>
    %780 = arith.addf %775, %779 : vector<8x128xf32>
    %781 = math.tanh %780 : vector<8x128xf32>
    %cst_179 = arith.constant 1.000000e+00 : f32
    %782 = vector.broadcast %cst_179 : f32 to vector<8x128xf32>
    %783 = arith.subf %782, %774 : vector<8x128xf32>
    %784 = arith.subf %781, %695 : vector<8x128xf32>
    %785 = arith.mulf %783, %784 : vector<8x128xf32>
    %786 = arith.addf %695, %785 : vector<8x128xf32>
    %787 = arith.subf %758, %691 : vector<8x128xf32>
    %788 = vector.broadcast %720 : vector<8x1xf32> to vector<8x128xf32>
    %789 = arith.mulf %788, %787 : vector<8x128xf32>
    %790 = arith.addf %691, %789 : vector<8x128xf32>
    %791 = arith.subf %786, %695 : vector<8x128xf32>
    %792 = vector.broadcast %724 : vector<8x1xf32> to vector<8x128xf32>
    %793 = arith.mulf %792, %791 : vector<8x128xf32>
    %794 = arith.addf %695, %793 : vector<8x128xf32>
    %795 = vector.broadcast %720 : vector<8x1xf32> to vector<8x128xf32>
    %796 = arith.mulf %795, %790 : vector<8x128xf32>
    %797 = arith.truncf %796 : vector<8x128xf32> to vector<8x128xbf16>
    %798 = arith.index_cast %c7_i32_162 : i32 to index
    %c0_180 = arith.constant 0 : index
    %c0_181 = arith.constant 0 : index
    %799 = vector.load %arg8[%798, %c0_180, %c0_181] : memref<8x8x256xbf16, #tpu.memory_space<vmem>>, vector<1x8x128xbf16>
    %800 = vector.shape_cast %799 : vector<1x8x128xbf16> to vector<8x128xbf16>
    %801 = vector.shape_cast %797 : vector<8x128xbf16> to vector<1x8x128xbf16>
    tpu.vector_store %arg8[%798, %c0_180, %c0_181], %801 {strides = array<i32>} : memref<8x8x256xbf16, #tpu.memory_space<vmem>>, vector<1x8x128xbf16>,
    %802 = vector.broadcast %724 : vector<8x1xf32> to vector<8x128xf32>
    %803 = arith.mulf %802, %794 : vector<8x128xf32>
    %804 = arith.truncf %803 : vector<8x128xf32> to vector<8x128xbf16>
    %805 = arith.index_cast %710 : i32 to index
    %c0_182 = arith.constant 0 : index
    %c128_183 = arith.constant 128 : index
    %806 = vector.load %arg8[%805, %c0_182, %c128_183] : memref<8x8x256xbf16, #tpu.memory_space<vmem>>, vector<1x8x128xbf16>
    %807 = vector.shape_cast %806 : vector<1x8x128xbf16> to vector<8x128xbf16>
    %808 = vector.shape_cast %804 : vector<8x128xbf16> to vector<1x8x128xbf16>
    tpu.vector_store %arg8[%805, %c0_182, %c128_183], %808 {strides = array<i32>} : memref<8x8x256xbf16, #tpu.memory_space<vmem>>, vector<1x8x128xbf16>,
    %c8_i32 = arith.constant 8 : i32
    %c0_184 = arith.constant 0 : index
    %c0_185 = arith.constant 0 : index
    %c0_186 = arith.constant 0 : index
    %809 = vector.load %arg9[%c0_184, %c0_185, %c0_186] : memref<2x8x128xf32, #tpu.memory_space<vmem>>, vector<1x8x128xf32>
    %810 = vector.shape_cast %809 : vector<1x8x128xf32> to vector<8x128xf32>
    %811 = vector.shape_cast %790 : vector<8x128xf32> to vector<1x8x128xf32>
    tpu.vector_store %arg9[%c0_184, %c0_185, %c0_186], %811 {strides = array<i32>} : memref<2x8x128xf32, #tpu.memory_space<vmem>>, vector<1x8x128xf32>,
    %c1 = arith.constant 1 : index
    %c0_187 = arith.constant 0 : index
    %c0_188 = arith.constant 0 : index
    %812 = vector.load %arg9[%c1, %c0_187, %c0_188] : memref<2x8x128xf32, #tpu.memory_space<vmem>>, vector<1x8x128xf32>
    %813 = vector.shape_cast %812 : vector<1x8x128xf32> to vector<8x128xf32>
    %814 = vector.shape_cast %794 : vector<8x128xf32> to vector<1x8x128xf32>
    tpu.vector_store %arg9[%c1, %c0_187, %c0_188], %814 {strides = array<i32>} : memref<2x8x128xf32, #tpu.memory_space<vmem>>, vector<1x8x128xf32>,
    return
  }
}

</mosaic_0001>

<llo_original>
// kernel: tpu_custom_call.1
$region0: #{tpu_custom_call.1}
  #allocation0 [shape = 'u32[]', space=smem, size = 0x4, offset = 0x4, fixed_abs, tag = 'smem constant byte address 0x4 - core index']
  #allocation1 [shape = 'u32[144,128]{1,0:T(1,128)}', space=vmem, size = 0x12000, scoped, tag = 'internal scratch']
  #allocation2 [shape = 'f32[8,8,768]{2,1,0:T(8,128)}', space=vmem, size = 0x30000, scoped, tag = 'scratch operand']
  %s0 = inlined_call_operand.hbm [shape: bf16[8,8,128], index: 0, kind: input, shape index: {}]
  %s1 = inlined_call_operand.vmem [shape: s32[8,1], index: 1, kind: input, shape index: {}]
  %s2 = inlined_call_operand.hbm [shape: bf16[128,768], index: 2, kind: input, shape index: {}]
  %s3 = inlined_call_operand.hbm [shape: bf16[128,384], index: 3, kind: input, shape index: {}]
  %s4 = inlined_call_operand.hbm [shape: bf16[128,384], index: 4, kind: input, shape index: {}]
  %s5 = inlined_call_operand.vmem [shape: f32[1,768], index: 5, kind: input, shape index: {}]
  %s6 = inlined_call_operand.vmem [shape: f32[1,256], index: 6, kind: input, shape index: {}]
  %s7 = inlined_call_operand.vmem [shape: f32[2,8,128], index: 7, kind: input, shape index: {}]
  %s8 = inlined_call_operand.hbm [shape: bf16[8,8,256], index: 8, kind: output, shape index: {0}]
  %s9 = inlined_call_operand.hbm [shape: f32[2,8,128], index: 9, kind: output, shape index: {1}]
  %10 = xla_tuple %s8, %s9
  %s11 = sld [smem:[#allocation0]]
  $region66: #{tpu_custom_call.1} parent=0
    _
  %s13 = ssub.s32 1, %s11
  %s14 = scalar_select 0, %s13, %s11
  $region1: #{tpu_custom_call.1} parent=0
    #allocation3 [shape = 'u8[16384]{0}', space=vmem, size = 0x4000, scoped, tag = 'input window, operand 0, single buffered']
    #allocation4 [shape = 's32[1]{0}', space=sflag, size = 0x4, scoped, tag = 'scoped memory for tpu_custom_call.1']
    #allocation5 [shape = 's32[1]{0}', space=sflag, size = 0x4, scoped, tag = 'scoped memory for tpu_custom_call.1']
    #allocation6 [shape = 'u8[196608]{0}', space=vmem, size = 0x30000, scoped, tag = 'input window, operand 2, single buffered']
    #allocation7 [shape = 's32[1]{0}', space=sflag, size = 0x4, scoped, tag = 'scoped memory for tpu_custom_call.1']
    #allocation8 [shape = 'u8[98304]{0}', space=vmem, size = 0x18000, scoped, tag = 'input window, operand 3, single buffered']
    #allocation9 [shape = 'u8[98304]{0}', space=vmem, size = 0x18000, scoped, tag = 'input window, operand 4, single buffered']
    #allocation10 [shape = 's32[1]{0}', space=sflag, size = 0x4, scoped, tag = 'scoped memory for tpu_custom_call.1']
    #allocation11 [shape = 'u8[32768]{0}', space=vmem, size = 0x8000, scoped, tag = 'output window, operand 0, single buffered']
    #allocation12 [shape = 'u8[8192]{0}', space=vmem, size = 0x2000, scoped, tag = 'output window, operand 1, single buffered']
    #allocation13 [shape = 's32[1]{0}', space=sflag, size = 0x4, scoped, tag = 'scoped memory for tpu_custom_call.1']
    %15 = vsyncpa [#allocation4], 0
    %16 = vsyncpa [#allocation7], 0
    %17 = vsyncpa [#allocation10], 0
    %18 = vsyncpa [#allocation5], 0
    %19 = vsyncpa [#allocation13], 0
    // Predicated region
    $region2: #{tpu_custom_call.1} parent=1 // pred_check
      _
    $region3: #{tpu_custom_call.1} parent=1 // pred_check_branch
      %21 = sbr.rel (0) target = $region5
    $region4: #{tpu_custom_call.1} parent=1 // pred_region
      %s23 = ssub.s32 512, 512
      %24 = vsyncadd [#allocation4], %s23
      %s25 = sshll.u32 [#allocation3], 4
      %s26 = int_to_ptr.vmem [resolvable:$true] %s25
      %31 = dma.hbm_to_vmem [thread:$0]  %s0, 512, %s26, [#allocation4], 64, 64, 4
    $region5: #{tpu_custom_call.1} parent=1 // pred_fallthru
      _
    // Predicated region
    $region6: #{tpu_custom_call.1} parent=1 // pred_check
      _
    $region7: #{tpu_custom_call.1} parent=1 // pred_check_branch
      %33 = sbr.rel (0) target = $region9
    $region8: #{tpu_custom_call.1} parent=1 // pred_region
      _
    $region9: #{tpu_custom_call.1} parent=1 // pred_fallthru
      _
    // Predicated region
    $region10: #{tpu_custom_call.1} parent=1 // pred_check
      _
    $region11: #{tpu_custom_call.1} parent=1 // pred_check_branch
      %35 = sbr.rel (0) target = $region13
    $region12: #{tpu_custom_call.1} parent=1 // pred_region
      %s37 = ssub.s32 6144, 6144
      %38 = vsyncadd [#allocation7], %s37
      %s39 = sshll.u32 [#allocation6], 4
      %s40 = int_to_ptr.vmem [resolvable:$true] %s39
      %45 = dma.hbm_to_vmem [thread:$0]  %s2, 6144, %s40, [#allocation7], 384, 384, 24
    $region13: #{tpu_custom_call.1} parent=1 // pred_fallthru
      _
    // Predicated region
    $region14: #{tpu_custom_call.1} parent=1 // pred_check
      _
    $region15: #{tpu_custom_call.1} parent=1 // pred_check_branch
      %47 = sbr.rel (0) target = $region17
    $region16: #{tpu_custom_call.1} parent=1 // pred_region
      %s49 = ssub.s32 3072, 3072
      %50 = vsyncadd [#allocation7], %s49
      %s51 = sshll.u32 [#allocation8], 4
      %s52 = int_to_ptr.vmem [resolvable:$true] %s51
      %57 = dma.hbm_to_vmem [thread:$0]  %s3, 3072, %s52, [#allocation7], 192, 192, 12
    $region17: #{tpu_custom_call.1} parent=1 // pred_fallthru
      _
    // Predicated region
    $region18: #{tpu_custom_call.1} parent=1 // pred_check
      _
    $region19: #{tpu_custom_call.1} parent=1 // pred_check_branch
      %59 = sbr.rel (0) target = $region21
    $region20: #{tpu_custom_call.1} parent=1 // pred_region
      %s61 = ssub.s32 3072, 3072
      %62 = vsyncadd [#allocation10], %s61
      %s63 = sshll.u32 [#allocation9], 4
      %s64 = int_to_ptr.vmem [resolvable:$true] %s63
      %69 = dma.hbm_to_vmem [thread:$0]  %s4, 3072, %s64, [#allocation10], 192, 192, 12
    $region21: #{tpu_custom_call.1} parent=1 // pred_fallthru
      _
    // Predicated region
    $region22: #{tpu_custom_call.1} parent=1 // pred_check
      _
    $region23: #{tpu_custom_call.1} parent=1 // pred_check_branch
      %71 = sbr.rel (0) target = $region25
    $region24: #{tpu_custom_call.1} parent=1 // pred_region
      _
    $region25: #{tpu_custom_call.1} parent=1 // pred_fallthru
      _
    // Predicated region
    $region26: #{tpu_custom_call.1} parent=1 // pred_check
      _
    $region27: #{tpu_custom_call.1} parent=1 // pred_check_branch
      %73 = sbr.rel (0) target = $region29
    $region28: #{tpu_custom_call.1} parent=1 // pred_region
      _
    $region29: #{tpu_custom_call.1} parent=1 // pred_fallthru
      _
    // Predicated region
    $region30: #{tpu_custom_call.1} parent=1 // pred_check
      _
    $region31: #{tpu_custom_call.1} parent=1 // pred_check_branch
      %75 = sbr.rel (0) target = $region33
    $region32: #{tpu_custom_call.1} parent=1 // pred_region
      _
    $region33: #{tpu_custom_call.1} parent=1 // pred_fallthru
      _
    // Predicated region
    $region34: #{tpu_custom_call.1} parent=1 // pred_check
      _
    $region35: #{tpu_custom_call.1} parent=1 // pred_check_branch
      %77 = sbr.rel (0) target = $region37
    $region36: #{tpu_custom_call.1} parent=1 // pred_region
      %78 = dma.done [#allocation4], 512
    $region37: #{tpu_custom_call.1} parent=1 // pred_fallthru
      _
    // Predicated region
    $region38: #{tpu_custom_call.1} parent=1 // pred_check
      _
    $region39: #{tpu_custom_call.1} parent=1 // pred_check_branch
      %80 = sbr.rel (0) target = $region41
    $region40: #{tpu_custom_call.1} parent=1 // pred_region
      %81 = dma.done [#allocation7], 6144
    $region41: #{tpu_custom_call.1} parent=1 // pred_fallthru
      _
    // Predicated region
    $region42: #{tpu_custom_call.1} parent=1 // pred_check
      _
    $region43: #{tpu_custom_call.1} parent=1 // pred_check_branch
      %83 = sbr.rel (0) target = $region45
    $region44: #{tpu_custom_call.1} parent=1 // pred_region
      %84 = dma.done [#allocation7], 3072
    $region45: #{tpu_custom_call.1} parent=1 // pred_fallthru
      _
    // Predicated region
    $region46: #{tpu_custom_call.1} parent=1 // pred_check
      _
    $region47: #{tpu_custom_call.1} parent=1 // pred_check_branch
      %86 = sbr.rel (0) target = $region49
    $region48: #{tpu_custom_call.1} parent=1 // pred_region
      %87 = dma.done [#allocation10], 3072
    $region49: #{tpu_custom_call.1} parent=1 // pred_fallthru
      _
    %v89 = vld [vmem:[#allocation3] sm:$0xf]
    %v90 = vld [vmem:[#allocation3 + $0x4] sm:$0xf]
    %v91 = vld [vmem:[#allocation3 + $0x8] sm:$0xf]
    %v92 = vld [vmem:[#allocation3 + $0xc] sm:$0xf]
    %v93 = vld [vmem:[#allocation3 + $0x10] sm:$0xf]
    %v94 = vld [vmem:[#allocation3 + $0x14] sm:$0xf]
    %v95 = vld [vmem:[#allocation3 + $0x18] sm:$0xf]
    %v96 = vld [vmem:[#allocation3 + $0x1c] sm:$0xf]
    %v97 = vld [vmem:[#allocation6] sm:$0xff]
    %v98 = vld [vmem:[#allocation6 + $0x8] sm:$0xff]
    %v99 = vld [vmem:[#allocation6 + $0x10] sm:$0xff]
    %v100 = vld [vmem:[#allocation6 + $0x18] sm:$0xff]
    %v101 = vld [vmem:[#allocation6 + $0x20] sm:$0xff]
    %v102 = vld [vmem:[#allocation6 + $0x28] sm:$0xff]
    %v103 = vld [vmem:[#allocation6 + $0x30] sm:$0xff]
    %v104 = vld [vmem:[#allocation6 + $0x38] sm:$0xff]
    %v105 = vld [vmem:[#allocation6 + $0x40] sm:$0xff]
    %v106 = vld [vmem:[#allocation6 + $0x48] sm:$0xff]
    %v107 = vld [vmem:[#allocation6 + $0x50] sm:$0xff]
    %v108 = vld [vmem:[#allocation6 + $0x58] sm:$0xff]
    %v109 = vld [vmem:[#allocation6 + $0x60] sm:$0xff]
    %v110 = vld [vmem:[#allocation6 + $0x68] sm:$0xff]
    %v111 = vld [vmem:[#allocation6 + $0x70] sm:$0xff]
    %v112 = vld [vmem:[#allocation6 + $0x78] sm:$0xff]
    %v113 = vld [vmem:[#allocation6 + $0x80] sm:$0xff]
    %v114 = vld [vmem:[#allocation6 + $0x88] sm:$0xff]
    %v115 = vld [vmem:[#allocation6 + $0x90] sm:$0xff]
    %v116 = vld [vmem:[#allocation6 + $0x98] sm:$0xff]
    %v117 = vld [vmem:[#allocation6 + $0xa0] sm:$0xff]
    %v118 = vld [vmem:[#allocation6 + $0xa8] sm:$0xff]
    %v119 = vld [vmem:[#allocation6 + $0xb0] sm:$0xff]
    %v120 = vld [vmem:[#allocation6 + $0xb8] sm:$0xff]
    %v121 = vld [vmem:[#allocation6 + $0xc0] sm:$0xff]
    %v122 = vld [vmem:[#allocation6 + $0xc8] sm:$0xff]
    %v123 = vld [vmem:[#allocation6 + $0xd0] sm:$0xff]
    %v124 = vld [vmem:[#allocation6 + $0xd8] sm:$0xff]
    %v125 = vld [vmem:[#allocation6 + $0xe0] sm:$0xff]
    %v126 = vld [vmem:[#allocation6 + $0xe8] sm:$0xff]
    %v127 = vld [vmem:[#allocation6 + $0xf0] sm:$0xff]
    %v128 = vld [vmem:[#allocation6 + $0xf8] sm:$0xff]
    %v129 = vld [vmem:[#allocation6 + $0x100] sm:$0xff]
    %v130 = vld [vmem:[#allocation6 + $0x108] sm:$0xff]
    %v131 = vld [vmem:[#allocation6 + $0x110] sm:$0xff]
    %v132 = vld [vmem:[#allocation6 + $0x118] sm:$0xff]
    %v133 = vld [vmem:[#allocation6 + $0x120] sm:$0xff]
    %v134 = vld [vmem:[#allocation6 + $0x128] sm:$0xff]
    %v135 = vld [vmem:[#allocation6 + $0x130] sm:$0xff]
    %v136 = vld [vmem:[#allocation6 + $0x138] sm:$0xff]
    %v137 = vld [vmem:[#allocation6 + $0x140] sm:$0xff]
    %v138 = vld [vmem:[#allocation6 + $0x148] sm:$0xff]
    %v139 = vld [vmem:[#allocation6 + $0x150] sm:$0xff]
    %v140 = vld [vmem:[#allocation6 + $0x158] sm:$0xff]
    %v141 = vld [vmem:[#allocation6 + $0x160] sm:$0xff]
    %v142 = vld [vmem:[#allocation6 + $0x168] sm:$0xff]
    %v143 = vld [vmem:[#allocation6 + $0x170] sm:$0xff]
    %v144 = vld [vmem:[#allocation6 + $0x178] sm:$0xff]
    %v145 = vld [vmem:[%s5] sm:$0x3f]
    %v147 = vlaneseq
    %v148 = vshrl.u32 %v147, 7
    %v149 = vsub.s32 0, %v148
    %v150 = vrot.slane %v145, %v149
    %v151 = vlaneseq
    %v152 = vshrl.u32 %v151, 7
    %v153 = vsub.s32 1, %v152
    %v154 = vrot.slane %v145, %v153
    %v155 = vlaneseq
    %v156 = vshrl.u32 %v155, 7
    %v157 = vsub.s32 2, %v156
    %v158 = vrot.slane %v145, %v157
    %v159 = vlaneseq
    %v160 = vshrl.u32 %v159, 7
    %v161 = vsub.s32 3, %v160
    %v162 = vrot.slane %v145, %v161
    %v163 = vlaneseq
    %v164 = vshrl.u32 %v163, 7
    %v165 = vsub.s32 4, %v164
    %v166 = vrot.slane %v145, %v165
    %v167 = vlaneseq
    %v168 = vshrl.u32 %v167, 7
    %v169 = vsub.s32 5, %v168
    %v170 = vrot.slane %v145, %v169
    %v185 = vunpack.c.l.b16 %v89
    %v186 = vunpack.c.l.b16 %v90
    %v187 = vunpack.c.l.b16 %v91
    %v188 = vunpack.c.l.b16 %v92
    %v189 = vunpack.c.l.b16 %v93
    %v190 = vunpack.c.l.b16 %v94
    %v191 = vunpack.c.l.b16 %v95
    %v192 = vunpack.c.l.b16 %v96
    %v193 = vpack.c.b16 %v186, %v185
    %v194 = vpack.c.b16 %v188, %v187
    %v195 = vpack.c.b16 %v190, %v189
    %v196 = vpack.c.b16 %v192, %v191
    %v249 = vunpack.c.l.b16 %v97
    %v250 = vunpack.c.h.b16 %v97
    %v251 = vunpack.c.l.b16 %v98
    %v252 = vunpack.c.h.b16 %v98
    %v253 = vunpack.c.l.b16 %v99
    %v254 = vunpack.c.h.b16 %v99
    %v255 = vunpack.c.l.b16 %v100
    %v256 = vunpack.c.h.b16 %v100
    %v257 = vunpack.c.l.b16 %v101
    %v258 = vunpack.c.h.b16 %v101
    %v259 = vunpack.c.l.b16 %v102
    %v260 = vunpack.c.h.b16 %v102
    %v261 = vunpack.c.l.b16 %v103
    %v262 = vunpack.c.h.b16 %v103
    %v263 = vunpack.c.l.b16 %v104
    %v264 = vunpack.c.h.b16 %v104
    %v265 = vunpack.c.l.b16 %v105
    %v266 = vunpack.c.h.b16 %v105
    %v267 = vunpack.c.l.b16 %v106
    %v268 = vunpack.c.h.b16 %v106
    %v269 = vunpack.c.l.b16 %v107
    %v270 = vunpack.c.h.b16 %v107
    %v271 = vunpack.c.l.b16 %v108
    %v272 = vunpack.c.h.b16 %v108
    %v273 = vunpack.c.l.b16 %v109
    %v274 = vunpack.c.h.b16 %v109
    %v275 = vunpack.c.l.b16 %v110
    %v276 = vunpack.c.h.b16 %v110
    %v277 = vunpack.c.l.b16 %v111
    %v278 = vunpack.c.h.b16 %v111
    %v279 = vunpack.c.l.b16 %v112
    %v280 = vunpack.c.h.b16 %v112
    %v281 = vunpack.c.l.b16 %v113
    %v282 = vunpack.c.h.b16 %v113
    %v283 = vunpack.c.l.b16 %v114
    %v284 = vunpack.c.h.b16 %v114
    %v285 = vunpack.c.l.b16 %v115
    %v286 = vunpack.c.h.b16 %v115
    %v287 = vunpack.c.l.b16 %v116
    %v288 = vunpack.c.h.b16 %v116
    %v289 = vunpack.c.l.b16 %v117
    %v290 = vunpack.c.h.b16 %v117
    %v291 = vunpack.c.l.b16 %v118
    %v292 = vunpack.c.h.b16 %v118
    %v293 = vunpack.c.l.b16 %v119
    %v294 = vunpack.c.h.b16 %v119
    %v295 = vunpack.c.l.b16 %v120
    %v296 = vunpack.c.h.b16 %v120
    %v297 = vunpack.c.l.b16 %v121
    %v298 = vunpack.c.h.b16 %v121
    %v299 = vunpack.c.l.b16 %v122
    %v300 = vunpack.c.h.b16 %v122
    %v301 = vunpack.c.l.b16 %v123
    %v302 = vunpack.c.h.b16 %v123
    %v303 = vunpack.c.l.b16 %v124
    %v304 = vunpack.c.h.b16 %v124
    %v305 = vunpack.c.l.b16 %v125
    %v306 = vunpack.c.h.b16 %v125
    %v307 = vunpack.c.l.b16 %v126
    %v308 = vunpack.c.h.b16 %v126
    %v309 = vunpack.c.l.b16 %v127
    %v310 = vunpack.c.h.b16 %v127
    %v311 = vunpack.c.l.b16 %v128
    %v312 = vunpack.c.h.b16 %v128
    %v313 = vunpack.c.l.b16 %v129
    %v314 = vunpack.c.h.b16 %v129
    %v315 = vunpack.c.l.b16 %v130
    %v316 = vunpack.c.h.b16 %v130
    %v317 = vunpack.c.l.b16 %v131
    %v318 = vunpack.c.h.b16 %v131
    %v319 = vunpack.c.l.b16 %v132
    %v320 = vunpack.c.h.b16 %v132
    %v321 = vunpack.c.l.b16 %v133
    %v322 = vunpack.c.h.b16 %v133
    %v323 = vunpack.c.l.b16 %v134
    %v324 = vunpack.c.h.b16 %v134
    %v325 = vunpack.c.l.b16 %v135
    %v326 = vunpack.c.h.b16 %v135
    %v327 = vunpack.c.l.b16 %v136
    %v328 = vunpack.c.h.b16 %v136
    %v329 = vunpack.c.l.b16 %v137
    %v330 = vunpack.c.h.b16 %v137
    %v331 = vunpack.c.l.b16 %v138
    %v332 = vunpack.c.h.b16 %v138
    %v333 = vunpack.c.l.b16 %v139
    %v334 = vunpack.c.h.b16 %v139
    %v335 = vunpack.c.l.b16 %v140
    %v336 = vunpack.c.h.b16 %v140
    %v337 = vunpack.c.l.b16 %v141
    %v338 = vunpack.c.h.b16 %v141
    %v339 = vunpack.c.l.b16 %v142
    %v340 = vunpack.c.h.b16 %v142
    %v341 = vunpack.c.l.b16 %v143
    %v342 = vunpack.c.h.b16 %v143
    %v343 = vunpack.c.l.b16 %v144
    %v344 = vunpack.c.h.b16 %v144
    %v345 = vpack.c.b16 %v255, %v249
    %v346 = vpack.c.b16 %v256, %v250
    %v347 = vpack.c.b16 %v257, %v251
    %v348 = vpack.c.b16 %v258, %v252
    %v349 = vpack.c.b16 %v259, %v253
    %v350 = vpack.c.b16 %v260, %v254
    %v351 = vpack.c.b16 %v267, %v261
    %v352 = vpack.c.b16 %v268, %v262
    %v353 = vpack.c.b16 %v269, %v263
    %v354 = vpack.c.b16 %v270, %v264
    %v355 = vpack.c.b16 %v271, %v265
    %v356 = vpack.c.b16 %v272, %v266
    %v357 = vpack.c.b16 %v279, %v273
    %v358 = vpack.c.b16 %v280, %v274
    %v359 = vpack.c.b16 %v281, %v275
    %v360 = vpack.c.b16 %v282, %v276
    %v361 = vpack.c.b16 %v283, %v277
    %v362 = vpack.c.b16 %v284, %v278
    %v363 = vpack.c.b16 %v291, %v285
    %v364 = vpack.c.b16 %v292, %v286
    %v365 = vpack.c.b16 %v293, %v287
    %v366 = vpack.c.b16 %v294, %v288
    %v367 = vpack.c.b16 %v295, %v289
    %v368 = vpack.c.b16 %v296, %v290
    %v369 = vpack.c.b16 %v303, %v297
    %v370 = vpack.c.b16 %v304, %v298
    %v371 = vpack.c.b16 %v305, %v299
    %v372 = vpack.c.b16 %v306, %v300
    %v373 = vpack.c.b16 %v307, %v301
    %v374 = vpack.c.b16 %v308, %v302
    %v375 = vpack.c.b16 %v315, %v309
    %v376 = vpack.c.b16 %v316, %v310
    %v377 = vpack.c.b16 %v317, %v311
    %v378 = vpack.c.b16 %v318, %v312
    %v379 = vpack.c.b16 %v319, %v313
    %v380 = vpack.c.b16 %v320, %v314
    %v381 = vpack.c.b16 %v327, %v321
    %v382 = vpack.c.b16 %v328, %v322
    %v383 = vpack.c.b16 %v329, %v323
    %v384 = vpack.c.b16 %v330, %v324
    %v385 = vpack.c.b16 %v331, %v325
    %v386 = vpack.c.b16 %v332, %v326
    %v387 = vpack.c.b16 %v339, %v333
    %v388 = vpack.c.b16 %v340, %v334
    %v389 = vpack.c.b16 %v341, %v335
    %v390 = vpack.c.b16 %v342, %v336
    %v391 = vpack.c.b16 %v343, %v337
    %v392 = vpack.c.b16 %v344, %v338
    %441 = vmatprep.subr.bf16.mxu0 %v346
    %442 = vmatpush1.bf16.msra.mxu0 %v345
    %443 = vmatprep.subr.bf16.mxu0 %v352
    %444 = vmatpush1.bf16.msra.mxu0 %v351
    %445 = vmatprep.subr.bf16.mxu0 %v358
    %446 = vmatpush1.bf16.msra.mxu0 %v357
    %447 = vmatprep.subr.bf16.mxu0 %v364
    %448 = vmatpush1.bf16.msra.mxu0 %v363
    %449 = vmatprep.subr.bf16.mxu0 %v370
    %450 = vmatpush1.bf16.msra.mxu0 %v369
    %451 = vmatprep.subr.bf16.mxu0 %v376
    %452 = vmatpush1.bf16.msra.mxu0 %v375
    %453 = vmatprep.subr.bf16.mxu0 %v382
    %454 = vmatpush1.bf16.msra.mxu0 %v381
    %455 = vmatprep.subr.bf16.mxu0 %v388
    %456 = vmatpush1.bf16.msra.mxu0 %v387
    %457 = vmatprep.subr.bf16.mxu0 0
    %458 = vmatpush1.bf16.msra.mxu0 0
    %459 = vmatprep.subr.bf16.mxu0 0
    %460 = vmatpush1.bf16.msra.mxu0 0
    %461 = vmatprep.subr.bf16.mxu0 0
    %462 = vmatpush1.bf16.msra.mxu0 0
    %463 = vmatprep.subr.bf16.mxu0 0
    %464 = vmatpush1.bf16.msra.mxu0 0
    %465 = vmatprep.subr.bf16.mxu0 0
    %466 = vmatpush1.bf16.msra.mxu0 0
    %467 = vmatprep.subr.bf16.mxu0 0
    %468 = vmatpush1.bf16.msra.mxu0 0
    %469 = vmatprep.subr.bf16.mxu0 0
    %470 = vmatpush1.bf16.msra.mxu0 0
    %471 = vmatprep.subr.bf16.mxu0 0
    %472 = vmatpush1.bf16.msra.mxu0 0
    %473 = vmatprep.mubr.bf16.mxu0 0
    %474 = vmatmul.mubr.bf16.gmra.mrb[0].mxu0 %v193
    %v475 = vpop.f32.mrb[0].mxu0
    %v476 = vadd.f32 %v150, %v475
    %v477 = vpop.f32.mrb[0].mxu0
    %v478 = vadd.f32 %v154, %v477
    %v479 = vpop.f32.mrb[0].mxu0
    %v480 = vadd.f32 %v150, %v479
    %v481 = vpop.f32.mrb[0].mxu0
    %v482 = vadd.f32 %v154, %v481
    %483 = vmatprep.mubr.bf16.mxu0 0
    %484 = vmatmul.mubr.bf16.gmra.mrb[0].mxu0 %v194
    %v485 = vpop.f32.mrb[0].mxu0
    %v486 = vadd.f32 %v150, %v485
    %v487 = vpop.f32.mrb[0].mxu0
    %v488 = vadd.f32 %v154, %v487
    %v489 = vpop.f32.mrb[0].mxu0
    %v490 = vadd.f32 %v150, %v489
    %v491 = vpop.f32.mrb[0].mxu0
    %v492 = vadd.f32 %v154, %v491
    %493 = vmatprep.mubr.bf16.mxu0 0
    %494 = vmatmul.mubr.bf16.gmra.mrb[0].mxu0 %v195
    %v495 = vpop.f32.mrb[0].mxu0
    %v496 = vadd.f32 %v150, %v495
    %v497 = vpop.f32.mrb[0].mxu0
    %v498 = vadd.f32 %v154, %v497
    %v499 = vpop.f32.mrb[0].mxu0
    %v500 = vadd.f32 %v150, %v499
    %v501 = vpop.f32.mrb[0].mxu0
    %v502 = vadd.f32 %v154, %v501
    %503 = vmatprep.mubr.bf16.mxu0 0
    %504 = vmatmul.mubr.bf16.gmra.mrb[0].mxu0 %v196
    %v505 = vpop.f32.mrb[0].mxu0
    %v506 = vadd.f32 %v150, %v505
    %v507 = vpop.f32.mrb[0].mxu0
    %v508 = vadd.f32 %v154, %v507
    %v509 = vpop.f32.mrb[0].mxu0
    %v510 = vadd.f32 %v150, %v509
    %v511 = vpop.f32.mrb[0].mxu0
    %v512 = vadd.f32 %v154, %v511
    %513 = vdwg.mxu0
    %514 = vmatprep.subr.bf16.mxu0 %v348
    %515 = vmatpush1.bf16.msra.mxu0 %v347
    %516 = vmatprep.subr.bf16.mxu0 %v354
    %517 = vmatpush1.bf16.msra.mxu0 %v353
    %518 = vmatprep.subr.bf16.mxu0 %v360
    %519 = vmatpush1.bf16.msra.mxu0 %v359
    %520 = vmatprep.subr.bf16.mxu0 %v366
    %521 = vmatpush1.bf16.msra.mxu0 %v365
    %522 = vmatprep.subr.bf16.mxu0 %v372
    %523 = vmatpush1.bf16.msra.mxu0 %v371
    %524 = vmatprep.subr.bf16.mxu0 %v378
    %525 = vmatpush1.bf16.msra.mxu0 %v377
    %526 = vmatprep.subr.bf16.mxu0 %v384
    %527 = vmatpush1.bf16.msra.mxu0 %v383
    %528 = vmatprep.subr.bf16.mxu0 %v390
    %529 = vmatpush1.bf16.msra.mxu0 %v389
    %530 = vmatprep.subr.bf16.mxu0 0
    %531 = vmatpush1.bf16.msra.mxu0 0
    %532 = vmatprep.subr.bf16.mxu0 0
    %533 = vmatpush1.bf16.msra.mxu0 0
    %534 = vmatprep.subr.bf16.mxu0 0
    %535 = vmatpush1.bf16.msra.mxu0 0
    %536 = vmatprep.subr.bf16.mxu0 0
    %537 = vmatpush1.bf16.msra.mxu0 0
    %538 = vmatprep.subr.bf16.mxu0 0
    %539 = vmatpush1.bf16.msra.mxu0 0
    %540 = vmatprep.subr.bf16.mxu0 0
    %541 = vmatpush1.bf16.msra.mxu0 0
    %542 = vmatprep.subr.bf16.mxu0 0
    %543 = vmatpush1.bf16.msra.mxu0 0
    %544 = vmatprep.subr.bf16.mxu0 0
    %545 = vmatpush1.bf16.msra.mxu0 0
    %546 = vmatprep.mubr.bf16.mxu0 0
    %547 = vmatmul.mubr.bf16.gmra.mrb[0].mxu0 %v193
    %v548 = vpop.f32.mrb[0].mxu0
    %v549 = vadd.f32 %v158, %v548
    %v550 = vpop.f32.mrb[0].mxu0
    %v551 = vadd.f32 %v162, %v550
    %v552 = vpop.f32.mrb[0].mxu0
    %v553 = vadd.f32 %v158, %v552
    %v554 = vpop.f32.mrb[0].mxu0
    %v555 = vadd.f32 %v162, %v554
    %556 = vmatprep.mubr.bf16.mxu0 0
    %557 = vmatmul.mubr.bf16.gmra.mrb[0].mxu0 %v194
    %v558 = vpop.f32.mrb[0].mxu0
    %v559 = vadd.f32 %v158, %v558
    %v560 = vpop.f32.mrb[0].mxu0
    %v561 = vadd.f32 %v162, %v560
    %v562 = vpop.f32.mrb[0].mxu0
    %v563 = vadd.f32 %v158, %v562
    %v564 = vpop.f32.mrb[0].mxu0
    %v565 = vadd.f32 %v162, %v564
    %566 = vmatprep.mubr.bf16.mxu0 0
    %567 = vmatmul.mubr.bf16.gmra.mrb[0].mxu0 %v195
    %v568 = vpop.f32.mrb[0].mxu0
    %v569 = vadd.f32 %v158, %v568
    %v570 = vpop.f32.mrb[0].mxu0
    %v571 = vadd.f32 %v162, %v570
    %v572 = vpop.f32.mrb[0].mxu0
    %v573 = vadd.f32 %v158, %v572
    %v574 = vpop.f32.mrb[0].mxu0
    %v575 = vadd.f32 %v162, %v574
    %576 = vmatprep.mubr.bf16.mxu0 0
    %577 = vmatmul.mubr.bf16.gmra.mrb[0].mxu0 %v196
    %v578 = vpop.f32.mrb[0].mxu0
    %v579 = vadd.f32 %v158, %v578
    %v580 = vpop.f32.mrb[0].mxu0
    %v581 = vadd.f32 %v162, %v580
    %v582 = vpop.f32.mrb[0].mxu0
    %v583 = vadd.f32 %v158, %v582
    %v584 = vpop.f32.mrb[0].mxu0
    %v585 = vadd.f32 %v162, %v584
    %586 = vdwg.mxu0
    %587 = vmatprep.subr.bf16.mxu0 %v350
    %588 = vmatpush1.bf16.msra.mxu0 %v349
    %589 = vmatprep.subr.bf16.mxu0 %v356
    %590 = vmatpush1.bf16.msra.mxu0 %v355
    %591 = vmatprep.subr.bf16.mxu0 %v362
    %592 = vmatpush1.bf16.msra.mxu0 %v361
    %593 = vmatprep.subr.bf16.mxu0 %v368
    %594 = vmatpush1.bf16.msra.mxu0 %v367
    %595 = vmatprep.subr.bf16.mxu0 %v374
    %596 = vmatpush1.bf16.msra.mxu0 %v373
    %597 = vmatprep.subr.bf16.mxu0 %v380
    %598 = vmatpush1.bf16.msra.mxu0 %v379
    %599 = vmatprep.subr.bf16.mxu0 %v386
    %600 = vmatpush1.bf16.msra.mxu0 %v385
    %601 = vmatprep.subr.bf16.mxu0 %v392
    %602 = vmatpush1.bf16.msra.mxu0 %v391
    %603 = vmatprep.subr.bf16.mxu0 0
    %604 = vmatpush1.bf16.msra.mxu0 0
    %605 = vmatprep.subr.bf16.mxu0 0
    %606 = vmatpush1.bf16.msra.mxu0 0
    %607 = vmatprep.subr.bf16.mxu0 0
    %608 = vmatpush1.bf16.msra.mxu0 0
    %609 = vmatprep.subr.bf16.mxu0 0
    %610 = vmatpush1.bf16.msra.mxu0 0
    %611 = vmatprep.subr.bf16.mxu0 0
    %612 = vmatpush1.bf16.msra.mxu0 0
    %613 = vmatprep.subr.bf16.mxu0 0
    %614 = vmatpush1.bf16.msra.mxu0 0
    %615 = vmatprep.subr.bf16.mxu0 0
    %616 = vmatpush1.bf16.msra.mxu0 0
    %617 = vmatprep.subr.bf16.mxu0 0
    %618 = vmatpush1.bf16.msra.mxu0 0
    %619 = vmatprep.mubr.bf16.mxu0 0
    %620 = vmatmul.mubr.bf16.gmra.mrb[0].mxu0 %v193
    %v621 = vpop.f32.mrb[0].mxu0
    %v622 = vadd.f32 %v166, %v621
    %v623 = vpop.f32.mrb[0].mxu0
    %v624 = vadd.f32 %v170, %v623
    %v625 = vpop.f32.mrb[0].mxu0
    %v626 = vadd.f32 %v166, %v625
    %v627 = vpop.f32.mrb[0].mxu0
    %v628 = vadd.f32 %v170, %v627
    %629 = vmatprep.mubr.bf16.mxu0 0
    %630 = vmatmul.mubr.bf16.gmra.mrb[0].mxu0 %v194
    %v631 = vpop.f32.mrb[0].mxu0
    %v632 = vadd.f32 %v166, %v631
    %v633 = vpop.f32.mrb[0].mxu0
    %v634 = vadd.f32 %v170, %v633
    %v635 = vpop.f32.mrb[0].mxu0
    %v636 = vadd.f32 %v166, %v635
    %v637 = vpop.f32.mrb[0].mxu0
    %v638 = vadd.f32 %v170, %v637
    %639 = vmatprep.mubr.bf16.mxu0 0
    %640 = vmatmul.mubr.bf16.gmra.mrb[0].mxu0 %v195
    %v641 = vpop.f32.mrb[0].mxu0
    %v642 = vadd.f32 %v166, %v641
    %v643 = vpop.f32.mrb[0].mxu0
    %v644 = vadd.f32 %v170, %v643
    %v645 = vpop.f32.mrb[0].mxu0
    %v646 = vadd.f32 %v166, %v645
    %v647 = vpop.f32.mrb[0].mxu0
    %v648 = vadd.f32 %v170, %v647
    %649 = vmatprep.mubr.bf16.mxu0 0
    %650 = vmatmul.mubr.bf16.gmra.mrb[0].mxu0 %v196
    %v651 = vpop.f32.mrb[0].mxu0
    %v652 = vadd.f32 %v166, %v651
    %v653 = vpop.f32.mrb[0].mxu0
    %v654 = vadd.f32 %v170, %v653
    %v655 = vpop.f32.mrb[0].mxu0
    %v656 = vadd.f32 %v166, %v655
    %v657 = vpop.f32.mrb[0].mxu0
    %v658 = vadd.f32 %v170, %v657
    %659 = vdwg.mxu0
    %660 = vst [vmem:[#allocation2] sm:$0xff] %v476
    %661 = vst [vmem:[#allocation2 + $0x8] sm:$0xff] %v478
    %662 = vst [vmem:[#allocation2 + $0x10] sm:$0xff] %v549
    %663 = vst [vmem:[#allocation2 + $0x18] sm:$0xff] %v551
    %664 = vst [vmem:[#allocation2 + $0x20] sm:$0xff] %v622
    %665 = vst [vmem:[#allocation2 + $0x28] sm:$0xff] %v624
    %666 = vst [vmem:[#allocation2 + $0x30] sm:$0xff] %v480
    %667 = vst [vmem:[#allocation2 + $0x38] sm:$0xff] %v482
    %668 = vst [vmem:[#allocation2 + $0x40] sm:$0xff] %v553
    %669 = vst [vmem:[#allocation2 + $0x48] sm:$0xff] %v555
    %670 = vst [vmem:[#allocation2 + $0x50] sm:$0xff] %v626
    %671 = vst [vmem:[#allocation2 + $0x58] sm:$0xff] %v628
    %672 = vst [vmem:[#allocation2 + $0x60] sm:$0xff] %v486
    %673 = vst [vmem:[#allocation2 + $0x68] sm:$0xff] %v488
    %674 = vst [vmem:[#allocation2 + $0x70] sm:$0xff] %v559
    %675 = vst [vmem:[#allocation2 + $0x78] sm:$0xff] %v561
    %676 = vst [vmem:[#allocation2 + $0x80] sm:$0xff] %v632
    %677 = vst [vmem:[#allocation2 + $0x88] sm:$0xff] %v634
    %678 = vst [vmem:[#allocation2 + $0x90] sm:$0xff] %v490
    %679 = vst [vmem:[#allocation2 + $0x98] sm:$0xff] %v492
    %680 = vst [vmem:[#allocation2 + $0xa0] sm:$0xff] %v563
    %681 = vst [vmem:[#allocation2 + $0xa8] sm:$0xff] %v565
    %682 = vst [vmem:[#allocation2 + $0xb0] sm:$0xff] %v636
    %683 = vst [vmem:[#allocation2 + $0xb8] sm:$0xff] %v638
    %684 = vst [vmem:[#allocation2 + $0xc0] sm:$0xff] %v496
    %685 = vst [vmem:[#allocation2 + $0xc8] sm:$0xff] %v498
    %686 = vst [vmem:[#allocation2 + $0xd0] sm:$0xff] %v569
    %687 = vst [vmem:[#allocation2 + $0xd8] sm:$0xff] %v571
    %688 = vst [vmem:[#allocation2 + $0xe0] sm:$0xff] %v642
    %689 = vst [vmem:[#allocation2 + $0xe8] sm:$0xff] %v644
    %690 = vst [vmem:[#allocation2 + $0xf0] sm:$0xff] %v500
    %691 = vst [vmem:[#allocation2 + $0xf8] sm:$0xff] %v502
    %692 = vst [vmem:[#allocation2 + $0x100] sm:$0xff] %v573
    %693 = vst [vmem:[#allocation2 + $0x108] sm:$0xff] %v575
    %694 = vst [vmem:[#allocation2 + $0x110] sm:$0xff] %v646
    %695 = vst [vmem:[#allocation2 + $0x118] sm:$0xff] %v648
    %696 = vst [vmem:[#allocation2 + $0x120] sm:$0xff] %v506
    %697 = vst [vmem:[#allocation2 + $0x128] sm:$0xff] %v508
    %698 = vst [vmem:[#allocation2 + $0x130] sm:$0xff] %v579
    %699 = vst [vmem:[#allocation2 + $0x138] sm:$0xff] %v581
    %700 = vst [vmem:[#allocation2 + $0x140] sm:$0xff] %v652
    %701 = vst [vmem:[#allocation2 + $0x148] sm:$0xff] %v654
    %702 = vst [vmem:[#allocation2 + $0x150] sm:$0xff] %v510
    %703 = vst [vmem:[#allocation2 + $0x158] sm:$0xff] %v512
    %704 = vst [vmem:[#allocation2 + $0x160] sm:$0xff] %v583
    %705 = vst [vmem:[#allocation2 + $0x168] sm:$0xff] %v585
    %706 = vst [vmem:[#allocation2 + $0x170] sm:$0xff] %v656
    %707 = vst [vmem:[#allocation2 + $0x178] sm:$0xff] %v658
    %v708 = vld [vmem:[%s1] sm:$0xff]
    %v709 = vld [vmem:[%s6] sm:$0x1]
    %v710 = vld [vmem:[%s6 + $0x1] sm:$0x1]
    %v711 = vld [vmem:[%s7] sm:$0xff]
    %v712 = vld [vmem:[%s7 + $0x8] sm:$0xff]
    %v713 = vld [vmem:[#allocation2] sm:$0xff]
    %v714 = vld [vmem:[#allocation2 + $0x8] sm:$0xff]
    %v715 = vld [vmem:[#allocation2 + $0x10] sm:$0xff]
    %s716 = scalar_lea.vmem [#allocation2], 336
    %v717 = vld [vmem:[%s716 + $0x18] sm:$0xff]
    %v718 = vld [vmem:[%s716 + $0x20] sm:$0xff]
    %v719 = vld [vmem:[%s716 + $0x28] sm:$0xff]
    %vm720 = vcmp.gt.s32.totalorder %v708, 0
    %v721 = vsel %vm720, 1, 0
    %v722 = vcvt.s32.f32 %v721
    %vm723 = vcmp.gt.s32.totalorder %v708, 7
    %v724 = vsel %vm723, 1, 0
    %v725 = vcvt.s32.f32 %v724
    %v726 = vpack.c.bf16 %v711, %v711
    %v727 = vld [vmem:[#allocation8] sm:$0xff]
    %v728 = vld [vmem:[#allocation8 + $0x8] sm:$0xf]
    %v729 = vld [vmem:[#allocation8 + $0xc] sm:$0xff]
    %v730 = vld [vmem:[#allocation8 + $0x14] sm:$0xf]
    %v731 = vld [vmem:[#allocation8 + $0x18] sm:$0xff]
    %v732 = vld [vmem:[#allocation8 + $0x20] sm:$0xf]
    %v733 = vld [vmem:[#allocation8 + $0x24] sm:$0xff]
    %v734 = vld [vmem:[#allocation8 + $0x2c] sm:$0xf]
    %v735 = vld [vmem:[#allocation8 + $0x30] sm:$0xff]
    %v736 = vld [vmem:[#allocation8 + $0x38] sm:$0xf]
    %v737 = vld [vmem:[#allocation8 + $0x3c] sm:$0xff]
    %v738 = vld [vmem:[#allocation8 + $0x44] sm:$0xf]
    %v739 = vld [vmem:[#allocation8 + $0x48] sm:$0xff]
    %v740 = vld [vmem:[#allocation8 + $0x50] sm:$0xf]
    %v741 = vld [vmem:[#allocation8 + $0x54] sm:$0xff]
    %v742 = vld [vmem:[#allocation8 + $0x5c] sm:$0xf]
    %v743 = vld [vmem:[#allocation8 + $0x60] sm:$0xff]
    %v744 = vld [vmem:[#allocation8 + $0x68] sm:$0xf]
    %v745 = vld [vmem:[#allocation8 + $0x6c] sm:$0xff]
    %v746 = vld [vmem:[#allocation8 + $0x74] sm:$0xf]
    %v747 = vld [vmem:[#allocation8 + $0x78] sm:$0xff]
    %v748 = vld [vmem:[#allocation8 + $0x80] sm:$0xf]
    %v749 = vld [vmem:[#allocation8 + $0x84] sm:$0xff]
    %v750 = vld [vmem:[#allocation8 + $0x8c] sm:$0xf]
    %v751 = vld [vmem:[#allocation8 + $0x90] sm:$0xff]
    %v752 = vld [vmem:[#allocation8 + $0x98] sm:$0xf]
    %v753 = vld [vmem:[#allocation8 + $0x9c] sm:$0xff]
    %v754 = vld [vmem:[#allocation8 + $0xa4] sm:$0xf]
    %v755 = vld [vmem:[#allocation8 + $0xa8] sm:$0xff]
    %v756 = vld [vmem:[#allocation8 + $0xb0] sm:$0xf]
    %v757 = vld [vmem:[#allocation8 + $0xb4] sm:$0xff]
    %v758 = vld [vmem:[#allocation8 + $0xbc] sm:$0xf]
    %v791 = vunpack.c.l.b16 %v727
    %v792 = vunpack.c.h.b16 %v727
    %v793 = vunpack.c.l.b16 %v728
    %v794 = vunpack.c.l.b16 %v729
    %v795 = vunpack.c.h.b16 %v729
    %v796 = vunpack.c.l.b16 %v730
    %v797 = vunpack.c.l.b16 %v731
    %v798 = vunpack.c.h.b16 %v731
    %v799 = vunpack.c.l.b16 %v732
    %v800 = vunpack.c.l.b16 %v733
    %v801 = vunpack.c.h.b16 %v733
    %v802 = vunpack.c.l.b16 %v734
    %v803 = vunpack.c.l.b16 %v735
    %v804 = vunpack.c.h.b16 %v735
    %v805 = vunpack.c.l.b16 %v736
    %v806 = vunpack.c.l.b16 %v737
    %v807 = vunpack.c.h.b16 %v737
    %v808 = vunpack.c.l.b16 %v738
    %v809 = vunpack.c.l.b16 %v739
    %v810 = vunpack.c.h.b16 %v739
    %v811 = vunpack.c.l.b16 %v740
    %v812 = vunpack.c.l.b16 %v741
    %v813 = vunpack.c.h.b16 %v741
    %v814 = vunpack.c.l.b16 %v742
    %v815 = vunpack.c.l.b16 %v743
    %v816 = vunpack.c.h.b16 %v743
    %v817 = vunpack.c.l.b16 %v744
    %v818 = vunpack.c.l.b16 %v745
    %v819 = vunpack.c.h.b16 %v745
    %v820 = vunpack.c.l.b16 %v746
    %v821 = vunpack.c.l.b16 %v747
    %v822 = vunpack.c.h.b16 %v747
    %v823 = vunpack.c.l.b16 %v748
    %v824 = vunpack.c.l.b16 %v749
    %v825 = vunpack.c.h.b16 %v749
    %v826 = vunpack.c.l.b16 %v750
    %v827 = vunpack.c.l.b16 %v751
    %v828 = vunpack.c.h.b16 %v751
    %v829 = vunpack.c.l.b16 %v752
    %v830 = vunpack.c.l.b16 %v753
    %v831 = vunpack.c.h.b16 %v753
    %v832 = vunpack.c.l.b16 %v754
    %v833 = vunpack.c.l.b16 %v755
    %v834 = vunpack.c.h.b16 %v755
    %v835 = vunpack.c.l.b16 %v756
    %v836 = vunpack.c.l.b16 %v757
    %v837 = vunpack.c.h.b16 %v757
    %v838 = vunpack.c.l.b16 %v758
    %v839 = vpack.c.b16 %v794, %v791
    %v840 = vpack.c.b16 %v795, %v792
    %v841 = vpack.c.b16 %v796, %v793
    %v842 = vpack.c.b16 %v800, %v797
    %v843 = vpack.c.b16 %v801, %v798
    %v844 = vpack.c.b16 %v802, %v799
    %v845 = vpack.c.b16 %v806, %v803
    %v846 = vpack.c.b16 %v807, %v804
    %v847 = vpack.c.b16 %v808, %v805
    %v848 = vpack.c.b16 %v812, %v809
    %v849 = vpack.c.b16 %v813, %v810
    %v850 = vpack.c.b16 %v814, %v811
    %v851 = vpack.c.b16 %v818, %v815
    %v852 = vpack.c.b16 %v819, %v816
    %v853 = vpack.c.b16 %v820, %v817
    %v854 = vpack.c.b16 %v824, %v821
    %v855 = vpack.c.b16 %v825, %v822
    %v856 = vpack.c.b16 %v826, %v823
    %v857 = vpack.c.b16 %v830, %v827
    %v858 = vpack.c.b16 %v831, %v828
    %v859 = vpack.c.b16 %v832, %v829
    %v860 = vpack.c.b16 %v836, %v833
    %v861 = vpack.c.b16 %v837, %v834
    %v862 = vpack.c.b16 %v838, %v835
    %887 = vmatprep.subr.bf16.mxu0 %v840
    %888 = vmatpush1.bf16.msra.mxu0 %v839
    %889 = vmatprep.subr.bf16.mxu0 %v843
    %890 = vmatpush1.bf16.msra.mxu0 %v842
    %891 = vmatprep.subr.bf16.mxu0 %v846
    %892 = vmatpush1.bf16.msra.mxu0 %v845
    %893 = vmatprep.subr.bf16.mxu0 %v849
    %894 = vmatpush1.bf16.msra.mxu0 %v848
    %895 = vmatprep.subr.bf16.mxu0 %v852
    %896 = vmatpush1.bf16.msra.mxu0 %v851
    %897 = vmatprep.subr.bf16.mxu0 %v855
    %898 = vmatpush1.bf16.msra.mxu0 %v854
    %899 = vmatprep.subr.bf16.mxu0 %v858
    %900 = vmatpush1.bf16.msra.mxu0 %v857
    %901 = vmatprep.subr.bf16.mxu0 %v861
    %902 = vmatpush1.bf16.msra.mxu0 %v860
    %903 = vmatprep.subr.bf16.mxu0 0
    %904 = vmatpush1.bf16.msra.mxu0 0
    %905 = vmatprep.subr.bf16.mxu0 0
    %906 = vmatpush1.bf16.msra.mxu0 0
    %907 = vmatprep.subr.bf16.mxu0 0
    %908 = vmatpush1.bf16.msra.mxu0 0
    %909 = vmatprep.subr.bf16.mxu0 0
    %910 = vmatpush1.bf16.msra.mxu0 0
    %911 = vmatprep.subr.bf16.mxu0 0
    %912 = vmatpush1.bf16.msra.mxu0 0
    %913 = vmatprep.subr.bf16.mxu0 0
    %914 = vmatpush1.bf16.msra.mxu0 0
    %915 = vmatprep.subr.bf16.mxu0 0
    %916 = vmatpush1.bf16.msra.mxu0 0
    %917 = vmatprep.subr.bf16.mxu0 0
    %918 = vmatpush1.bf16.msra.mxu0 0
    %919 = vmatprep.mubr.bf16.mxu0 0
    %920 = vmatmul.mubr.bf16.gmra.mrb[0].mxu0 %v726
    %v921 = vpop.f32.mrb[0].mxu0
    %v922 = vadd.f32 0.0, %v921
    %v923 = vpop.f32.mrb[0].mxu0
    %v924 = vadd.f32 0.0, %v923
    %v925 = vpop.f32.mrb[0].mxu0
    %v926 = vpop.f32.mrb[0].mxu0
    %927 = vdwg.mxu0
    %928 = vmatprep.subr.bf16.mxu0 0
    %929 = vmatpush1.bf16.msra.mxu0 %v841
    %930 = vmatprep.subr.bf16.mxu0 0
    %931 = vmatpush1.bf16.msra.mxu0 %v844
    %932 = vmatprep.subr.bf16.mxu0 0
    %933 = vmatpush1.bf16.msra.mxu0 %v847
    %934 = vmatprep.subr.bf16.mxu0 0
    %935 = vmatpush1.bf16.msra.mxu0 %v850
    %936 = vmatprep.subr.bf16.mxu0 0
    %937 = vmatpush1.bf16.msra.mxu0 %v853
    %938 = vmatprep.subr.bf16.mxu0 0
    %939 = vmatpush1.bf16.msra.mxu0 %v856
    %940 = vmatprep.subr.bf16.mxu0 0
    %941 = vmatpush1.bf16.msra.mxu0 %v859
    %942 = vmatprep.subr.bf16.mxu0 0
    %943 = vmatpush1.bf16.msra.mxu0 %v862
    %944 = vmatprep.subr.bf16.mxu0 0
    %945 = vmatpush1.bf16.msra.mxu0 0
    %946 = vmatprep.subr.bf16.mxu0 0
    %947 = vmatpush1.bf16.msra.mxu0 0
    %948 = vmatprep.subr.bf16.mxu0 0
    %949 = vmatpush1.bf16.msra.mxu0 0
    %950 = vmatprep.subr.bf16.mxu0 0
    %951 = vmatpush1.bf16.msra.mxu0 0
    %952 = vmatprep.subr.bf16.mxu0 0
    %953 = vmatpush1.bf16.msra.mxu0 0
    %954 = vmatprep.subr.bf16.mxu0 0
    %955 = vmatpush1.bf16.msra.mxu0 0
    %956 = vmatprep.subr.bf16.mxu0 0
    %957 = vmatpush1.bf16.msra.mxu0 0
    %958 = vmatprep.subr.bf16.mxu0 0
    %959 = vmatpush1.bf16.msra.mxu0 0
    %960 = vmatprep.mubr.bf16.mxu0 0
    %961 = vmatmul.mubr.bf16.gmra.mrb[0].mxu0 %v726
    %v962 = vpop.f32.mrb[0].mxu0
    %v963 = vadd.f32 0.0, %v962
    %v964 = vpop.f32.mrb[0].mxu0
    %v965 = vpop.f32.mrb[0].mxu0
    %v966 = vpop.f32.mrb[0].mxu0
    %967 = vdwg.mxu0
    %v968 = vpack.c.bf16 %v712, %v712
    %v969 = vld [vmem:[#allocation9] sm:$0xff]
    %v970 = vld [vmem:[#allocation9 + $0x8] sm:$0xf]
    %v971 = vld [vmem:[#allocation9 + $0xc] sm:$0xff]
    %v972 = vld [vmem:[#allocation9 + $0x14] sm:$0xf]
    %v973 = vld [vmem:[#allocation9 + $0x18] sm:$0xff]
    %v974 = vld [vmem:[#allocation9 + $0x20] sm:$0xf]
    %v975 = vld [vmem:[#allocation9 + $0x24] sm:$0xff]
    %v976 = vld [vmem:[#allocation9 + $0x2c] sm:$0xf]
    %v977 = vld [vmem:[#allocation9 + $0x30] sm:$0xff]
    %v978 = vld [vmem:[#allocation9 + $0x38] sm:$0xf]
    %v979 = vld [vmem:[#allocation9 + $0x3c] sm:$0xff]
    %v980 = vld [vmem:[#allocation9 + $0x44] sm:$0xf]
    %v981 = vld [vmem:[#allocation9 + $0x48] sm:$0xff]
    %v982 = vld [vmem:[#allocation9 + $0x50] sm:$0xf]
    %v983 = vld [vmem:[#allocation9 + $0x54] sm:$0xff]
    %v984 = vld [vmem:[#allocation9 + $0x5c] sm:$0xf]
    %v985 = vld [vmem:[#allocation9 + $0x60] sm:$0xff]
    %v986 = vld [vmem:[#allocation9 + $0x68] sm:$0xf]
    %v987 = vld [vmem:[#allocation9 + $0x6c] sm:$0xff]
    %v988 = vld [vmem:[#allocation9 + $0x74] sm:$0xf]
    %v989 = vld [vmem:[#allocation9 + $0x78] sm:$0xff]
    %v990 = vld [vmem:[#allocation9 + $0x80] sm:$0xf]
    %v991 = vld [vmem:[#allocation9 + $0x84] sm:$0xff]
    %v992 = vld [vmem:[#allocation9 + $0x8c] sm:$0xf]
    %v993 = vld [vmem:[#allocation9 + $0x90] sm:$0xff]
    %v994 = vld [vmem:[#allocation9 + $0x98] sm:$0xf]
    %v995 = vld [vmem:[#allocation9 + $0x9c] sm:$0xff]
    %v996 = vld [vmem:[#allocation9 + $0xa4] sm:$0xf]
    %v997 = vld [vmem:[#allocation9 + $0xa8] sm:$0xff]
    %v998 = vld [vmem:[#allocation9 + $0xb0] sm:$0xf]
    %v999 = vld [vmem:[#allocation9 + $0xb4] sm:$0xff]
    %v1000 = vld [vmem:[#allocation9 + $0xbc] sm:$0xf]
    %v1033 = vunpack.c.l.b16 %v969
    %v1034 = vunpack.c.h.b16 %v969
    %v1035 = vunpack.c.l.b16 %v970
    %v1036 = vunpack.c.l.b16 %v971
    %v1037 = vunpack.c.h.b16 %v971
    %v1038 = vunpack.c.l.b16 %v972
    %v1039 = vunpack.c.l.b16 %v973
    %v1040 = vunpack.c.h.b16 %v973
    %v1041 = vunpack.c.l.b16 %v974
    %v1042 = vunpack.c.l.b16 %v975
    %v1043 = vunpack.c.h.b16 %v975
    %v1044 = vunpack.c.l.b16 %v976
    %v1045 = vunpack.c.l.b16 %v977
    %v1046 = vunpack.c.h.b16 %v977
    %v1047 = vunpack.c.l.b16 %v978
    %v1048 = vunpack.c.l.b16 %v979
    %v1049 = vunpack.c.h.b16 %v979
    %v1050 = vunpack.c.l.b16 %v980
    %v1051 = vunpack.c.l.b16 %v981
    %v1052 = vunpack.c.h.b16 %v981
    %v1053 = vunpack.c.l.b16 %v982
    %v1054 = vunpack.c.l.b16 %v983
    %v1055 = vunpack.c.h.b16 %v983
    %v1056 = vunpack.c.l.b16 %v984
    %v1057 = vunpack.c.l.b16 %v985
    %v1058 = vunpack.c.h.b16 %v985
    %v1059 = vunpack.c.l.b16 %v986
    %v1060 = vunpack.c.l.b16 %v987
    %v1061 = vunpack.c.h.b16 %v987
    %v1062 = vunpack.c.l.b16 %v988
    %v1063 = vunpack.c.l.b16 %v989
    %v1064 = vunpack.c.h.b16 %v989
    %v1065 = vunpack.c.l.b16 %v990
    %v1066 = vunpack.c.l.b16 %v991
    %v1067 = vunpack.c.h.b16 %v991
    %v1068 = vunpack.c.l.b16 %v992
    %v1069 = vunpack.c.l.b16 %v993
    %v1070 = vunpack.c.h.b16 %v993
    %v1071 = vunpack.c.l.b16 %v994
    %v1072 = vunpack.c.l.b16 %v995
    %v1073 = vunpack.c.h.b16 %v995
    %v1074 = vunpack.c.l.b16 %v996
    %v1075 = vunpack.c.l.b16 %v997
    %v1076 = vunpack.c.h.b16 %v997
    %v1077 = vunpack.c.l.b16 %v998
    %v1078 = vunpack.c.l.b16 %v999
    %v1079 = vunpack.c.h.b16 %v999
    %v1080 = vunpack.c.l.b16 %v1000
    %v1081 = vpack.c.b16 %v1036, %v1033
    %v1082 = vpack.c.b16 %v1037, %v1034
    %v1083 = vpack.c.b16 %v1038, %v1035
    %v1084 = vpack.c.b16 %v1042, %v1039
    %v1085 = vpack.c.b16 %v1043, %v1040
    %v1086 = vpack.c.b16 %v1044, %v1041
    %v1087 = vpack.c.b16 %v1048, %v1045
    %v1088 = vpack.c.b16 %v1049, %v1046
    %v1089 = vpack.c.b16 %v1050, %v1047
    %v1090 = vpack.c.b16 %v1054, %v1051
    %v1091 = vpack.c.b16 %v1055, %v1052
    %v1092 = vpack.c.b16 %v1056, %v1053
    %v1093 = vpack.c.b16 %v1060, %v1057
    %v1094 = vpack.c.b16 %v1061, %v1058
    %v1095 = vpack.c.b16 %v1062, %v1059
    %v1096 = vpack.c.b16 %v1066, %v1063
    %v1097 = vpack.c.b16 %v1067, %v1064
    %v1098 = vpack.c.b16 %v1068, %v1065
    %v1099 = vpack.c.b16 %v1072, %v1069
    %v1100 = vpack.c.b16 %v1073, %v1070
    %v1101 = vpack.c.b16 %v1074, %v1071
    %v1102 = vpack.c.b16 %v1078, %v1075
    %v1103 = vpack.c.b16 %v1079, %v1076
    %v1104 = vpack.c.b16 %v1080, %v1077
    %1129 = vmatprep.subr.bf16.mxu0 %v1082
    %1130 = vmatpush1.bf16.msra.mxu0 %v1081
    %1131 = vmatprep.subr.bf16.mxu0 %v1085
    %1132 = vmatpush1.bf16.msra.mxu0 %v1084
    %1133 = vmatprep.subr.bf16.mxu0 %v1088
    %1134 = vmatpush1.bf16.msra.mxu0 %v1087
    %1135 = vmatprep.subr.bf16.mxu0 %v1091
    %1136 = vmatpush1.bf16.msra.mxu0 %v1090
    %1137 = vmatprep.subr.bf16.mxu0 %v1094
    %1138 = vmatpush1.bf16.msra.mxu0 %v1093
    %1139 = vmatprep.subr.bf16.mxu0 %v1097
    %1140 = vmatpush1.bf16.msra.mxu0 %v1096
    %1141 = vmatprep.subr.bf16.mxu0 %v1100
    %1142 = vmatpush1.bf16.msra.mxu0 %v1099
    %1143 = vmatprep.subr.bf16.mxu0 %v1103
    %1144 = vmatpush1.bf16.msra.mxu0 %v1102
    %1145 = vmatprep.subr.bf16.mxu0 0
    %1146 = vmatpush1.bf16.msra.mxu0 0
    %1147 = vmatprep.subr.bf16.mxu0 0
    %1148 = vmatpush1.bf16.msra.mxu0 0
    %1149 = vmatprep.subr.bf16.mxu0 0
    %1150 = vmatpush1.bf16.msra.mxu0 0
    %1151 = vmatprep.subr.bf16.mxu0 0
    %1152 = vmatpush1.bf16.msra.mxu0 0
    %1153 = vmatprep.subr.bf16.mxu0 0
    %1154 = vmatpush1.bf16.msra.mxu0 0
    %1155 = vmatprep.subr.bf16.mxu0 0
    %1156 = vmatpush1.bf16.msra.mxu0 0
    %1157 = vmatprep.subr.bf16.mxu0 0
    %1158 = vmatpush1.bf16.msra.mxu0 0
    %1159 = vmatprep.subr.bf16.mxu0 0
    %1160 = vmatpush1.bf16.msra.mxu0 0
    %1161 = vmatprep.mubr.bf16.mxu0 0
    %1162 = vmatmul.mubr.bf16.gmra.mrb[0].mxu0 %v968
    %v1163 = vpop.f32.mrb[0].mxu0
    %v1164 = vadd.f32 0.0, %v1163
    %v1165 = vpop.f32.mrb[0].mxu0
    %v1166 = vadd.f32 0.0, %v1165
    %v1167 = vpop.f32.mrb[0].mxu0
    %v1168 = vpop.f32.mrb[0].mxu0
    %1169 = vdwg.mxu0
    %1170 = vmatprep.subr.bf16.mxu0 0
    %1171 = vmatpush1.bf16.msra.mxu0 %v1083
    %1172 = vmatprep.subr.bf16.mxu0 0
    %1173 = vmatpush1.bf16.msra.mxu0 %v1086
    %1174 = vmatprep.subr.bf16.mxu0 0
    %1175 = vmatpush1.bf16.msra.mxu0 %v1089
    %1176 = vmatprep.subr.bf16.mxu0 0
    %1177 = vmatpush1.bf16.msra.mxu0 %v1092
    %1178 = vmatprep.subr.bf16.mxu0 0
    %1179 = vmatpush1.bf16.msra.mxu0 %v1095
    %1180 = vmatprep.subr.bf16.mxu0 0
    %1181 = vmatpush1.bf16.msra.mxu0 %v1098
    %1182 = vmatprep.subr.bf16.mxu0 0
    %1183 = vmatpush1.bf16.msra.mxu0 %v1101
    %1184 = vmatprep.subr.bf16.mxu0 0
    %1185 = vmatpush1.bf16.msra.mxu0 %v1104
    %1186 = vmatprep.subr.bf16.mxu0 0
    %1187 = vmatpush1.bf16.msra.mxu0 0
    %1188 = vmatprep.subr.bf16.mxu0 0
    %1189 = vmatpush1.bf16.msra.mxu0 0
    %1190 = vmatprep.subr.bf16.mxu0 0
    %1191 = vmatpush1.bf16.msra.mxu0 0
    %1192 = vmatprep.subr.bf16.mxu0 0
    %1193 = vmatpush1.bf16.msra.mxu0 0
    %1194 = vmatprep.subr.bf16.mxu0 0
    %1195 = vmatpush1.bf16.msra.mxu0 0
    %1196 = vmatprep.subr.bf16.mxu0 0
    %1197 = vmatpush1.bf16.msra.mxu0 0
    %1198 = vmatprep.subr.bf16.mxu0 0
    %1199 = vmatpush1.bf16.msra.mxu0 0
    %1200 = vmatprep.subr.bf16.mxu0 0
    %1201 = vmatpush1.bf16.msra.mxu0 0
    %1202 = vmatprep.mubr.bf16.mxu0 0
    %1203 = vmatmul.mubr.bf16.gmra.mrb[0].mxu0 %v968
    %v1204 = vpop.f32.mrb[0].mxu0
    %v1205 = vadd.f32 0.0, %v1204
    %v1206 = vpop.f32.mrb[0].mxu0
    %v1207 = vpop.f32.mrb[0].mxu0
    %v1208 = vpop.f32.mrb[0].mxu0
    %1209 = vdwg.mxu0
    %v1210 = vadd.f32 %v713, %v922
    %v1211 = vxor.u32 %v1210, 2147483648
    %v1212 = vmul.f32 %v1211, 1.442695
    %v1213 = vpow.pop %v1212
    %v1214 = vadd.f32 %v1213, 1.0
    %v1215 = vrcp.pop %v1214
    %v1216 = vmul.f32 1.0, %v1215
    %v1217 = vadd.f32 %v714, %v924
    %v1218 = vxor.u32 %v1217, 2147483648
    %v1219 = vmul.f32 %v1218, 1.442695
    %v1220 = vpow.pop %v1219
    %v1221 = vadd.f32 %v1220, 1.0
    %v1222 = vrcp.pop %v1221
    %v1223 = vmul.f32 1.0, %v1222
    %v1225 = vlaneseq
    %v1226 = vshrl.u32 %v1225, 7
    %v1227 = vsub.s32 0, %v1226
    %v1228 = vrot.slane %v709, %v1227
    %v1230 = vadd.f32 %v963, %v1228
    %v1231 = vmul.f32 %v1216, %v1230
    %v1232 = vadd.f32 %v715, %v1231
    %v1233 = vtanh.pop %v1232
    %v1234 = vsub.f32 1.0, %v1223
    %v1235 = vsub.f32 %v1233, %v711
    %v1236 = vmul.f32 %v1234, %v1235
    %v1237 = vadd.f32 %v711, %v1236
    %v1238 = vadd.f32 %v717, %v1164
    %v1239 = vxor.u32 %v1238, 2147483648
    %v1240 = vmul.f32 %v1239, 1.442695
    %v1241 = vpow.pop %v1240
    %v1242 = vadd.f32 %v1241, 1.0
    %v1243 = vrcp.pop %v1242
    %v1244 = vmul.f32 1.0, %v1243
    %v1245 = vadd.f32 %v718, %v1166
    %v1246 = vxor.u32 %v1245, 2147483648
    %v1247 = vmul.f32 %v1246, 1.442695
    %v1248 = vpow.pop %v1247
    %v1249 = vadd.f32 %v1248, 1.0
    %v1250 = vrcp.pop %v1249
    %v1251 = vmul.f32 1.0, %v1250
    %v1253 = vlaneseq
    %v1254 = vshrl.u32 %v1253, 7
    %v1255 = vsub.s32 0, %v1254
    %v1256 = vrot.slane %v710, %v1255
    %v1258 = vadd.f32 %v1205, %v1256
    %v1259 = vmul.f32 %v1244, %v1258
    %v1260 = vadd.f32 %v719, %v1259
    %v1261 = vtanh.pop %v1260
    %v1262 = vsub.f32 1.0, %v1251
    %v1263 = vsub.f32 %v1261, %v712
    %v1264 = vmul.f32 %v1262, %v1263
    %v1265 = vadd.f32 %v712, %v1264
    %v1266 = vsub.f32 %v1237, %v711
    %1268 = vset.pattern.permute.xlu0 0
    %1269 = vperm.xlu0 %1268, %v722
    %v1270 = vpop.permute.xlu0 %1269
    %v1272 = vmul.f32 %v1270, %v1266
    %v1273 = vadd.f32 %v711, %v1272
    %v1274 = vsub.f32 %v1265, %v712
    %1276 = vset.pattern.permute.xlu0 0
    %1277 = vperm.xlu0 %1276, %v725
    %v1278 = vpop.permute.xlu0 %1277
    %v1280 = vmul.f32 %v1278, %v1274
    %v1281 = vadd.f32 %v712, %v1280
    %v1282 = vmul.f32 %v1270, %v1273
    %v1283 = vpack.c.bf16 %v1282, %v1282
    %1284 = vst [vmem:[#allocation11] sm:$0xf] %v1283
    %v1285 = vmul.f32 %v1278, %v1281
    %v1286 = vpack.c.bf16 %v1285, %v1285
    %s1287 = scalar_lea.vmem [#allocation11], 56
    %1288 = vst [vmem:[%s1287 + $0x4] sm:$0xf] %v1286
    %s1289 = scalar_lea.vmem [#allocation2], 48
    %v1290 = vld [vmem:[%s1289] sm:$0xff]
    %v1291 = vld [vmem:[%s1289 + $0x8] sm:$0xff]
    %v1292 = vld [vmem:[%s1289 + $0x10] sm:$0xff]
    %s1293 = scalar_lea.vmem [#allocation2], 288
    %v1294 = vld [vmem:[%s1293 + $0x18] sm:$0xff]
    %v1295 = vld [vmem:[%s1293 + $0x20] sm:$0xff]
    %v1296 = vld [vmem:[%s1293 + $0x28] sm:$0xff]
    %vm1297 = vcmp.gt.s32.totalorder %v708, 1
    %v1298 = vsel %vm1297, 1, 0
    %v1299 = vcvt.s32.f32 %v1298
    %vm1300 = vcmp.gt.s32.totalorder %v708, 6
    %v1301 = vsel %vm1300, 1, 0
    %v1302 = vcvt.s32.f32 %v1301
    %v1303 = vpack.c.bf16 %v1273, %v1273
    %v1304 = vld [vmem:[#allocation8] sm:$0xff]
    %v1305 = vld [vmem:[#allocation8 + $0x8] sm:$0xf]
    %v1306 = vld [vmem:[#allocation8 + $0xc] sm:$0xff]
    %v1307 = vld [vmem:[#allocation8 + $0x14] sm:$0xf]
    %v1308 = vld [vmem:[#allocation8 + $0x18] sm:$0xff]
    %v1309 = vld [vmem:[#allocation8 + $0x20] sm:$0xf]
    %v1310 = vld [vmem:[#allocation8 + $0x24] sm:$0xff]
    %v1311 = vld [vmem:[#allocation8 + $0x2c] sm:$0xf]
    %v1312 = vld [vmem:[#allocation8 + $0x30] sm:$0xff]
    %v1313 = vld [vmem:[#allocation8 + $0x38] sm:$0xf]
    %v1314 = vld [vmem:[#allocation8 + $0x3c] sm:$0xff]
    %v1315 = vld [vmem:[#allocation8 + $0x44] sm:$0xf]
    %v1316 = vld [vmem:[#allocation8 + $0x48] sm:$0xff]
    %v1317 = vld [vmem:[#allocation8 + $0x50] sm:$0xf]
    %v1318 = vld [vmem:[#allocation8 + $0x54] sm:$0xff]
    %v1319 = vld [vmem:[#allocation8 + $0x5c] sm:$0xf]
    %v1320 = vld [vmem:[#allocation8 + $0x60] sm:$0xff]
    %v1321 = vld [vmem:[#allocation8 + $0x68] sm:$0xf]
    %v1322 = vld [vmem:[#allocation8 + $0x6c] sm:$0xff]
    %v1323 = vld [vmem:[#allocation8 + $0x74] sm:$0xf]
    %v1324 = vld [vmem:[#allocation8 + $0x78] sm:$0xff]
    %v1325 = vld [vmem:[#allocation8 + $0x80] sm:$0xf]
    %v1326 = vld [vmem:[#allocation8 + $0x84] sm:$0xff]
    %v1327 = vld [vmem:[#allocation8 + $0x8c] sm:$0xf]
    %v1328 = vld [vmem:[#allocation8 + $0x90] sm:$0xff]
    %v1329 = vld [vmem:[#allocation8 + $0x98] sm:$0xf]
    %v1330 = vld [vmem:[#allocation8 + $0x9c] sm:$0xff]
    %v1331 = vld [vmem:[#allocation8 + $0xa4] sm:$0xf]
    %v1332 = vld [vmem:[#allocation8 + $0xa8] sm:$0xff]
    %v1333 = vld [vmem:[#allocation8 + $0xb0] sm:$0xf]
    %v1334 = vld [vmem:[#allocation8 + $0xb4] sm:$0xff]
    %v1335 = vld [vmem:[#allocation8 + $0xbc] sm:$0xf]
    %v1368 = vunpack.c.l.b16 %v1304
    %v1369 = vunpack.c.h.b16 %v1304
    %v1370 = vunpack.c.l.b16 %v1305
    %v1371 = vunpack.c.l.b16 %v1306
    %v1372 = vunpack.c.h.b16 %v1306
    %v1373 = vunpack.c.l.b16 %v1307
    %v1374 = vunpack.c.l.b16 %v1308
    %v1375 = vunpack.c.h.b16 %v1308
    %v1376 = vunpack.c.l.b16 %v1309
    %v1377 = vunpack.c.l.b16 %v1310
    %v1378 = vunpack.c.h.b16 %v1310
    %v1379 = vunpack.c.l.b16 %v1311
    %v1380 = vunpack.c.l.b16 %v1312
    %v1381 = vunpack.c.h.b16 %v1312
    %v1382 = vunpack.c.l.b16 %v1313
    %v1383 = vunpack.c.l.b16 %v1314
    %v1384 = vunpack.c.h.b16 %v1314
    %v1385 = vunpack.c.l.b16 %v1315
    %v1386 = vunpack.c.l.b16 %v1316
    %v1387 = vunpack.c.h.b16 %v1316
    %v1388 = vunpack.c.l.b16 %v1317
    %v1389 = vunpack.c.l.b16 %v1318
    %v1390 = vunpack.c.h.b16 %v1318
    %v1391 = vunpack.c.l.b16 %v1319
    %v1392 = vunpack.c.l.b16 %v1320
    %v1393 = vunpack.c.h.b16 %v1320
    %v1394 = vunpack.c.l.b16 %v1321
    %v1395 = vunpack.c.l.b16 %v1322
    %v1396 = vunpack.c.h.b16 %v1322
    %v1397 = vunpack.c.l.b16 %v1323
    %v1398 = vunpack.c.l.b16 %v1324
    %v1399 = vunpack.c.h.b16 %v1324
    %v1400 = vunpack.c.l.b16 %v1325
    %v1401 = vunpack.c.l.b16 %v1326
    %v1402 = vunpack.c.h.b16 %v1326
    %v1403 = vunpack.c.l.b16 %v1327
    %v1404 = vunpack.c.l.b16 %v1328
    %v1405 = vunpack.c.h.b16 %v1328
    %v1406 = vunpack.c.l.b16 %v1329
    %v1407 = vunpack.c.l.b16 %v1330
    %v1408 = vunpack.c.h.b16 %v1330
    %v1409 = vunpack.c.l.b16 %v1331
    %v1410 = vunpack.c.l.b16 %v1332
    %v1411 = vunpack.c.h.b16 %v1332
    %v1412 = vunpack.c.l.b16 %v1333
    %v1413 = vunpack.c.l.b16 %v1334
    %v1414 = vunpack.c.h.b16 %v1334
    %v1415 = vunpack.c.l.b16 %v1335
    %v1416 = vpack.c.b16 %v1371, %v1368
    %v1417 = vpack.c.b16 %v1372, %v1369
    %v1418 = vpack.c.b16 %v1373, %v1370
    %v1419 = vpack.c.b16 %v1377, %v1374
    %v1420 = vpack.c.b16 %v1378, %v1375
    %v1421 = vpack.c.b16 %v1379, %v1376
    %v1422 = vpack.c.b16 %v1383, %v1380
    %v1423 = vpack.c.b16 %v1384, %v1381
    %v1424 = vpack.c.b16 %v1385, %v1382
    %v1425 = vpack.c.b16 %v1389, %v1386
    %v1426 = vpack.c.b16 %v1390, %v1387
    %v1427 = vpack.c.b16 %v1391, %v1388
    %v1428 = vpack.c.b16 %v1395, %v1392
    %v1429 = vpack.c.b16 %v1396, %v1393
    %v1430 = vpack.c.b16 %v1397, %v1394
    %v1431 = vpack.c.b16 %v1401, %v1398
    %v1432 = vpack.c.b16 %v1402, %v1399
    %v1433 = vpack.c.b16 %v1403, %v1400
    %v1434 = vpack.c.b16 %v1407, %v1404
    %v1435 = vpack.c.b16 %v1408, %v1405
    %v1436 = vpack.c.b16 %v1409, %v1406
    %v1437 = vpack.c.b16 %v1413, %v1410
    %v1438 = vpack.c.b16 %v1414, %v1411
    %v1439 = vpack.c.b16 %v1415, %v1412
    %1464 = vmatprep.subr.bf16.mxu0 %v1417
    %1465 = vmatpush1.bf16.msra.mxu0 %v1416
    %1466 = vmatprep.subr.bf16.mxu0 %v1420
    %1467 = vmatpush1.bf16.msra.mxu0 %v1419
    %1468 = vmatprep.subr.bf16.mxu0 %v1423
    %1469 = vmatpush1.bf16.msra.mxu0 %v1422
    %1470 = vmatprep.subr.bf16.mxu0 %v1426
    %1471 = vmatpush1.bf16.msra.mxu0 %v1425
    %1472 = vmatprep.subr.bf16.mxu0 %v1429
    %1473 = vmatpush1.bf16.msra.mxu0 %v1428
    %1474 = vmatprep.subr.bf16.mxu0 %v1432
    %1475 = vmatpush1.bf16.msra.mxu0 %v1431
    %1476 = vmatprep.subr.bf16.mxu0 %v1435
    %1477 = vmatpush1.bf16.msra.mxu0 %v1434
    %1478 = vmatprep.subr.bf16.mxu0 %v1438
    %1479 = vmatpush1.bf16.msra.mxu0 %v1437
    %1480 = vmatprep.subr.bf16.mxu0 0
    %1481 = vmatpush1.bf16.msra.mxu0 0
    %1482 = vmatprep.subr.bf16.mxu0 0
    %1483 = vmatpush1.bf16.msra.mxu0 0
    %1484 = vmatprep.subr.bf16.mxu0 0
    %1485 = vmatpush1.bf16.msra.mxu0 0
    %1486 = vmatprep.subr.bf16.mxu0 0
    %1487 = vmatpush1.bf16.msra.mxu0 0
    %1488 = vmatprep.subr.bf16.mxu0 0
    %1489 = vmatpush1.bf16.msra.mxu0 0
    %1490 = vmatprep.subr.bf16.mxu0 0
    %1491 = vmatpush1.bf16.msra.mxu0 0
    %1492 = vmatprep.subr.bf16.mxu0 0
    %1493 = vmatpush1.bf16.msra.mxu0 0
    %1494 = vmatprep.subr.bf16.mxu0 0
    %1495 = vmatpush1.bf16.msra.mxu0 0
    %1496 = vmatprep.mubr.bf16.mxu0 0
    %1497 = vmatmul.mubr.bf16.gmra.mrb[0].mxu0 %v1303
    %v1498 = vpop.f32.mrb[0].mxu0
    %v1499 = vadd.f32 0.0, %v1498
    %v1500 = vpop.f32.mrb[0].mxu0
    %v1501 = vadd.f32 0.0, %v1500
    %v1502 = vpop.f32.mrb[0].mxu0
    %v1503 = vpop.f32.mrb[0].mxu0
    %1504 = vdwg.mxu0
    %1505 = vmatprep.subr.bf16.mxu0 0
    %1506 = vmatpush1.bf16.msra.mxu0 %v1418
    %1507 = vmatprep.subr.bf16.mxu0 0
    %1508 = vmatpush1.bf16.msra.mxu0 %v1421
    %1509 = vmatprep.subr.bf16.mxu0 0
    %1510 = vmatpush1.bf16.msra.mxu0 %v1424
    %1511 = vmatprep.subr.bf16.mxu0 0
    %1512 = vmatpush1.bf16.msra.mxu0 %v1427
    %1513 = vmatprep.subr.bf16.mxu0 0
    %1514 = vmatpush1.bf16.msra.mxu0 %v1430
    %1515 = vmatprep.subr.bf16.mxu0 0
    %1516 = vmatpush1.bf16.msra.mxu0 %v1433
    %1517 = vmatprep.subr.bf16.mxu0 0
    %1518 = vmatpush1.bf16.msra.mxu0 %v1436
    %1519 = vmatprep.subr.bf16.mxu0 0
    %1520 = vmatpush1.bf16.msra.mxu0 %v1439
    %1521 = vmatprep.subr.bf16.mxu0 0
    %1522 = vmatpush1.bf16.msra.mxu0 0
    %1523 = vmatprep.subr.bf16.mxu0 0
    %1524 = vmatpush1.bf16.msra.mxu0 0
    %1525 = vmatprep.subr.bf16.mxu0 0
    %1526 = vmatpush1.bf16.msra.mxu0 0
    %1527 = vmatprep.subr.bf16.mxu0 0
    %1528 = vmatpush1.bf16.msra.mxu0 0
    %1529 = vmatprep.subr.bf16.mxu0 0
    %1530 = vmatpush1.bf16.msra.mxu0 0
    %1531 = vmatprep.subr.bf16.mxu0 0
    %1532 = vmatpush1.bf16.msra.mxu0 0
    %1533 = vmatprep.subr.bf16.mxu0 0
    %1534 = vmatpush1.bf16.msra.mxu0 0
    %1535 = vmatprep.subr.bf16.mxu0 0
    %1536 = vmatpush1.bf16.msra.mxu0 0
    %1537 = vmatprep.mubr.bf16.mxu0 0
    %1538 = vmatmul.mubr.bf16.gmra.mrb[0].mxu0 %v1303
    %v1539 = vpop.f32.mrb[0].mxu0
    %v1540 = vadd.f32 0.0, %v1539
    %v1541 = vpop.f32.mrb[0].mxu0
    %v1542 = vpop.f32.mrb[0].mxu0
    %v1543 = vpop.f32.mrb[0].mxu0
    %1544 = vdwg.mxu0
    %v1545 = vpack.c.bf16 %v1281, %v1281
    %v1546 = vld [vmem:[#allocation9] sm:$0xff]
    %v1547 = vld [vmem:[#allocation9 + $0x8] sm:$0xf]
    %v1548 = vld [vmem:[#allocation9 + $0xc] sm:$0xff]
    %v1549 = vld [vmem:[#allocation9 + $0x14] sm:$0xf]
    %v1550 = vld [vmem:[#allocation9 + $0x18] sm:$0xff]
    %v1551 = vld [vmem:[#allocation9 + $0x20] sm:$0xf]
    %v1552 = vld [vmem:[#allocation9 + $0x24] sm:$0xff]
    %v1553 = vld [vmem:[#allocation9 + $0x2c] sm:$0xf]
    %v1554 = vld [vmem:[#allocation9 + $0x30] sm:$0xff]
    %v1555 = vld [vmem:[#allocation9 + $0x38] sm:$0xf]
    %v1556 = vld [vmem:[#allocation9 + $0x3c] sm:$0xff]
    %v1557 = vld [vmem:[#allocation9 + $0x44] sm:$0xf]
    %v1558 = vld [vmem:[#allocation9 + $0x48] sm:$0xff]
    %v1559 = vld [vmem:[#allocation9 + $0x50] sm:$0xf]
    %v1560 = vld [vmem:[#allocation9 + $0x54] sm:$0xff]
    %v1561 = vld [vmem:[#allocation9 + $0x5c] sm:$0xf]
    %v1562 = vld [vmem:[#allocation9 + $0x60] sm:$0xff]
    %v1563 = vld [vmem:[#allocation9 + $0x68] sm:$0xf]
    %v1564 = vld [vmem:[#allocation9 + $0x6c] sm:$0xff]
    %v1565 = vld [vmem:[#allocation9 + $0x74] sm:$0xf]
    %v1566 = vld [vmem:[#allocation9 + $0x78] sm:$0xff]
    %v1567 = vld [vmem:[#allocation9 + $0x80] sm:$0xf]
    %v1568 = vld [vmem:[#allocation9 + $0x84] sm:$0xff]
    %v1569 = vld [vmem:[#allocation9 + $0x8c] sm:$0xf]
    %v1570 = vld [vmem:[#allocation9 + $0x90] sm:$0xff]
    %v1571 = vld [vmem:[#allocation9 + $0x98] sm:$0xf]
    %v1572 = vld [vmem:[#allocation9 + $0x9c] sm:$0xff]
    %v1573 = vld [vmem:[#allocation9 + $0xa4] sm:$0xf]
    %v1574 = vld [vmem:[#allocation9 + $0xa8] sm:$0xff]
    %v1575 = vld [vmem:[#allocation9 + $0xb0] sm:$0xf]
    %v1576 = vld [vmem:[#allocation9 + $0xb4] sm:$0xff]
    %v1577 = vld [vmem:[#allocation9 + $0xbc] sm:$0xf]
    %v1610 = vunpack.c.l.b16 %v1546
    %v1611 = vunpack.c.h.b16 %v1546
    %v1612 = vunpack.c.l.b16 %v1547
    %v1613 = vunpack.c.l.b16 %v1548
    %v1614 = vunpack.c.h.b16 %v1548
    %v1615 = vunpack.c.l.b16 %v1549
    %v1616 = vunpack.c.l.b16 %v1550
    %v1617 = vunpack.c.h.b16 %v1550
    %v1618 = vunpack.c.l.b16 %v1551
    %v1619 = vunpack.c.l.b16 %v1552
    %v1620 = vunpack.c.h.b16 %v1552
    %v1621 = vunpack.c.l.b16 %v1553
    %v1622 = vunpack.c.l.b16 %v1554
    %v1623 = vunpack.c.h.b16 %v1554
    %v1624 = vunpack.c.l.b16 %v1555
    %v1625 = vunpack.c.l.b16 %v1556
    %v1626 = vunpack.c.h.b16 %v1556
    %v1627 = vunpack.c.l.b16 %v1557
    %v1628 = vunpack.c.l.b16 %v1558
    %v1629 = vunpack.c.h.b16 %v1558
    %v1630 = vunpack.c.l.b16 %v1559
    %v1631 = vunpack.c.l.b16 %v1560
    %v1632 = vunpack.c.h.b16 %v1560
    %v1633 = vunpack.c.l.b16 %v1561
    %v1634 = vunpack.c.l.b16 %v1562
    %v1635 = vunpack.c.h.b16 %v1562
    %v1636 = vunpack.c.l.b16 %v1563
    %v1637 = vunpack.c.l.b16 %v1564
    %v1638 = vunpack.c.h.b16 %v1564
    %v1639 = vunpack.c.l.b16 %v1565
    %v1640 = vunpack.c.l.b16 %v1566
    %v1641 = vunpack.c.h.b16 %v1566
    %v1642 = vunpack.c.l.b16 %v1567
    %v1643 = vunpack.c.l.b16 %v1568
    %v1644 = vunpack.c.h.b16 %v1568
    %v1645 = vunpack.c.l.b16 %v1569
    %v1646 = vunpack.c.l.b16 %v1570
    %v1647 = vunpack.c.h.b16 %v1570
    %v1648 = vunpack.c.l.b16 %v1571
    %v1649 = vunpack.c.l.b16 %v1572
    %v1650 = vunpack.c.h.b16 %v1572
    %v1651 = vunpack.c.l.b16 %v1573
    %v1652 = vunpack.c.l.b16 %v1574
    %v1653 = vunpack.c.h.b16 %v1574
    %v1654 = vunpack.c.l.b16 %v1575
    %v1655 = vunpack.c.l.b16 %v1576
    %v1656 = vunpack.c.h.b16 %v1576
    %v1657 = vunpack.c.l.b16 %v1577
    %v1658 = vpack.c.b16 %v1613, %v1610
    %v1659 = vpack.c.b16 %v1614, %v1611
    %v1660 = vpack.c.b16 %v1615, %v1612
    %v1661 = vpack.c.b16 %v1619, %v1616
    %v1662 = vpack.c.b16 %v1620, %v1617
    %v1663 = vpack.c.b16 %v1621, %v1618
    %v1664 = vpack.c.b16 %v1625, %v1622
    %v1665 = vpack.c.b16 %v1626, %v1623
    %v1666 = vpack.c.b16 %v1627, %v1624
    %v1667 = vpack.c.b16 %v1631, %v1628
    %v1668 = vpack.c.b16 %v1632, %v1629
    %v1669 = vpack.c.b16 %v1633, %v1630
    %v1670 = vpack.c.b16 %v1637, %v1634
    %v1671 = vpack.c.b16 %v1638, %v1635
    %v1672 = vpack.c.b16 %v1639, %v1636
    %v1673 = vpack.c.b16 %v1643, %v1640
    %v1674 = vpack.c.b16 %v1644, %v1641
    %v1675 = vpack.c.b16 %v1645, %v1642
    %v1676 = vpack.c.b16 %v1649, %v1646
    %v1677 = vpack.c.b16 %v1650, %v1647
    %v1678 = vpack.c.b16 %v1651, %v1648
    %v1679 = vpack.c.b16 %v1655, %v1652
    %v1680 = vpack.c.b16 %v1656, %v1653
    %v1681 = vpack.c.b16 %v1657, %v1654
    %1706 = vmatprep.subr.bf16.mxu0 %v1659
    %1707 = vmatpush1.bf16.msra.mxu0 %v1658
    %1708 = vmatprep.subr.bf16.mxu0 %v1662
    %1709 = vmatpush1.bf16.msra.mxu0 %v1661
    %1710 = vmatprep.subr.bf16.mxu0 %v1665
    %1711 = vmatpush1.bf16.msra.mxu0 %v1664
    %1712 = vmatprep.subr.bf16.mxu0 %v1668
    %1713 = vmatpush1.bf16.msra.mxu0 %v1667
    %1714 = vmatprep.subr.bf16.mxu0 %v1671
    %1715 = vmatpush1.bf16.msra.mxu0 %v1670
    %1716 = vmatprep.subr.bf16.mxu0 %v1674
    %1717 = vmatpush1.bf16.msra.mxu0 %v1673
    %1718 = vmatprep.subr.bf16.mxu0 %v1677
    %1719 = vmatpush1.bf16.msra.mxu0 %v1676
    %1720 = vmatprep.subr.bf16.mxu0 %v1680
    %1721 = vmatpush1.bf16.msra.mxu0 %v1679
    %1722 = vmatprep.subr.bf16.mxu0 0
    %1723 = vmatpush1.bf16.msra.mxu0 0
    %1724 = vmatprep.subr.bf16.mxu0 0
    %1725 = vmatpush1.bf16.msra.mxu0 0
    %1726 = vmatprep.subr.bf16.mxu0 0
    %1727 = vmatpush1.bf16.msra.mxu0 0
    %1728 = vmatprep.subr.bf16.mxu0 0
    %1729 = vmatpush1.bf16.msra.mxu0 0
    %1730 = vmatprep.subr.bf16.mxu0 0
    %1731 = vmatpush1.bf16.msra.mxu0 0
    %1732 = vmatprep.subr.bf16.mxu0 0
    %1733 = vmatpush1.bf16.msra.mxu0 0
    %1734 = vmatprep.subr.bf16.mxu0 0
    %1735 = vmatpush1.bf16.msra.mxu0 0
    %1736 = vmatprep.subr.bf16.mxu0 0
    %1737 = vmatpush1.bf16.msra.mxu0 0
    %1738 = vmatprep.mubr.bf16.mxu0 0
    %1739 = vmatmul.mubr.bf16.gmra.mrb[0].mxu0 %v1545
    %v1740 = vpop.f32.mrb[0].mxu0
    %v1741 = vadd.f32 0.0, %v1740
    %v1742 = vpop.f32.mrb[0].mxu0
    %v1743 = vadd.f32 0.0, %v1742
    %v1744 = vpop.f32.mrb[0].mxu0
    %v1745 = vpop.f32.mrb[0].mxu0
    %1746 = vdwg.mxu0
    %1747 = vmatprep.subr.bf16.mxu0 0
    %1748 = vmatpush1.bf16.msra.mxu0 %v1660
    %1749 = vmatprep.subr.bf16.mxu0 0
    %1750 = vmatpush1.bf16.msra.mxu0 %v1663
    %1751 = vmatprep.subr.bf16.mxu0 0
    %1752 = vmatpush1.bf16.msra.mxu0 %v1666
    %1753 = vmatprep.subr.bf16.mxu0 0
    %1754 = vmatpush1.bf16.msra.mxu0 %v1669
    %1755 = vmatprep.subr.bf16.mxu0 0
    %1756 = vmatpush1.bf16.msra.mxu0 %v1672
    %1757 = vmatprep.subr.bf16.mxu0 0
    %1758 = vmatpush1.bf16.msra.mxu0 %v1675
    %1759 = vmatprep.subr.bf16.mxu0 0
    %1760 = vmatpush1.bf16.msra.mxu0 %v1678
    %1761 = vmatprep.subr.bf16.mxu0 0
    %1762 = vmatpush1.bf16.msra.mxu0 %v1681
    %1763 = vmatprep.subr.bf16.mxu0 0
    %1764 = vmatpush1.bf16.msra.mxu0 0
    %1765 = vmatprep.subr.bf16.mxu0 0
    %1766 = vmatpush1.bf16.msra.mxu0 0
    %1767 = vmatprep.subr.bf16.mxu0 0
    %1768 = vmatpush1.bf16.msra.mxu0 0
    %1769 = vmatprep.subr.bf16.mxu0 0
    %1770 = vmatpush1.bf16.msra.mxu0 0
    %1771 = vmatprep.subr.bf16.mxu0 0
    %1772 = vmatpush1.bf16.msra.mxu0 0
    %1773 = vmatprep.subr.bf16.mxu0 0
    %1774 = vmatpush1.bf16.msra.mxu0 0
    %1775 = vmatprep.subr.bf16.mxu0 0
    %1776 = vmatpush1.bf16.msra.mxu0 0
    %1777 = vmatprep.subr.bf16.mxu0 0
    %1778 = vmatpush1.bf16.msra.mxu0 0
    %1779 = vmatprep.mubr.bf16.mxu0 0
    %1780 = vmatmul.mubr.bf16.gmra.mrb[0].mxu0 %v1545
    %v1781 = vpop.f32.mrb[0].mxu0
    %v1782 = vadd.f32 0.0, %v1781
    %v1783 = vpop.f32.mrb[0].mxu0
    %v1784 = vpop.f32.mrb[0].mxu0
    %v1785 = vpop.f32.mrb[0].mxu0
    %1786 = vdwg.mxu0
    %v1787 = vadd.f32 %v1290, %v1499
    %v1788 = vxor.u32 %v1787, 2147483648
    %v1789 = vmul.f32 %v1788, 1.442695
    %v1790 = vpow.pop %v1789
    %v1791 = vadd.f32 %v1790, 1.0
    %v1792 = vrcp.pop %v1791
    %v1793 = vmul.f32 1.0, %v1792
    %v1794 = vadd.f32 %v1291, %v1501
    %v1795 = vxor.u32 %v1794, 2147483648
    %v1796 = vmul.f32 %v1795, 1.442695
    %v1797 = vpow.pop %v1796
    %v1798 = vadd.f32 %v1797, 1.0
    %v1799 = vrcp.pop %v1798
    %v1800 = vmul.f32 1.0, %v1799
    %v1801 = vadd.f32 %v1540, %v1228
    %v1802 = vmul.f32 %v1793, %v1801
    %v1803 = vadd.f32 %v1292, %v1802
    %v1804 = vtanh.pop %v1803
    %v1805 = vsub.f32 1.0, %v1800
    %v1806 = vsub.f32 %v1804, %v1273
    %v1807 = vmul.f32 %v1805, %v1806
    %v1808 = vadd.f32 %v1273, %v1807
    %v1809 = vadd.f32 %v1294, %v1741
    %v1810 = vxor.u32 %v1809, 2147483648
    %v1811 = vmul.f32 %v1810, 1.442695
    %v1812 = vpow.pop %v1811
    %v1813 = vadd.f32 %v1812, 1.0
    %v1814 = vrcp.pop %v1813
    %v1815 = vmul.f32 1.0, %v1814
    %v1816 = vadd.f32 %v1295, %v1743
    %v1817 = vxor.u32 %v1816, 2147483648
    %v1818 = vmul.f32 %v1817, 1.442695
    %v1819 = vpow.pop %v1818
    %v1820 = vadd.f32 %v1819, 1.0
    %v1821 = vrcp.pop %v1820
    %v1822 = vmul.f32 1.0, %v1821
    %v1823 = vadd.f32 %v1782, %v1256
    %v1824 = vmul.f32 %v1815, %v1823
    %v1825 = vadd.f32 %v1296, %v1824
    %v1826 = vtanh.pop %v1825
    %v1827 = vsub.f32 1.0, %v1822
    %v1828 = vsub.f32 %v1826, %v1281
    %v1829 = vmul.f32 %v1827, %v1828
    %v1830 = vadd.f32 %v1281, %v1829
    %v1831 = vsub.f32 %v1808, %v1273
    %1833 = vset.pattern.permute.xlu0 0
    %1834 = vperm.xlu0 %1833, %v1299
    %v1835 = vpop.permute.xlu0 %1834
    %v1837 = vmul.f32 %v1835, %v1831
    %v1838 = vadd.f32 %v1273, %v1837
    %v1839 = vsub.f32 %v1830, %v1281
    %1841 = vset.pattern.permute.xlu0 0
    %1842 = vperm.xlu0 %1841, %v1302
    %v1843 = vpop.permute.xlu0 %1842
    %v1845 = vmul.f32 %v1843, %v1839
    %v1846 = vadd.f32 %v1281, %v1845
    %v1847 = vmul.f32 %v1835, %v1838
    %v1848 = vpack.c.bf16 %v1847, %v1847
    %s1849 = scalar_lea.vmem [#allocation11], 8
    %1850 = vst [vmem:[%s1849] sm:$0xf] %v1848
    %v1851 = vmul.f32 %v1843, %v1846
    %v1852 = vpack.c.bf16 %v1851, %v1851
    %s1853 = scalar_lea.vmem [#allocation11], 48
    %1854 = vst [vmem:[%s1853 + $0x4] sm:$0xf] %v1852
    %s1855 = scalar_lea.vmem [#allocation2], 96
    %v1856 = vld [vmem:[%s1855] sm:$0xff]
    %v1857 = vld [vmem:[%s1855 + $0x8] sm:$0xff]
    %v1858 = vld [vmem:[%s1855 + $0x10] sm:$0xff]
    %s1859 = scalar_lea.vmem [#allocation2], 240
    %v1860 = vld [vmem:[%s1859 + $0x18] sm:$0xff]
    %v1861 = vld [vmem:[%s1859 + $0x20] sm:$0xff]
    %v1862 = vld [vmem:[%s1859 + $0x28] sm:$0xff]
    %vm1863 = vcmp.gt.s32.totalorder %v708, 2
    %v1864 = vsel %vm1863, 1, 0
    %v1865 = vcvt.s32.f32 %v1864
    %vm1866 = vcmp.gt.s32.totalorder %v708, 5
    %v1867 = vsel %vm1866, 1, 0
    %v1868 = vcvt.s32.f32 %v1867
    %v1869 = vpack.c.bf16 %v1838, %v1838
    %v1870 = vld [vmem:[#allocation8] sm:$0xff]
    %v1871 = vld [vmem:[#allocation8 + $0x8] sm:$0xf]
    %v1872 = vld [vmem:[#allocation8 + $0xc] sm:$0xff]
    %v1873 = vld [vmem:[#allocation8 + $0x14] sm:$0xf]
    %v1874 = vld [vmem:[#allocation8 + $0x18] sm:$0xff]
    %v1875 = vld [vmem:[#allocation8 + $0x20] sm:$0xf]
    %v1876 = vld [vmem:[#allocation8 + $0x24] sm:$0xff]
    %v1877 = vld [vmem:[#allocation8 + $0x2c] sm:$0xf]
    %v1878 = vld [vmem:[#allocation8 + $0x30] sm:$0xff]
    %v1879 = vld [vmem:[#allocation8 + $0x38] sm:$0xf]
    %v1880 = vld [vmem:[#allocation8 + $0x3c] sm:$0xff]
    %v1881 = vld [vmem:[#allocation8 + $0x44] sm:$0xf]
    %v1882 = vld [vmem:[#allocation8 + $0x48] sm:$0xff]
    %v1883 = vld [vmem:[#allocation8 + $0x50] sm:$0xf]
    %v1884 = vld [vmem:[#allocation8 + $0x54] sm:$0xff]
    %v1885 = vld [vmem:[#allocation8 + $0x5c] sm:$0xf]
    %v1886 = vld [vmem:[#allocation8 + $0x60] sm:$0xff]
    %v1887 = vld [vmem:[#allocation8 + $0x68] sm:$0xf]
    %v1888 = vld [vmem:[#allocation8 + $0x6c] sm:$0xff]
    %v1889 = vld [vmem:[#allocation8 + $0x74] sm:$0xf]
    %v1890 = vld [vmem:[#allocation8 + $0x78] sm:$0xff]
    %v1891 = vld [vmem:[#allocation8 + $0x80] sm:$0xf]
    %v1892 = vld [vmem:[#allocation8 + $0x84] sm:$0xff]
    %v1893 = vld [vmem:[#allocation8 + $0x8c] sm:$0xf]
    %v1894 = vld [vmem:[#allocation8 + $0x90] sm:$0xff]
    %v1895 = vld [vmem:[#allocation8 + $0x98] sm:$0xf]
    %v1896 = vld [vmem:[#allocation8 + $0x9c] sm:$0xff]
    %v1897 = vld [vmem:[#allocation8 + $0xa4] sm:$0xf]
    %v1898 = vld [vmem:[#allocation8 + $0xa8] sm:$0xff]
    %v1899 = vld [vmem:[#allocation8 + $0xb0] sm:$0xf]
    %v1900 = vld [vmem:[#allocation8 + $0xb4] sm:$0xff]
    %v1901 = vld [vmem:[#allocation8 + $0xbc] sm:$0xf]
    %v1934 = vunpack.c.l.b16 %v1870
    %v1935 = vunpack.c.h.b16 %v1870
    %v1936 = vunpack.c.l.b16 %v1871
    %v1937 = vunpack.c.l.b16 %v1872
    %v1938 = vunpack.c.h.b16 %v1872
    %v1939 = vunpack.c.l.b16 %v1873
    %v1940 = vunpack.c.l.b16 %v1874
    %v1941 = vunpack.c.h.b16 %v1874
    %v1942 = vunpack.c.l.b16 %v1875
    %v1943 = vunpack.c.l.b16 %v1876
    %v1944 = vunpack.c.h.b16 %v1876
    %v1945 = vunpack.c.l.b16 %v1877
    %v1946 = vunpack.c.l.b16 %v1878
    %v1947 = vunpack.c.h.b16 %v1878
    %v1948 = vunpack.c.l.b16 %v1879
    %v1949 = vunpack.c.l.b16 %v1880
    %v1950 = vunpack.c.h.b16 %v1880
    %v1951 = vunpack.c.l.b16 %v1881
    %v1952 = vunpack.c.l.b16 %v1882
    %v1953 = vunpack.c.h.b16 %v1882
    %v1954 = vunpack.c.l.b16 %v1883
    %v1955 = vunpack.c.l.b16 %v1884
    %v1956 = vunpack.c.h.b16 %v1884
    %v1957 = vunpack.c.l.b16 %v1885
    %v1958 = vunpack.c.l.b16 %v1886
    %v1959 = vunpack.c.h.b16 %v1886
    %v1960 = vunpack.c.l.b16 %v1887
    %v1961 = vunpack.c.l.b16 %v1888
    %v1962 = vunpack.c.h.b16 %v1888
    %v1963 = vunpack.c.l.b16 %v1889
    %v1964 = vunpack.c.l.b16 %v1890
    %v1965 = vunpack.c.h.b16 %v1890
    %v1966 = vunpack.c.l.b16 %v1891
    %v1967 = vunpack.c.l.b16 %v1892
    %v1968 = vunpack.c.h.b16 %v1892
    %v1969 = vunpack.c.l.b16 %v1893
    %v1970 = vunpack.c.l.b16 %v1894
    %v1971 = vunpack.c.h.b16 %v1894
    %v1972 = vunpack.c.l.b16 %v1895
    %v1973 = vunpack.c.l.b16 %v1896
    %v1974 = vunpack.c.h.b16 %v1896
    %v1975 = vunpack.c.l.b16 %v1897
    %v1976 = vunpack.c.l.b16 %v1898
    %v1977 = vunpack.c.h.b16 %v1898
    %v1978 = vunpack.c.l.b16 %v1899
    %v1979 = vunpack.c.l.b16 %v1900
    %v1980 = vunpack.c.h.b16 %v1900
    %v1981 = vunpack.c.l.b16 %v1901
    %v1982 = vpack.c.b16 %v1937, %v1934
    %v1983 = vpack.c.b16 %v1938, %v1935
    %v1984 = vpack.c.b16 %v1939, %v1936
    %v1985 = vpack.c.b16 %v1943, %v1940
    %v1986 = vpack.c.b16 %v1944, %v1941
    %v1987 = vpack.c.b16 %v1945, %v1942
    %v1988 = vpack.c.b16 %v1949, %v1946
    %v1989 = vpack.c.b16 %v1950, %v1947
    %v1990 = vpack.c.b16 %v1951, %v1948
    %v1991 = vpack.c.b16 %v1955, %v1952
    %v1992 = vpack.c.b16 %v1956, %v1953
    %v1993 = vpack.c.b16 %v1957, %v1954
    %v1994 = vpack.c.b16 %v1961, %v1958
    %v1995 = vpack.c.b16 %v1962, %v1959
    %v1996 = vpack.c.b16 %v1963, %v1960
    %v1997 = vpack.c.b16 %v1967, %v1964
    %v1998 = vpack.c.b16 %v1968, %v1965
    %v1999 = vpack.c.b16 %v1969, %v1966
    %v2000 = vpack.c.b16 %v1973, %v1970
    %v2001 = vpack.c.b16 %v1974, %v1971
    %v2002 = vpack.c.b16 %v1975, %v1972
    %v2003 = vpack.c.b16 %v1979, %v1976
    %v2004 = vpack.c.b16 %v1980, %v1977
    %v2005 = vpack.c.b16 %v1981, %v1978
    %2030 = vmatprep.subr.bf16.mxu0 %v1983
    %2031 = vmatpush1.bf16.msra.mxu0 %v1982
    %2032 = vmatprep.subr.bf16.mxu0 %v1986
    %2033 = vmatpush1.bf16.msra.mxu0 %v1985
    %2034 = vmatprep.subr.bf16.mxu0 %v1989
    %2035 = vmatpush1.bf16.msra.mxu0 %v1988
    %2036 = vmatprep.subr.bf16.mxu0 %v1992
    %2037 = vmatpush1.bf16.msra.mxu0 %v1991
    %2038 = vmatprep.subr.bf16.mxu0 %v1995
    %2039 = vmatpush1.bf16.msra.mxu0 %v1994
    %2040 = vmatprep.subr.bf16.mxu0 %v1998
    %2041 = vmatpush1.bf16.msra.mxu0 %v1997
    %2042 = vmatprep.subr.bf16.mxu0 %v2001
    %2043 = vmatpush1.bf16.msra.mxu0 %v2000
    %2044 = vmatprep.subr.bf16.mxu0 %v2004
    %2045 = vmatpush1.bf16.msra.mxu0 %v2003
    %2046 = vmatprep.subr.bf16.mxu0 0
    %2047 = vmatpush1.bf16.msra.mxu0 0
    %2048 = vmatprep.subr.bf16.mxu0 0
    %2049 = vmatpush1.bf16.msra.mxu0 0
    %2050 = vmatprep.subr.bf16.mxu0 0
    %2051 = vmatpush1.bf16.msra.mxu0 0
    %2052 = vmatprep.subr.bf16.mxu0 0
    %2053 = vmatpush1.bf16.msra.mxu0 0
    %2054 = vmatprep.subr.bf16.mxu0 0
    %2055 = vmatpush1.bf16.msra.mxu0 0
    %2056 = vmatprep.subr.bf16.mxu0 0
    %2057 = vmatpush1.bf16.msra.mxu0 0
    %2058 = vmatprep.subr.bf16.mxu0 0
    %2059 = vmatpush1.bf16.msra.mxu0 0
    %2060 = vmatprep.subr.bf16.mxu0 0
    %2061 = vmatpush1.bf16.msra.mxu0 0
    %2062 = vmatprep.mubr.bf16.mxu0 0
    %2063 = vmatmul.mubr.bf16.gmra.mrb[0].mxu0 %v1869
    %v2064 = vpop.f32.mrb[0].mxu0
    %v2065 = vadd.f32 0.0, %v2064
    %v2066 = vpop.f32.mrb[0].mxu0
    %v2067 = vadd.f32 0.0, %v2066
    %v2068 = vpop.f32.mrb[0].mxu0
    %v2069 = vpop.f32.mrb[0].mxu0
    %2070 = vdwg.mxu0
    %2071 = vmatprep.subr.bf16.mxu0 0
    %2072 = vmatpush1.bf16.msra.mxu0 %v1984
    %2073 = vmatprep.subr.bf16.mxu0 0
    %2074 = vmatpush1.bf16.msra.mxu0 %v1987
    %2075 = vmatprep.subr.bf16.mxu0 0
    %2076 = vmatpush1.bf16.msra.mxu0 %v1990
    %2077 = vmatprep.subr.bf16.mxu0 0
    %2078 = vmatpush1.bf16.msra.mxu0 %v1993
    %2079 = vmatprep.subr.bf16.mxu0 0
    %2080 = vmatpush1.bf16.msra.mxu0 %v1996
    %2081 = vmatprep.subr.bf16.mxu0 0
    %2082 = vmatpush1.bf16.msra.mxu0 %v1999
    %2083 = vmatprep.subr.bf16.mxu0 0
    %2084 = vmatpush1.bf16.msra.mxu0 %v2002
    %2085 = vmatprep.subr.bf16.mxu0 0
    %2086 = vmatpush1.bf16.msra.mxu0 %v2005
    %2087 = vmatprep.subr.bf16.mxu0 0
    %2088 = vmatpush1.bf16.msra.mxu0 0
    %2089 = vmatprep.subr.bf16.mxu0 0
    %2090 = vmatpush1.bf16.msra.mxu0 0
    %2091 = vmatprep.subr.bf16.mxu0 0
    %2092 = vmatpush1.bf16.msra.mxu0 0
    %2093 = vmatprep.subr.bf16.mxu0 0
    %2094 = vmatpush1.bf16.msra.mxu0 0
    %2095 = vmatprep.subr.bf16.mxu0 0
    %2096 = vmatpush1.bf16.msra.mxu0 0
    %2097 = vmatprep.subr.bf16.mxu0 0
    %2098 = vmatpush1.bf16.msra.mxu0 0
    %2099 = vmatprep.subr.bf16.mxu0 0
    %2100 = vmatpush1.bf16.msra.mxu0 0
    %2101 = vmatprep.subr.bf16.mxu0 0
    %2102 = vmatpush1.bf16.msra.mxu0 0
    %2103 = vmatprep.mubr.bf16.mxu0 0
    %2104 = vmatmul.mubr.bf16.gmra.mrb[0].mxu0 %v1869
    %v2105 = vpop.f32.mrb[0].mxu0
    %v2106 = vadd.f32 0.0, %v2105
    %v2107 = vpop.f32.mrb[0].mxu0
    %v2108 = vpop.f32.mrb[0].mxu0
    %v2109 = vpop.f32.mrb[0].mxu0
    %2110 = vdwg.mxu0
    %v2111 = vpack.c.bf16 %v1846, %v1846
    %v2112 = vld [vmem:[#allocation9] sm:$0xff]
    %v2113 = vld [vmem:[#allocation9 + $0x8] sm:$0xf]
    %v2114 = vld [vmem:[#allocation9 + $0xc] sm:$0xff]
    %v2115 = vld [vmem:[#allocation9 + $0x14] sm:$0xf]
    %v2116 = vld [vmem:[#allocation9 + $0x18] sm:$0xff]
    %v2117 = vld [vmem:[#allocation9 + $0x20] sm:$0xf]
    %v2118 = vld [vmem:[#allocation9 + $0x24] sm:$0xff]
    %v2119 = vld [vmem:[#allocation9 + $0x2c] sm:$0xf]
    %v2120 = vld [vmem:[#allocation9 + $0x30] sm:$0xff]
    %v2121 = vld [vmem:[#allocation9 + $0x38] sm:$0xf]
    %v2122 = vld [vmem:[#allocation9 + $0x3c] sm:$0xff]
    %v2123 = vld [vmem:[#allocation9 + $0x44] sm:$0xf]
    %v2124 = vld [vmem:[#allocation9 + $0x48] sm:$0xff]
    %v2125 = vld [vmem:[#allocation9 + $0x50] sm:$0xf]
    %v2126 = vld [vmem:[#allocation9 + $0x54] sm:$0xff]
    %v2127 = vld [vmem:[#allocation9 + $0x5c] sm:$0xf]
    %v2128 = vld [vmem:[#allocation9 + $0x60] sm:$0xff]
    %v2129 = vld [vmem:[#allocation9 + $0x68] sm:$0xf]
    %v2130 = vld [vmem:[#allocation9 + $0x6c] sm:$0xff]
    %v2131 = vld [vmem:[#allocation9 + $0x74] sm:$0xf]
    %v2132 = vld [vmem:[#allocation9 + $0x78] sm:$0xff]
    %v2133 = vld [vmem:[#allocation9 + $0x80] sm:$0xf]
    %v2134 = vld [vmem:[#allocation9 + $0x84] sm:$0xff]
    %v2135 = vld [vmem:[#allocation9 + $0x8c] sm:$0xf]
    %v2136 = vld [vmem:[#allocation9 + $0x90] sm:$0xff]
    %v2137 = vld [vmem:[#allocation9 + $0x98] sm:$0xf]
    %v2138 = vld [vmem:[#allocation9 + $0x9c] sm:$0xff]
    %v2139 = vld [vmem:[#allocation9 + $0xa4] sm:$0xf]
    %v2140 = vld [vmem:[#allocation9 + $0xa8] sm:$0xff]
    %v2141 = vld [vmem:[#allocation9 + $0xb0] sm:$0xf]
    %v2142 = vld [vmem:[#allocation9 + $0xb4] sm:$0xff]
    %v2143 = vld [vmem:[#allocation9 + $0xbc] sm:$0xf]
    %v2176 = vunpack.c.l.b16 %v2112
    %v2177 = vunpack.c.h.b16 %v2112
    %v2178 = vunpack.c.l.b16 %v2113
    %v2179 = vunpack.c.l.b16 %v2114
    %v2180 = vunpack.c.h.b16 %v2114
    %v2181 = vunpack.c.l.b16 %v2115
    %v2182 = vunpack.c.l.b16 %v2116
    %v2183 = vunpack.c.h.b16 %v2116
    %v2184 = vunpack.c.l.b16 %v2117
    %v2185 = vunpack.c.l.b16 %v2118
    %v2186 = vunpack.c.h.b16 %v2118
    %v2187 = vunpack.c.l.b16 %v2119
    %v2188 = vunpack.c.l.b16 %v2120
    %v2189 = vunpack.c.h.b16 %v2120
    %v2190 = vunpack.c.l.b16 %v2121
    %v2191 = vunpack.c.l.b16 %v2122
    %v2192 = vunpack.c.h.b16 %v2122
    %v2193 = vunpack.c.l.b16 %v2123
    %v2194 = vunpack.c.l.b16 %v2124
    %v2195 = vunpack.c.h.b16 %v2124
    %v2196 = vunpack.c.l.b16 %v2125
    %v2197 = vunpack.c.l.b16 %v2126
    %v2198 = vunpack.c.h.b16 %v2126
    %v2199 = vunpack.c.l.b16 %v2127
    %v2200 = vunpack.c.l.b16 %v2128
    %v2201 = vunpack.c.h.b16 %v2128
    %v2202 = vunpack.c.l.b16 %v2129
    %v2203 = vunpack.c.l.b16 %v2130
    %v2204 = vunpack.c.h.b16 %v2130
    %v2205 = vunpack.c.l.b16 %v2131
    %v2206 = vunpack.c.l.b16 %v2132
    %v2207 = vunpack.c.h.b16 %v2132
    %v2208 = vunpack.c.l.b16 %v2133
    %v2209 = vunpack.c.l.b16 %v2134
    %v2210 = vunpack.c.h.b16 %v2134
    %v2211 = vunpack.c.l.b16 %v2135
    %v2212 = vunpack.c.l.b16 %v2136
    %v2213 = vunpack.c.h.b16 %v2136
    %v2214 = vunpack.c.l.b16 %v2137
    %v2215 = vunpack.c.l.b16 %v2138
    %v2216 = vunpack.c.h.b16 %v2138
    %v2217 = vunpack.c.l.b16 %v2139
    %v2218 = vunpack.c.l.b16 %v2140
    %v2219 = vunpack.c.h.b16 %v2140
    %v2220 = vunpack.c.l.b16 %v2141
    %v2221 = vunpack.c.l.b16 %v2142
    %v2222 = vunpack.c.h.b16 %v2142
    %v2223 = vunpack.c.l.b16 %v2143
    %v2224 = vpack.c.b16 %v2179, %v2176
    %v2225 = vpack.c.b16 %v2180, %v2177
    %v2226 = vpack.c.b16 %v2181, %v2178
    %v2227 = vpack.c.b16 %v2185, %v2182
    %v2228 = vpack.c.b16 %v2186, %v2183
    %v2229 = vpack.c.b16 %v2187, %v2184
    %v2230 = vpack.c.b16 %v2191, %v2188
    %v2231 = vpack.c.b16 %v2192, %v2189
    %v2232 = vpack.c.b16 %v2193, %v2190
    %v2233 = vpack.c.b16 %v2197, %v2194
    %v2234 = vpack.c.b16 %v2198, %v2195
    %v2235 = vpack.c.b16 %v2199, %v2196
    %v2236 = vpack.c.b16 %v2203, %v2200
    %v2237 = vpack.c.b16 %v2204, %v2201
    %v2238 = vpack.c.b16 %v2205, %v2202
    %v2239 = vpack.c.b16 %v2209, %v2206
    %v2240 = vpack.c.b16 %v2210, %v2207
    %v2241 = vpack.c.b16 %v2211, %v2208
    %v2242 = vpack.c.b16 %v2215, %v2212
    %v2243 = vpack.c.b16 %v2216, %v2213
    %v2244 = vpack.c.b16 %v2217, %v2214
    %v2245 = vpack.c.b16 %v2221, %v2218
    %v2246 = vpack.c.b16 %v2222, %v2219
    %v2247 = vpack.c.b16 %v2223, %v2220
    %2272 = vmatprep.subr.bf16.mxu0 %v2225
    %2273 = vmatpush1.bf16.msra.mxu0 %v2224
    %2274 = vmatprep.subr.bf16.mxu0 %v2228
    %2275 = vmatpush1.bf16.msra.mxu0 %v2227
    %2276 = vmatprep.subr.bf16.mxu0 %v2231
    %2277 = vmatpush1.bf16.msra.mxu0 %v2230
    %2278 = vmatprep.subr.bf16.mxu0 %v2234
    %2279 = vmatpush1.bf16.msra.mxu0 %v2233
    %2280 = vmatprep.subr.bf16.mxu0 %v2237
    %2281 = vmatpush1.bf16.msra.mxu0 %v2236
    %2282 = vmatprep.subr.bf16.mxu0 %v2240
    %2283 = vmatpush1.bf16.msra.mxu0 %v2239
    %2284 = vmatprep.subr.bf16.mxu0 %v2243
    %2285 = vmatpush1.bf16.msra.mxu0 %v2242
    %2286 = vmatprep.subr.bf16.mxu0 %v2246
    %2287 = vmatpush1.bf16.msra.mxu0 %v2245
    %2288 = vmatprep.subr.bf16.mxu0 0
    %2289 = vmatpush1.bf16.msra.mxu0 0
    %2290 = vmatprep.subr.bf16.mxu0 0
    %2291 = vmatpush1.bf16.msra.mxu0 0
    %2292 = vmatprep.subr.bf16.mxu0 0
    %2293 = vmatpush1.bf16.msra.mxu0 0
    %2294 = vmatprep.subr.bf16.mxu0 0
    %2295 = vmatpush1.bf16.msra.mxu0 0
    %2296 = vmatprep.subr.bf16.mxu0 0
    %2297 = vmatpush1.bf16.msra.mxu0 0
    %2298 = vmatprep.subr.bf16.mxu0 0
    %2299 = vmatpush1.bf16.msra.mxu0 0
    %2300 = vmatprep.subr.bf16.mxu0 0
    %2301 = vmatpush1.bf16.msra.mxu0 0
    %2302 = vmatprep.subr.bf16.mxu0 0
    %2303 = vmatpush1.bf16.msra.mxu0 0
    %2304 = vmatprep.mubr.bf16.mxu0 0
    %2305 = vmatmul.mubr.bf16.gmra.mrb[0].mxu0 %v2111
    %v2306 = vpop.f32.mrb[0].mxu0
    %v2307 = vadd.f32 0.0, %v2306
    %v2308 = vpop.f32.mrb[0].mxu0
    %v2309 = vadd.f32 0.0, %v2308
    %v2310 = vpop.f32.mrb[0].mxu0
    %v2311 = vpop.f32.mrb[0].mxu0
    %2312 = vdwg.mxu0
    %2313 = vmatprep.subr.bf16.mxu0 0
    %2314 = vmatpush1.bf16.msra.mxu0 %v2226
    %2315 = vmatprep.subr.bf16.mxu0 0
    %2316 = vmatpush1.bf16.msra.mxu0 %v2229
    %2317 = vmatprep.subr.bf16.mxu0 0
    %2318 = vmatpush1.bf16.msra.mxu0 %v2232
    %2319 = vmatprep.subr.bf16.mxu0 0
    %2320 = vmatpush1.bf16.msra.mxu0 %v2235
    %2321 = vmatprep.subr.bf16.mxu0 0
    %2322 = vmatpush1.bf16.msra.mxu0 %v2238
    %2323 = vmatprep.subr.bf16.mxu0 0
    %2324 = vmatpush1.bf16.msra.mxu0 %v2241
    %2325 = vmatprep.subr.bf16.mxu0 0
    %2326 = vmatpush1.bf16.msra.mxu0 %v2244
    %2327 = vmatprep.subr.bf16.mxu0 0
    %2328 = vmatpush1.bf16.msra.mxu0 %v2247
    %2329 = vmatprep.subr.bf16.mxu0 0
    %2330 = vmatpush1.bf16.msra.mxu0 0
    %2331 = vmatprep.subr.bf16.mxu0 0
    %2332 = vmatpush1.bf16.msra.mxu0 0
    %2333 = vmatprep.subr.bf16.mxu0 0
    %2334 = vmatpush1.bf16.msra.mxu0 0
    %2335 = vmatprep.subr.bf16.mxu0 0
    %2336 = vmatpush1.bf16.msra.mxu0 0
    %2337 = vmatprep.subr.bf16.mxu0 0
    %2338 = vmatpush1.bf16.msra.mxu0 0
    %2339 = vmatprep.subr.bf16.mxu0 0
    %2340 = vmatpush1.bf16.msra.mxu0 0
    %2341 = vmatprep.subr.bf16.mxu0 0
    %2342 = vmatpush1.bf16.msra.mxu0 0
    %2343 = vmatprep.subr.bf16.mxu0 0
    %2344 = vmatpush1.bf16.msra.mxu0 0
    %2345 = vmatprep.mubr.bf16.mxu0 0
    %2346 = vmatmul.mubr.bf16.gmra.mrb[0].mxu0 %v2111
    %v2347 = vpop.f32.mrb[0].mxu0
    %v2348 = vadd.f32 0.0, %v2347
    %v2349 = vpop.f32.mrb[0].mxu0
    %v2350 = vpop.f32.mrb[0].mxu0
    %v2351 = vpop.f32.mrb[0].mxu0
    %2352 = vdwg.mxu0
    %v2353 = vadd.f32 %v1856, %v2065
    %v2354 = vxor.u32 %v2353, 2147483648
    %v2355 = vmul.f32 %v2354, 1.442695
    %v2356 = vpow.pop %v2355
    %v2357 = vadd.f32 %v2356, 1.0
    %v2358 = vrcp.pop %v2357
    %v2359 = vmul.f32 1.0, %v2358
    %v2360 = vadd.f32 %v1857, %v2067
    %v2361 = vxor.u32 %v2360, 2147483648
    %v2362 = vmul.f32 %v2361, 1.442695
    %v2363 = vpow.pop %v2362
    %v2364 = vadd.f32 %v2363, 1.0
    %v2365 = vrcp.pop %v2364
    %v2366 = vmul.f32 1.0, %v2365
    %v2367 = vadd.f32 %v2106, %v1228
    %v2368 = vmul.f32 %v2359, %v2367
    %v2369 = vadd.f32 %v1858, %v2368
    %v2370 = vtanh.pop %v2369
    %v2371 = vsub.f32 1.0, %v2366
    %v2372 = vsub.f32 %v2370, %v1838
    %v2373 = vmul.f32 %v2371, %v2372
    %v2374 = vadd.f32 %v1838, %v2373
    %v2375 = vadd.f32 %v1860, %v2307
    %v2376 = vxor.u32 %v2375, 2147483648
    %v2377 = vmul.f32 %v2376, 1.442695
    %v2378 = vpow.pop %v2377
    %v2379 = vadd.f32 %v2378, 1.0
    %v2380 = vrcp.pop %v2379
    %v2381 = vmul.f32 1.0, %v2380
    %v2382 = vadd.f32 %v1861, %v2309
    %v2383 = vxor.u32 %v2382, 2147483648
    %v2384 = vmul.f32 %v2383, 1.442695
    %v2385 = vpow.pop %v2384
    %v2386 = vadd.f32 %v2385, 1.0
    %v2387 = vrcp.pop %v2386
    %v2388 = vmul.f32 1.0, %v2387
    %v2389 = vadd.f32 %v2348, %v1256
    %v2390 = vmul.f32 %v2381, %v2389
    %v2391 = vadd.f32 %v1862, %v2390
    %v2392 = vtanh.pop %v2391
    %v2393 = vsub.f32 1.0, %v2388
    %v2394 = vsub.f32 %v2392, %v1846
    %v2395 = vmul.f32 %v2393, %v2394
    %v2396 = vadd.f32 %v1846, %v2395
    %v2397 = vsub.f32 %v2374, %v1838
    %2399 = vset.pattern.permute.xlu0 0
    %2400 = vperm.xlu0 %2399, %v1865
    %v2401 = vpop.permute.xlu0 %2400
    %v2403 = vmul.f32 %v2401, %v2397
    %v2404 = vadd.f32 %v1838, %v2403
    %v2405 = vsub.f32 %v2396, %v1846
    %2407 = vset.pattern.permute.xlu0 0
    %2408 = vperm.xlu0 %2407, %v1868
    %v2409 = vpop.permute.xlu0 %2408
    %v2411 = vmul.f32 %v2409, %v2405
    %v2412 = vadd.f32 %v1846, %v2411
    %v2413 = vmul.f32 %v2401, %v2404
    %v2414 = vpack.c.bf16 %v2413, %v2413
    %s2415 = scalar_lea.vmem [#allocation11], 16
    %2416 = vst [vmem:[%s2415] sm:$0xf] %v2414
    %v2417 = vmul.f32 %v2409, %v2412
    %v2418 = vpack.c.bf16 %v2417, %v2417
    %s2419 = scalar_lea.vmem [#allocation11], 40
    %2420 = vst [vmem:[%s2419 + $0x4] sm:$0xf] %v2418
    %s2421 = scalar_lea.vmem [#allocation2], 144
    %v2422 = vld [vmem:[%s2421] sm:$0xff]
    %v2423 = vld [vmem:[%s2421 + $0x8] sm:$0xff]
    %v2424 = vld [vmem:[%s2421 + $0x10] sm:$0xff]
    %s2425 = scalar_lea.vmem [#allocation2], 192
    %v2426 = vld [vmem:[%s2425 + $0x18] sm:$0xff]
    %v2427 = vld [vmem:[%s2425 + $0x20] sm:$0xff]
    %v2428 = vld [vmem:[%s2425 + $0x28] sm:$0xff]
    %vm2429 = vcmp.gt.s32.totalorder %v708, 3
    %v2430 = vsel %vm2429, 1, 0
    %v2431 = vcvt.s32.f32 %v2430
    %vm2432 = vcmp.gt.s32.totalorder %v708, 4
    %v2433 = vsel %vm2432, 1, 0
    %v2434 = vcvt.s32.f32 %v2433
    %v2435 = vpack.c.bf16 %v2404, %v2404
    %v2436 = vld [vmem:[#allocation8] sm:$0xff]
    %v2437 = vld [vmem:[#allocation8 + $0x8] sm:$0xf]
    %v2438 = vld [vmem:[#allocation8 + $0xc] sm:$0xff]
    %v2439 = vld [vmem:[#allocation8 + $0x14] sm:$0xf]
    %v2440 = vld [vmem:[#allocation8 + $0x18] sm:$0xff]
    %v2441 = vld [vmem:[#allocation8 + $0x20] sm:$0xf]
    %v2442 = vld [vmem:[#allocation8 + $0x24] sm:$0xff]
    %v2443 = vld [vmem:[#allocation8 + $0x2c] sm:$0xf]
    %v2444 = vld [vmem:[#allocation8 + $0x30] sm:$0xff]
    %v2445 = vld [vmem:[#allocation8 + $0x38] sm:$0xf]
    %v2446 = vld [vmem:[#allocation8 + $0x3c] sm:$0xff]
    %v2447 = vld [vmem:[#allocation8 + $0x44] sm:$0xf]
    %v2448 = vld [vmem:[#allocation8 + $0x48] sm:$0xff]
    %v2449 = vld [vmem:[#allocation8 + $0x50] sm:$0xf]
    %v2450 = vld [vmem:[#allocation8 + $0x54] sm:$0xff]
    %v2451 = vld [vmem:[#allocation8 + $0x5c] sm:$0xf]
    %v2452 = vld [vmem:[#allocation8 + $0x60] sm:$0xff]
    %v2453 = vld [vmem:[#allocation8 + $0x68] sm:$0xf]
    %v2454 = vld [vmem:[#allocation8 + $0x6c] sm:$0xff]
    %v2455 = vld [vmem:[#allocation8 + $0x74] sm:$0xf]
    %v2456 = vld [vmem:[#allocation8 + $0x78] sm:$0xff]
    %v2457 = vld [vmem:[#allocation8 + $0x80] sm:$0xf]
    %v2458 = vld [vmem:[#allocation8 + $0x84] sm:$0xff]
    %v2459 = vld [vmem:[#allocation8 + $0x8c] sm:$0xf]
    %v2460 = vld [vmem:[#allocation8 + $0x90] sm:$0xff]
    %v2461 = vld [vmem:[#allocation8 + $0x98] sm:$0xf]
    %v2462 = vld [vmem:[#allocation8 + $0x9c] sm:$0xff]
    %v2463 = vld [vmem:[#allocation8 + $0xa4] sm:$0xf]
    %v2464 = vld [vmem:[#allocation8 + $0xa8] sm:$0xff]
    %v2465 = vld [vmem:[#allocation8 + $0xb0] sm:$0xf]
    %v2466 = vld [vmem:[#allocation8 + $0xb4] sm:$0xff]
    %v2467 = vld [vmem:[#allocation8 + $0xbc] sm:$0xf]
    %v2500 = vunpack.c.l.b16 %v2436
    %v2501 = vunpack.c.h.b16 %v2436
    %v2502 = vunpack.c.l.b16 %v2437
    %v2503 = vunpack.c.l.b16 %v2438
    %v2504 = vunpack.c.h.b16 %v2438
    %v2505 = vunpack.c.l.b16 %v2439
    %v2506 = vunpack.c.l.b16 %v2440
    %v2507 = vunpack.c.h.b16 %v2440
    %v2508 = vunpack.c.l.b16 %v2441
    %v2509 = vunpack.c.l.b16 %v2442
    %v2510 = vunpack.c.h.b16 %v2442
    %v2511 = vunpack.c.l.b16 %v2443
    %v2512 = vunpack.c.l.b16 %v2444
    %v2513 = vunpack.c.h.b16 %v2444
    %v2514 = vunpack.c.l.b16 %v2445
    %v2515 = vunpack.c.l.b16 %v2446
    %v2516 = vunpack.c.h.b16 %v2446
    %v2517 = vunpack.c.l.b16 %v2447
    %v2518 = vunpack.c.l.b16 %v2448
    %v2519 = vunpack.c.h.b16 %v2448
    %v2520 = vunpack.c.l.b16 %v2449
    %v2521 = vunpack.c.l.b16 %v2450
    %v2522 = vunpack.c.h.b16 %v2450
    %v2523 = vunpack.c.l.b16 %v2451
    %v2524 = vunpack.c.l.b16 %v2452
    %v2525 = vunpack.c.h.b16 %v2452
    %v2526 = vunpack.c.l.b16 %v2453
    %v2527 = vunpack.c.l.b16 %v2454
    %v2528 = vunpack.c.h.b16 %v2454
    %v2529 = vunpack.c.l.b16 %v2455
    %v2530 = vunpack.c.l.b16 %v2456
    %v2531 = vunpack.c.h.b16 %v2456
    %v2532 = vunpack.c.l.b16 %v2457
    %v2533 = vunpack.c.l.b16 %v2458
    %v2534 = vunpack.c.h.b16 %v2458
    %v2535 = vunpack.c.l.b16 %v2459
    %v2536 = vunpack.c.l.b16 %v2460
    %v2537 = vunpack.c.h.b16 %v2460
    %v2538 = vunpack.c.l.b16 %v2461
    %v2539 = vunpack.c.l.b16 %v2462
    %v2540 = vunpack.c.h.b16 %v2462
    %v2541 = vunpack.c.l.b16 %v2463
    %v2542 = vunpack.c.l.b16 %v2464
    %v2543 = vunpack.c.h.b16 %v2464
    %v2544 = vunpack.c.l.b16 %v2465
    %v2545 = vunpack.c.l.b16 %v2466
    %v2546 = vunpack.c.h.b16 %v2466
    %v2547 = vunpack.c.l.b16 %v2467
    %v2548 = vpack.c.b16 %v2503, %v2500
    %v2549 = vpack.c.b16 %v2504, %v2501
    %v2550 = vpack.c.b16 %v2505, %v2502
    %v2551 = vpack.c.b16 %v2509, %v2506
    %v2552 = vpack.c.b16 %v2510, %v2507
    %v2553 = vpack.c.b16 %v2511, %v2508
    %v2554 = vpack.c.b16 %v2515, %v2512
    %v2555 = vpack.c.b16 %v2516, %v2513
    %v2556 = vpack.c.b16 %v2517, %v2514
    %v2557 = vpack.c.b16 %v2521, %v2518
    %v2558 = vpack.c.b16 %v2522, %v2519
    %v2559 = vpack.c.b16 %v2523, %v2520
    %v2560 = vpack.c.b16 %v2527, %v2524
    %v2561 = vpack.c.b16 %v2528, %v2525
    %v2562 = vpack.c.b16 %v2529, %v2526
    %v2563 = vpack.c.b16 %v2533, %v2530
    %v2564 = vpack.c.b16 %v2534, %v2531
    %v2565 = vpack.c.b16 %v2535, %v2532
    %v2566 = vpack.c.b16 %v2539, %v2536
    %v2567 = vpack.c.b16 %v2540, %v2537
    %v2568 = vpack.c.b16 %v2541, %v2538
    %v2569 = vpack.c.b16 %v2545, %v2542
    %v2570 = vpack.c.b16 %v2546, %v2543
    %v2571 = vpack.c.b16 %v2547, %v2544
    %2596 = vmatprep.subr.bf16.mxu0 %v2549
    %2597 = vmatpush1.bf16.msra.mxu0 %v2548
    %2598 = vmatprep.subr.bf16.mxu0 %v2552
    %2599 = vmatpush1.bf16.msra.mxu0 %v2551
    %2600 = vmatprep.subr.bf16.mxu0 %v2555
    %2601 = vmatpush1.bf16.msra.mxu0 %v2554
    %2602 = vmatprep.subr.bf16.mxu0 %v2558
    %2603 = vmatpush1.bf16.msra.mxu0 %v2557
    %2604 = vmatprep.subr.bf16.mxu0 %v2561
    %2605 = vmatpush1.bf16.msra.mxu0 %v2560
    %2606 = vmatprep.subr.bf16.mxu0 %v2564
    %2607 = vmatpush1.bf16.msra.mxu0 %v2563
    %2608 = vmatprep.subr.bf16.mxu0 %v2567
    %2609 = vmatpush1.bf16.msra.mxu0 %v2566
    %2610 = vmatprep.subr.bf16.mxu0 %v2570
    %2611 = vmatpush1.bf16.msra.mxu0 %v2569
    %2612 = vmatprep.subr.bf16.mxu0 0
    %2613 = vmatpush1.bf16.msra.mxu0 0
    %2614 = vmatprep.subr.bf16.mxu0 0
    %2615 = vmatpush1.bf16.msra.mxu0 0
    %2616 = vmatprep.subr.bf16.mxu0 0
    %2617 = vmatpush1.bf16.msra.mxu0 0
    %2618 = vmatprep.subr.bf16.mxu0 0
    %2619 = vmatpush1.bf16.msra.mxu0 0
    %2620 = vmatprep.subr.bf16.mxu0 0
    %2621 = vmatpush1.bf16.msra.mxu0 0
    %2622 = vmatprep.subr.bf16.mxu0 0
    %2623 = vmatpush1.bf16.msra.mxu0 0
    %2624 = vmatprep.subr.bf16.mxu0 0
    %2625 = vmatpush1.bf16.msra.mxu0 0
    %2626 = vmatprep.subr.bf16.mxu0 0
    %2627 = vmatpush1.bf16.msra.mxu0 0
    %2628 = vmatprep.mubr.bf16.mxu0 0
    %2629 = vmatmul.mubr.bf16.gmra.mrb[0].mxu0 %v2435
    %v2630 = vpop.f32.mrb[0].mxu0
    %v2631 = vadd.f32 0.0, %v2630
    %v2632 = vpop.f32.mrb[0].mxu0
    %v2633 = vadd.f32 0.0, %v2632
    %v2634 = vpop.f32.mrb[0].mxu0
    %v2635 = vpop.f32.mrb[0].mxu0
    %2636 = vdwg.mxu0
    %2637 = vmatprep.subr.bf16.mxu0 0
    %2638 = vmatpush1.bf16.msra.mxu0 %v2550
    %2639 = vmatprep.subr.bf16.mxu0 0
    %2640 = vmatpush1.bf16.msra.mxu0 %v2553
    %2641 = vmatprep.subr.bf16.mxu0 0
    %2642 = vmatpush1.bf16.msra.mxu0 %v2556
    %2643 = vmatprep.subr.bf16.mxu0 0
    %2644 = vmatpush1.bf16.msra.mxu0 %v2559
    %2645 = vmatprep.subr.bf16.mxu0 0
    %2646 = vmatpush1.bf16.msra.mxu0 %v2562
    %2647 = vmatprep.subr.bf16.mxu0 0
    %2648 = vmatpush1.bf16.msra.mxu0 %v2565
    %2649 = vmatprep.subr.bf16.mxu0 0
    %2650 = vmatpush1.bf16.msra.mxu0 %v2568
    %2651 = vmatprep.subr.bf16.mxu0 0
    %2652 = vmatpush1.bf16.msra.mxu0 %v2571
    %2653 = vmatprep.subr.bf16.mxu0 0
    %2654 = vmatpush1.bf16.msra.mxu0 0
    %2655 = vmatprep.subr.bf16.mxu0 0
    %2656 = vmatpush1.bf16.msra.mxu0 0
    %2657 = vmatprep.subr.bf16.mxu0 0
    %2658 = vmatpush1.bf16.msra.mxu0 0
    %2659 = vmatprep.subr.bf16.mxu0 0
    %2660 = vmatpush1.bf16.msra.mxu0 0
    %2661 = vmatprep.subr.bf16.mxu0 0
    %2662 = vmatpush1.bf16.msra.mxu0 0
    %2663 = vmatprep.subr.bf16.mxu0 0
    %2664 = vmatpush1.bf16.msra.mxu0 0
    %2665 = vmatprep.subr.bf16.mxu0 0
    %2666 = vmatpush1.bf16.msra.mxu0 0
    %2667 = vmatprep.subr.bf16.mxu0 0
    %2668 = vmatpush1.bf16.msra.mxu0 0
    %2669 = vmatprep.mubr.bf16.mxu0 0
    %2670 = vmatmul.mubr.bf16.gmra.mrb[0].mxu0 %v2435
    %v2671 = vpop.f32.mrb[0].mxu0
    %v2672 = vadd.f32 0.0, %v2671
    %v2673 = vpop.f32.mrb[0].mxu0
    %v2674 = vpop.f32.mrb[0].mxu0
    %v2675 = vpop.f32.mrb[0].mxu0
    %2676 = vdwg.mxu0
    %v2677 = vpack.c.bf16 %v2412, %v2412
    %v2678 = vld [vmem:[#allocation9] sm:$0xff]
    %v2679 = vld [vmem:[#allocation9 + $0x8] sm:$0xf]
    %v2680 = vld [vmem:[#allocation9 + $0xc] sm:$0xff]
    %v2681 = vld [vmem:[#allocation9 + $0x14] sm:$0xf]
    %v2682 = vld [vmem:[#allocation9 + $0x18] sm:$0xff]
    %v2683 = vld [vmem:[#allocation9 + $0x20] sm:$0xf]
    %v2684 = vld [vmem:[#allocation9 + $0x24] sm:$0xff]
    %v2685 = vld [vmem:[#allocation9 + $0x2c] sm:$0xf]
    %v2686 = vld [vmem:[#allocation9 + $0x30] sm:$0xff]
    %v2687 = vld [vmem:[#allocation9 + $0x38] sm:$0xf]
    %v2688 = vld [vmem:[#allocation9 + $0x3c] sm:$0xff]
    %v2689 = vld [vmem:[#allocation9 + $0x44] sm:$0xf]
    %v2690 = vld [vmem:[#allocation9 + $0x48] sm:$0xff]
    %v2691 = vld [vmem:[#allocation9 + $0x50] sm:$0xf]
    %v2692 = vld [vmem:[#allocation9 + $0x54] sm:$0xff]
    %v2693 = vld [vmem:[#allocation9 + $0x5c] sm:$0xf]
    %v2694 = vld [vmem:[#allocation9 + $0x60] sm:$0xff]
    %v2695 = vld [vmem:[#allocation9 + $0x68] sm:$0xf]
    %v2696 = vld [vmem:[#allocation9 + $0x6c] sm:$0xff]
    %v2697 = vld [vmem:[#allocation9 + $0x74] sm:$0xf]
    %v2698 = vld [vmem:[#allocation9 + $0x78] sm:$0xff]
    %v2699 = vld [vmem:[#allocation9 + $0x80] sm:$0xf]
    %v2700 = vld [vmem:[#allocation9 + $0x84] sm:$0xff]
    %v2701 = vld [vmem:[#allocation9 + $0x8c] sm:$0xf]
    %v2702 = vld [vmem:[#allocation9 + $0x90] sm:$0xff]
    %v2703 = vld [vmem:[#allocation9 + $0x98] sm:$0xf]
    %v2704 = vld [vmem:[#allocation9 + $0x9c] sm:$0xff]
    %v2705 = vld [vmem:[#allocation9 + $0xa4] sm:$0xf]
    %v2706 = vld [vmem:[#allocation9 + $0xa8] sm:$0xff]
    %v2707 = vld [vmem:[#allocation9 + $0xb0] sm:$0xf]
    %v2708 = vld [vmem:[#allocation9 + $0xb4] sm:$0xff]
    %v2709 = vld [vmem:[#allocation9 + $0xbc] sm:$0xf]
    %v2742 = vunpack.c.l.b16 %v2678
    %v2743 = vunpack.c.h.b16 %v2678
    %v2744 = vunpack.c.l.b16 %v2679
    %v2745 = vunpack.c.l.b16 %v2680
    %v2746 = vunpack.c.h.b16 %v2680
    %v2747 = vunpack.c.l.b16 %v2681
    %v2748 = vunpack.c.l.b16 %v2682
    %v2749 = vunpack.c.h.b16 %v2682
    %v2750 = vunpack.c.l.b16 %v2683
    %v2751 = vunpack.c.l.b16 %v2684
    %v2752 = vunpack.c.h.b16 %v2684
    %v2753 = vunpack.c.l.b16 %v2685
    %v2754 = vunpack.c.l.b16 %v2686
    %v2755 = vunpack.c.h.b16 %v2686
    %v2756 = vunpack.c.l.b16 %v2687
    %v2757 = vunpack.c.l.b16 %v2688
    %v2758 = vunpack.c.h.b16 %v2688
    %v2759 = vunpack.c.l.b16 %v2689
    %v2760 = vunpack.c.l.b16 %v2690
    %v2761 = vunpack.c.h.b16 %v2690
    %v2762 = vunpack.c.l.b16 %v2691
    %v2763 = vunpack.c.l.b16 %v2692
    %v2764 = vunpack.c.h.b16 %v2692
    %v2765 = vunpack.c.l.b16 %v2693
    %v2766 = vunpack.c.l.b16 %v2694
    %v2767 = vunpack.c.h.b16 %v2694
    %v2768 = vunpack.c.l.b16 %v2695
    %v2769 = vunpack.c.l.b16 %v2696
    %v2770 = vunpack.c.h.b16 %v2696
    %v2771 = vunpack.c.l.b16 %v2697
    %v2772 = vunpack.c.l.b16 %v2698
    %v2773 = vunpack.c.h.b16 %v2698
    %v2774 = vunpack.c.l.b16 %v2699
    %v2775 = vunpack.c.l.b16 %v2700
    %v2776 = vunpack.c.h.b16 %v2700
    %v2777 = vunpack.c.l.b16 %v2701
    %v2778 = vunpack.c.l.b16 %v2702
    %v2779 = vunpack.c.h.b16 %v2702
    %v2780 = vunpack.c.l.b16 %v2703
    %v2781 = vunpack.c.l.b16 %v2704
    %v2782 = vunpack.c.h.b16 %v2704
    %v2783 = vunpack.c.l.b16 %v2705
    %v2784 = vunpack.c.l.b16 %v2706
    %v2785 = vunpack.c.h.b16 %v2706
    %v2786 = vunpack.c.l.b16 %v2707
    %v2787 = vunpack.c.l.b16 %v2708
    %v2788 = vunpack.c.h.b16 %v2708
    %v2789 = vunpack.c.l.b16 %v2709
    %v2790 = vpack.c.b16 %v2745, %v2742
    %v2791 = vpack.c.b16 %v2746, %v2743
    %v2792 = vpack.c.b16 %v2747, %v2744
    %v2793 = vpack.c.b16 %v2751, %v2748
    %v2794 = vpack.c.b16 %v2752, %v2749
    %v2795 = vpack.c.b16 %v2753, %v2750
    %v2796 = vpack.c.b16 %v2757, %v2754
    %v2797 = vpack.c.b16 %v2758, %v2755
    %v2798 = vpack.c.b16 %v2759, %v2756
    %v2799 = vpack.c.b16 %v2763, %v2760
    %v2800 = vpack.c.b16 %v2764, %v2761
    %v2801 = vpack.c.b16 %v2765, %v2762
    %v2802 = vpack.c.b16 %v2769, %v2766
    %v2803 = vpack.c.b16 %v2770, %v2767
    %v2804 = vpack.c.b16 %v2771, %v2768
    %v2805 = vpack.c.b16 %v2775, %v2772
    %v2806 = vpack.c.b16 %v2776, %v2773
    %v2807 = vpack.c.b16 %v2777, %v2774
    %v2808 = vpack.c.b16 %v2781, %v2778
    %v2809 = vpack.c.b16 %v2782, %v2779
    %v2810 = vpack.c.b16 %v2783, %v2780
    %v2811 = vpack.c.b16 %v2787, %v2784
    %v2812 = vpack.c.b16 %v2788, %v2785
    %v2813 = vpack.c.b16 %v2789, %v2786
    %2838 = vmatprep.subr.bf16.mxu0 %v2791
    %2839 = vmatpush1.bf16.msra.mxu0 %v2790
    %2840 = vmatprep.subr.bf16.mxu0 %v2794
    %2841 = vmatpush1.bf16.msra.mxu0 %v2793
    %2842 = vmatprep.subr.bf16.mxu0 %v2797
    %2843 = vmatpush1.bf16.msra.mxu0 %v2796
    %2844 = vmatprep.subr.bf16.mxu0 %v2800
    %2845 = vmatpush1.bf16.msra.mxu0 %v2799
    %2846 = vmatprep.subr.bf16.mxu0 %v2803
    %2847 = vmatpush1.bf16.msra.mxu0 %v2802
    %2848 = vmatprep.subr.bf16.mxu0 %v2806
    %2849 = vmatpush1.bf16.msra.mxu0 %v2805
    %2850 = vmatprep.subr.bf16.mxu0 %v2809
    %2851 = vmatpush1.bf16.msra.mxu0 %v2808
    %2852 = vmatprep.subr.bf16.mxu0 %v2812
    %2853 = vmatpush1.bf16.msra.mxu0 %v2811
    %2854 = vmatprep.subr.bf16.mxu0 0
    %2855 = vmatpush1.bf16.msra.mxu0 0
    %2856 = vmatprep.subr.bf16.mxu0 0
    %2857 = vmatpush1.bf16.msra.mxu0 0
    %2858 = vmatprep.subr.bf16.mxu0 0
    %2859 = vmatpush1.bf16.msra.mxu0 0
    %2860 = vmatprep.subr.bf16.mxu0 0
    %2861 = vmatpush1.bf16.msra.mxu0 0
    %2862 = vmatprep.subr.bf16.mxu0 0
    %2863 = vmatpush1.bf16.msra.mxu0 0
    %2864 = vmatprep.subr.bf16.mxu0 0
    %2865 = vmatpush1.bf16.msra.mxu0 0
    %2866 = vmatprep.subr.bf16.mxu0 0
    %2867 = vmatpush1.bf16.msra.mxu0 0
    %2868 = vmatprep.subr.bf16.mxu0 0
    %2869 = vmatpush1.bf16.msra.mxu0 0
    %2870 = vmatprep.mubr.bf16.mxu0 0
    %2871 = vmatmul.mubr.bf16.gmra.mrb[0].mxu0 %v2677
    %v2872 = vpop.f32.mrb[0].mxu0
    %v2873 = vadd.f32 0.0, %v2872
    %v2874 = vpop.f32.mrb[0].mxu0
    %v2875 = vadd.f32 0.0, %v2874
    %v2876 = vpop.f32.mrb[0].mxu0
    %v2877 = vpop.f32.mrb[0].mxu0
    %2878 = vdwg.mxu0
    %2879 = vmatprep.subr.bf16.mxu0 0
    %2880 = vmatpush1.bf16.msra.mxu0 %v2792
    %2881 = vmatprep.subr.bf16.mxu0 0
    %2882 = vmatpush1.bf16.msra.mxu0 %v2795
    %2883 = vmatprep.subr.bf16.mxu0 0
    %2884 = vmatpush1.bf16.msra.mxu0 %v2798
    %2885 = vmatprep.subr.bf16.mxu0 0
    %2886 = vmatpush1.bf16.msra.mxu0 %v2801
    %2887 = vmatprep.subr.bf16.mxu0 0
    %2888 = vmatpush1.bf16.msra.mxu0 %v2804
    %2889 = vmatprep.subr.bf16.mxu0 0
    %2890 = vmatpush1.bf16.msra.mxu0 %v2807
    %2891 = vmatprep.subr.bf16.mxu0 0
    %2892 = vmatpush1.bf16.msra.mxu0 %v2810
    %2893 = vmatprep.subr.bf16.mxu0 0
    %2894 = vmatpush1.bf16.msra.mxu0 %v2813
    %2895 = vmatprep.subr.bf16.mxu0 0
    %2896 = vmatpush1.bf16.msra.mxu0 0
    %2897 = vmatprep.subr.bf16.mxu0 0
    %2898 = vmatpush1.bf16.msra.mxu0 0
    %2899 = vmatprep.subr.bf16.mxu0 0
    %2900 = vmatpush1.bf16.msra.mxu0 0
    %2901 = vmatprep.subr.bf16.mxu0 0
    %2902 = vmatpush1.bf16.msra.mxu0 0
    %2903 = vmatprep.subr.bf16.mxu0 0
    %2904 = vmatpush1.bf16.msra.mxu0 0
    %2905 = vmatprep.subr.bf16.mxu0 0
    %2906 = vmatpush1.bf16.msra.mxu0 0
    %2907 = vmatprep.subr.bf16.mxu0 0
    %2908 = vmatpush1.bf16.msra.mxu0 0
    %2909 = vmatprep.subr.bf16.mxu0 0
    %2910 = vmatpush1.bf16.msra.mxu0 0
    %2911 = vmatprep.mubr.bf16.mxu0 0
    %2912 = vmatmul.mubr.bf16.gmra.mrb[0].mxu0 %v2677
    %v2913 = vpop.f32.mrb[0].mxu0
    %v2914 = vadd.f32 0.0, %v2913
    %v2915 = vpop.f32.mrb[0].mxu0
    %v2916 = vpop.f32.mrb[0].mxu0
    %v2917 = vpop.f32.mrb[0].mxu0
    %2918 = vdwg.mxu0
    %v2919 = vadd.f32 %v2422, %v2631
    %v2920 = vxor.u32 %v2919, 2147483648
    %v2921 = vmul.f32 %v2920, 1.442695
    %v2922 = vpow.pop %v2921
    %v2923 = vadd.f32 %v2922, 1.0
    %v2924 = vrcp.pop %v2923
    %v2925 = vmul.f32 1.0, %v2924
    %v2926 = vadd.f32 %v2423, %v2633
    %v2927 = vxor.u32 %v2926, 2147483648
    %v2928 = vmul.f32 %v2927, 1.442695
    %v2929 = vpow.pop %v2928
    %v2930 = vadd.f32 %v2929, 1.0
    %v2931 = vrcp.pop %v2930
    %v2932 = vmul.f32 1.0, %v2931
    %v2933 = vadd.f32 %v2672, %v1228
    %v2934 = vmul.f32 %v2925, %v2933
    %v2935 = vadd.f32 %v2424, %v2934
    %v2936 = vtanh.pop %v2935
    %v2937 = vsub.f32 1.0, %v2932
    %v2938 = vsub.f32 %v2936, %v2404
    %v2939 = vmul.f32 %v2937, %v2938
    %v2940 = vadd.f32 %v2404, %v2939
    %v2941 = vadd.f32 %v2426, %v2873
    %v2942 = vxor.u32 %v2941, 2147483648
    %v2943 = vmul.f32 %v2942, 1.442695
    %v2944 = vpow.pop %v2943
    %v2945 = vadd.f32 %v2944, 1.0
    %v2946 = vrcp.pop %v2945
    %v2947 = vmul.f32 1.0, %v2946
    %v2948 = vadd.f32 %v2427, %v2875
    %v2949 = vxor.u32 %v2948, 2147483648
    %v2950 = vmul.f32 %v2949, 1.442695
    %v2951 = vpow.pop %v2950
    %v2952 = vadd.f32 %v2951, 1.0
    %v2953 = vrcp.pop %v2952
    %v2954 = vmul.f32 1.0, %v2953
    %v2955 = vadd.f32 %v2914, %v1256
    %v2956 = vmul.f32 %v2947, %v2955
    %v2957 = vadd.f32 %v2428, %v2956
    %v2958 = vtanh.pop %v2957
    %v2959 = vsub.f32 1.0, %v2954
    %v2960 = vsub.f32 %v2958, %v2412
    %v2961 = vmul.f32 %v2959, %v2960
    %v2962 = vadd.f32 %v2412, %v2961
    %v2963 = vsub.f32 %v2940, %v2404
    %2965 = vset.pattern.permute.xlu0 0
    %2966 = vperm.xlu0 %2965, %v2431
    %v2967 = vpop.permute.xlu0 %2966
    %v2969 = vmul.f32 %v2967, %v2963
    %v2970 = vadd.f32 %v2404, %v2969
    %v2971 = vsub.f32 %v2962, %v2412
    %2973 = vset.pattern.permute.xlu0 0
    %2974 = vperm.xlu0 %2973, %v2434
    %v2975 = vpop.permute.xlu0 %2974
    %v2977 = vmul.f32 %v2975, %v2971
    %v2978 = vadd.f32 %v2412, %v2977
    %v2979 = vmul.f32 %v2967, %v2970
    %v2980 = vpack.c.bf16 %v2979, %v2979
    %s2981 = scalar_lea.vmem [#allocation11], 24
    %2982 = vst [vmem:[%s2981] sm:$0xf] %v2980
    %v2983 = vmul.f32 %v2975, %v2978
    %v2984 = vpack.c.bf16 %v2983, %v2983
    %s2985 = scalar_lea.vmem [#allocation11], 32
    %2986 = vst [vmem:[%s2985 + $0x4] sm:$0xf] %v2984
    %v2987 = vld [vmem:[%s2425] sm:$0xff]
    %v2988 = vld [vmem:[%s2425 + $0x8] sm:$0xff]
    %v2989 = vld [vmem:[%s2425 + $0x10] sm:$0xff]
    %v2990 = vld [vmem:[%s2421 + $0x18] sm:$0xff]
    %v2991 = vld [vmem:[%s2421 + $0x20] sm:$0xff]
    %v2992 = vld [vmem:[%s2421 + $0x28] sm:$0xff]
    %v2993 = vpack.c.bf16 %v2970, %v2970
    %v2994 = vld [vmem:[#allocation8] sm:$0xff]
    %v2995 = vld [vmem:[#allocation8 + $0x8] sm:$0xf]
    %v2996 = vld [vmem:[#allocation8 + $0xc] sm:$0xff]
    %v2997 = vld [vmem:[#allocation8 + $0x14] sm:$0xf]
    %v2998 = vld [vmem:[#allocation8 + $0x18] sm:$0xff]
    %v2999 = vld [vmem:[#allocation8 + $0x20] sm:$0xf]
    %v3000 = vld [vmem:[#allocation8 + $0x24] sm:$0xff]
    %v3001 = vld [vmem:[#allocation8 + $0x2c] sm:$0xf]
    %v3002 = vld [vmem:[#allocation8 + $0x30] sm:$0xff]
    %v3003 = vld [vmem:[#allocation8 + $0x38] sm:$0xf]
    %v3004 = vld [vmem:[#allocation8 + $0x3c] sm:$0xff]
    %v3005 = vld [vmem:[#allocation8 + $0x44] sm:$0xf]
    %v3006 = vld [vmem:[#allocation8 + $0x48] sm:$0xff]
    %v3007 = vld [vmem:[#allocation8 + $0x50] sm:$0xf]
    %v3008 = vld [vmem:[#allocation8 + $0x54] sm:$0xff]
    %v3009 = vld [vmem:[#allocation8 + $0x5c] sm:$0xf]
    %v3010 = vld [vmem:[#allocation8 + $0x60] sm:$0xff]
    %v3011 = vld [vmem:[#allocation8 + $0x68] sm:$0xf]
    %v3012 = vld [vmem:[#allocation8 + $0x6c] sm:$0xff]
    %v3013 = vld [vmem:[#allocation8 + $0x74] sm:$0xf]
    %v3014 = vld [vmem:[#allocation8 + $0x78] sm:$0xff]
    %v3015 = vld [vmem:[#allocation8 + $0x80] sm:$0xf]
    %v3016 = vld [vmem:[#allocation8 + $0x84] sm:$0xff]
    %v3017 = vld [vmem:[#allocation8 + $0x8c] sm:$0xf]
    %v3018 = vld [vmem:[#allocation8 + $0x90] sm:$0xff]
    %v3019 = vld [vmem:[#allocation8 + $0x98] sm:$0xf]
    %v3020 = vld [vmem:[#allocation8 + $0x9c] sm:$0xff]
    %v3021 = vld [vmem:[#allocation8 + $0xa4] sm:$0xf]
    %v3022 = vld [vmem:[#allocation8 + $0xa8] sm:$0xff]
    %v3023 = vld [vmem:[#allocation8 + $0xb0] sm:$0xf]
    %v3024 = vld [vmem:[#allocation8 + $0xb4] sm:$0xff]
    %v3025 = vld [vmem:[#allocation8 + $0xbc] sm:$0xf]
    %v3058 = vunpack.c.l.b16 %v2994
    %v3059 = vunpack.c.h.b16 %v2994
    %v3060 = vunpack.c.l.b16 %v2995
    %v3061 = vunpack.c.l.b16 %v2996
    %v3062 = vunpack.c.h.b16 %v2996
    %v3063 = vunpack.c.l.b16 %v2997
    %v3064 = vunpack.c.l.b16 %v2998
    %v3065 = vunpack.c.h.b16 %v2998
    %v3066 = vunpack.c.l.b16 %v2999
    %v3067 = vunpack.c.l.b16 %v3000
    %v3068 = vunpack.c.h.b16 %v3000
    %v3069 = vunpack.c.l.b16 %v3001
    %v3070 = vunpack.c.l.b16 %v3002
    %v3071 = vunpack.c.h.b16 %v3002
    %v3072 = vunpack.c.l.b16 %v3003
    %v3073 = vunpack.c.l.b16 %v3004
    %v3074 = vunpack.c.h.b16 %v3004
    %v3075 = vunpack.c.l.b16 %v3005
    %v3076 = vunpack.c.l.b16 %v3006
    %v3077 = vunpack.c.h.b16 %v3006
    %v3078 = vunpack.c.l.b16 %v3007
    %v3079 = vunpack.c.l.b16 %v3008
    %v3080 = vunpack.c.h.b16 %v3008
    %v3081 = vunpack.c.l.b16 %v3009
    %v3082 = vunpack.c.l.b16 %v3010
    %v3083 = vunpack.c.h.b16 %v3010
    %v3084 = vunpack.c.l.b16 %v3011
    %v3085 = vunpack.c.l.b16 %v3012
    %v3086 = vunpack.c.h.b16 %v3012
    %v3087 = vunpack.c.l.b16 %v3013
    %v3088 = vunpack.c.l.b16 %v3014
    %v3089 = vunpack.c.h.b16 %v3014
    %v3090 = vunpack.c.l.b16 %v3015
    %v3091 = vunpack.c.l.b16 %v3016
    %v3092 = vunpack.c.h.b16 %v3016
    %v3093 = vunpack.c.l.b16 %v3017
    %v3094 = vunpack.c.l.b16 %v3018
    %v3095 = vunpack.c.h.b16 %v3018
    %v3096 = vunpack.c.l.b16 %v3019
    %v3097 = vunpack.c.l.b16 %v3020
    %v3098 = vunpack.c.h.b16 %v3020
    %v3099 = vunpack.c.l.b16 %v3021
    %v3100 = vunpack.c.l.b16 %v3022
    %v3101 = vunpack.c.h.b16 %v3022
    %v3102 = vunpack.c.l.b16 %v3023
    %v3103 = vunpack.c.l.b16 %v3024
    %v3104 = vunpack.c.h.b16 %v3024
    %v3105 = vunpack.c.l.b16 %v3025
    %v3106 = vpack.c.b16 %v3061, %v3058
    %v3107 = vpack.c.b16 %v3062, %v3059
    %v3108 = vpack.c.b16 %v3063, %v3060
    %v3109 = vpack.c.b16 %v3067, %v3064
    %v3110 = vpack.c.b16 %v3068, %v3065
    %v3111 = vpack.c.b16 %v3069, %v3066
    %v3112 = vpack.c.b16 %v3073, %v3070
    %v3113 = vpack.c.b16 %v3074, %v3071
    %v3114 = vpack.c.b16 %v3075, %v3072
    %v3115 = vpack.c.b16 %v3079, %v3076
    %v3116 = vpack.c.b16 %v3080, %v3077
    %v3117 = vpack.c.b16 %v3081, %v3078
    %v3118 = vpack.c.b16 %v3085, %v3082
    %v3119 = vpack.c.b16 %v3086, %v3083
    %v3120 = vpack.c.b16 %v3087, %v3084
    %v3121 = vpack.c.b16 %v3091, %v3088
    %v3122 = vpack.c.b16 %v3092, %v3089
    %v3123 = vpack.c.b16 %v3093, %v3090
    %v3124 = vpack.c.b16 %v3097, %v3094
    %v3125 = vpack.c.b16 %v3098, %v3095
    %v3126 = vpack.c.b16 %v3099, %v3096
    %v3127 = vpack.c.b16 %v3103, %v3100
    %v3128 = vpack.c.b16 %v3104, %v3101
    %v3129 = vpack.c.b16 %v3105, %v3102
    %3154 = vmatprep.subr.bf16.mxu0 %v3107
    %3155 = vmatpush1.bf16.msra.mxu0 %v3106
    %3156 = vmatprep.subr.bf16.mxu0 %v3110
    %3157 = vmatpush1.bf16.msra.mxu0 %v3109
    %3158 = vmatprep.subr.bf16.mxu0 %v3113
    %3159 = vmatpush1.bf16.msra.mxu0 %v3112
    %3160 = vmatprep.subr.bf16.mxu0 %v3116
    %3161 = vmatpush1.bf16.msra.mxu0 %v3115
    %3162 = vmatprep.subr.bf16.mxu0 %v3119
    %3163 = vmatpush1.bf16.msra.mxu0 %v3118
    %3164 = vmatprep.subr.bf16.mxu0 %v3122
    %3165 = vmatpush1.bf16.msra.mxu0 %v3121
    %3166 = vmatprep.subr.bf16.mxu0 %v3125
    %3167 = vmatpush1.bf16.msra.mxu0 %v3124
    %3168 = vmatprep.subr.bf16.mxu0 %v3128
    %3169 = vmatpush1.bf16.msra.mxu0 %v3127
    %3170 = vmatprep.subr.bf16.mxu0 0
    %3171 = vmatpush1.bf16.msra.mxu0 0
    %3172 = vmatprep.subr.bf16.mxu0 0
    %3173 = vmatpush1.bf16.msra.mxu0 0
    %3174 = vmatprep.subr.bf16.mxu0 0
    %3175 = vmatpush1.bf16.msra.mxu0 0
    %3176 = vmatprep.subr.bf16.mxu0 0
    %3177 = vmatpush1.bf16.msra.mxu0 0
    %3178 = vmatprep.subr.bf16.mxu0 0
    %3179 = vmatpush1.bf16.msra.mxu0 0
    %3180 = vmatprep.subr.bf16.mxu0 0
    %3181 = vmatpush1.bf16.msra.mxu0 0
    %3182 = vmatprep.subr.bf16.mxu0 0
    %3183 = vmatpush1.bf16.msra.mxu0 0
    %3184 = vmatprep.subr.bf16.mxu0 0
    %3185 = vmatpush1.bf16.msra.mxu0 0
    %3186 = vmatprep.mubr.bf16.mxu0 0
    %3187 = vmatmul.mubr.bf16.gmra.mrb[0].mxu0 %v2993
    %v3188 = vpop.f32.mrb[0].mxu0
    %v3189 = vadd.f32 0.0, %v3188
    %v3190 = vpop.f32.mrb[0].mxu0
    %v3191 = vadd.f32 0.0, %v3190
    %v3192 = vpop.f32.mrb[0].mxu0
    %v3193 = vpop.f32.mrb[0].mxu0
    %3194 = vdwg.mxu0
    %3195 = vmatprep.subr.bf16.mxu0 0
    %3196 = vmatpush1.bf16.msra.mxu0 %v3108
    %3197 = vmatprep.subr.bf16.mxu0 0
    %3198 = vmatpush1.bf16.msra.mxu0 %v3111
    %3199 = vmatprep.subr.bf16.mxu0 0
    %3200 = vmatpush1.bf16.msra.mxu0 %v3114
    %3201 = vmatprep.subr.bf16.mxu0 0
    %3202 = vmatpush1.bf16.msra.mxu0 %v3117
    %3203 = vmatprep.subr.bf16.mxu0 0
    %3204 = vmatpush1.bf16.msra.mxu0 %v3120
    %3205 = vmatprep.subr.bf16.mxu0 0
    %3206 = vmatpush1.bf16.msra.mxu0 %v3123
    %3207 = vmatprep.subr.bf16.mxu0 0
    %3208 = vmatpush1.bf16.msra.mxu0 %v3126
    %3209 = vmatprep.subr.bf16.mxu0 0
    %3210 = vmatpush1.bf16.msra.mxu0 %v3129
    %3211 = vmatprep.subr.bf16.mxu0 0
    %3212 = vmatpush1.bf16.msra.mxu0 0
    %3213 = vmatprep.subr.bf16.mxu0 0
    %3214 = vmatpush1.bf16.msra.mxu0 0
    %3215 = vmatprep.subr.bf16.mxu0 0
    %3216 = vmatpush1.bf16.msra.mxu0 0
    %3217 = vmatprep.subr.bf16.mxu0 0
    %3218 = vmatpush1.bf16.msra.mxu0 0
    %3219 = vmatprep.subr.bf16.mxu0 0
    %3220 = vmatpush1.bf16.msra.mxu0 0
    %3221 = vmatprep.subr.bf16.mxu0 0
    %3222 = vmatpush1.bf16.msra.mxu0 0
    %3223 = vmatprep.subr.bf16.mxu0 0
    %3224 = vmatpush1.bf16.msra.mxu0 0
    %3225 = vmatprep.subr.bf16.mxu0 0
    %3226 = vmatpush1.bf16.msra.mxu0 0
    %3227 = vmatprep.mubr.bf16.mxu0 0
    %3228 = vmatmul.mubr.bf16.gmra.mrb[0].mxu0 %v2993
    %v3229 = vpop.f32.mrb[0].mxu0
    %v3230 = vadd.f32 0.0, %v3229
    %v3231 = vpop.f32.mrb[0].mxu0
    %v3232 = vpop.f32.mrb[0].mxu0
    %v3233 = vpop.f32.mrb[0].mxu0
    %3234 = vdwg.mxu0
    %v3235 = vpack.c.bf16 %v2978, %v2978
    %v3236 = vld [vmem:[#allocation9] sm:$0xff]
    %v3237 = vld [vmem:[#allocation9 + $0x8] sm:$0xf]
    %v3238 = vld [vmem:[#allocation9 + $0xc] sm:$0xff]
    %v3239 = vld [vmem:[#allocation9 + $0x14] sm:$0xf]
    %v3240 = vld [vmem:[#allocation9 + $0x18] sm:$0xff]
    %v3241 = vld [vmem:[#allocation9 + $0x20] sm:$0xf]
    %v3242 = vld [vmem:[#allocation9 + $0x24] sm:$0xff]
    %v3243 = vld [vmem:[#allocation9 + $0x2c] sm:$0xf]
    %v3244 = vld [vmem:[#allocation9 + $0x30] sm:$0xff]
    %v3245 = vld [vmem:[#allocation9 + $0x38] sm:$0xf]
    %v3246 = vld [vmem:[#allocation9 + $0x3c] sm:$0xff]
    %v3247 = vld [vmem:[#allocation9 + $0x44] sm:$0xf]
    %v3248 = vld [vmem:[#allocation9 + $0x48] sm:$0xff]
    %v3249 = vld [vmem:[#allocation9 + $0x50] sm:$0xf]
    %v3250 = vld [vmem:[#allocation9 + $0x54] sm:$0xff]
    %v3251 = vld [vmem:[#allocation9 + $0x5c] sm:$0xf]
    %v3252 = vld [vmem:[#allocation9 + $0x60] sm:$0xff]
    %v3253 = vld [vmem:[#allocation9 + $0x68] sm:$0xf]
    %v3254 = vld [vmem:[#allocation9 + $0x6c] sm:$0xff]
    %v3255 = vld [vmem:[#allocation9 + $0x74] sm:$0xf]
    %v3256 = vld [vmem:[#allocation9 + $0x78] sm:$0xff]
    %v3257 = vld [vmem:[#allocation9 + $0x80] sm:$0xf]
    %v3258 = vld [vmem:[#allocation9 + $0x84] sm:$0xff]
    %v3259 = vld [vmem:[#allocation9 + $0x8c] sm:$0xf]
    %v3260 = vld [vmem:[#allocation9 + $0x90] sm:$0xff]
    %v3261 = vld [vmem:[#allocation9 + $0x98] sm:$0xf]
    %v3262 = vld [vmem:[#allocation9 + $0x9c] sm:$0xff]
    %v3263 = vld [vmem:[#allocation9 + $0xa4] sm:$0xf]
    %v3264 = vld [vmem:[#allocation9 + $0xa8] sm:$0xff]
    %v3265 = vld [vmem:[#allocation9 + $0xb0] sm:$0xf]
    %v3266 = vld [vmem:[#allocation9 + $0xb4] sm:$0xff]
    %v3267 = vld [vmem:[#allocation9 + $0xbc] sm:$0xf]
    %v3300 = vunpack.c.l.b16 %v3236
    %v3301 = vunpack.c.h.b16 %v3236
    %v3302 = vunpack.c.l.b16 %v3237
    %v3303 = vunpack.c.l.b16 %v3238
    %v3304 = vunpack.c.h.b16 %v3238
    %v3305 = vunpack.c.l.b16 %v3239
    %v3306 = vunpack.c.l.b16 %v3240
    %v3307 = vunpack.c.h.b16 %v3240
    %v3308 = vunpack.c.l.b16 %v3241
    %v3309 = vunpack.c.l.b16 %v3242
    %v3310 = vunpack.c.h.b16 %v3242
    %v3311 = vunpack.c.l.b16 %v3243
    %v3312 = vunpack.c.l.b16 %v3244
    %v3313 = vunpack.c.h.b16 %v3244
    %v3314 = vunpack.c.l.b16 %v3245
    %v3315 = vunpack.c.l.b16 %v3246
    %v3316 = vunpack.c.h.b16 %v3246
    %v3317 = vunpack.c.l.b16 %v3247
    %v3318 = vunpack.c.l.b16 %v3248
    %v3319 = vunpack.c.h.b16 %v3248
    %v3320 = vunpack.c.l.b16 %v3249
    %v3321 = vunpack.c.l.b16 %v3250
    %v3322 = vunpack.c.h.b16 %v3250
    %v3323 = vunpack.c.l.b16 %v3251
    %v3324 = vunpack.c.l.b16 %v3252
    %v3325 = vunpack.c.h.b16 %v3252
    %v3326 = vunpack.c.l.b16 %v3253
    %v3327 = vunpack.c.l.b16 %v3254
    %v3328 = vunpack.c.h.b16 %v3254
    %v3329 = vunpack.c.l.b16 %v3255
    %v3330 = vunpack.c.l.b16 %v3256
    %v3331 = vunpack.c.h.b16 %v3256
    %v3332 = vunpack.c.l.b16 %v3257
    %v3333 = vunpack.c.l.b16 %v3258
    %v3334 = vunpack.c.h.b16 %v3258
    %v3335 = vunpack.c.l.b16 %v3259
    %v3336 = vunpack.c.l.b16 %v3260
    %v3337 = vunpack.c.h.b16 %v3260
    %v3338 = vunpack.c.l.b16 %v3261
    %v3339 = vunpack.c.l.b16 %v3262
    %v3340 = vunpack.c.h.b16 %v3262
    %v3341 = vunpack.c.l.b16 %v3263
    %v3342 = vunpack.c.l.b16 %v3264
    %v3343 = vunpack.c.h.b16 %v3264
    %v3344 = vunpack.c.l.b16 %v3265
    %v3345 = vunpack.c.l.b16 %v3266
    %v3346 = vunpack.c.h.b16 %v3266
    %v3347 = vunpack.c.l.b16 %v3267
    %v3348 = vpack.c.b16 %v3303, %v3300
    %v3349 = vpack.c.b16 %v3304, %v3301
    %v3350 = vpack.c.b16 %v3305, %v3302
    %v3351 = vpack.c.b16 %v3309, %v3306
    %v3352 = vpack.c.b16 %v3310, %v3307
    %v3353 = vpack.c.b16 %v3311, %v3308
    %v3354 = vpack.c.b16 %v3315, %v3312
    %v3355 = vpack.c.b16 %v3316, %v3313
    %v3356 = vpack.c.b16 %v3317, %v3314
    %v3357 = vpack.c.b16 %v3321, %v3318
    %v3358 = vpack.c.b16 %v3322, %v3319
    %v3359 = vpack.c.b16 %v3323, %v3320
    %v3360 = vpack.c.b16 %v3327, %v3324
    %v3361 = vpack.c.b16 %v3328, %v3325
    %v3362 = vpack.c.b16 %v3329, %v3326
    %v3363 = vpack.c.b16 %v3333, %v3330
    %v3364 = vpack.c.b16 %v3334, %v3331
    %v3365 = vpack.c.b16 %v3335, %v3332
    %v3366 = vpack.c.b16 %v3339, %v3336
    %v3367 = vpack.c.b16 %v3340, %v3337
    %v3368 = vpack.c.b16 %v3341, %v3338
    %v3369 = vpack.c.b16 %v3345, %v3342
    %v3370 = vpack.c.b16 %v3346, %v3343
    %v3371 = vpack.c.b16 %v3347, %v3344
    %3396 = vmatprep.subr.bf16.mxu0 %v3349
    %3397 = vmatpush1.bf16.msra.mxu0 %v3348
    %3398 = vmatprep.subr.bf16.mxu0 %v3352
    %3399 = vmatpush1.bf16.msra.mxu0 %v3351
    %3400 = vmatprep.subr.bf16.mxu0 %v3355
    %3401 = vmatpush1.bf16.msra.mxu0 %v3354
    %3402 = vmatprep.subr.bf16.mxu0 %v3358
    %3403 = vmatpush1.bf16.msra.mxu0 %v3357
    %3404 = vmatprep.subr.bf16.mxu0 %v3361
    %3405 = vmatpush1.bf16.msra.mxu0 %v3360
    %3406 = vmatprep.subr.bf16.mxu0 %v3364
    %3407 = vmatpush1.bf16.msra.mxu0 %v3363
    %3408 = vmatprep.subr.bf16.mxu0 %v3367
    %3409 = vmatpush1.bf16.msra.mxu0 %v3366
    %3410 = vmatprep.subr.bf16.mxu0 %v3370
    %3411 = vmatpush1.bf16.msra.mxu0 %v3369
    %3412 = vmatprep.subr.bf16.mxu0 0
    %3413 = vmatpush1.bf16.msra.mxu0 0
    %3414 = vmatprep.subr.bf16.mxu0 0
    %3415 = vmatpush1.bf16.msra.mxu0 0
    %3416 = vmatprep.subr.bf16.mxu0 0
    %3417 = vmatpush1.bf16.msra.mxu0 0
    %3418 = vmatprep.subr.bf16.mxu0 0
    %3419 = vmatpush1.bf16.msra.mxu0 0
    %3420 = vmatprep.subr.bf16.mxu0 0
    %3421 = vmatpush1.bf16.msra.mxu0 0
    %3422 = vmatprep.subr.bf16.mxu0 0
    %3423 = vmatpush1.bf16.msra.mxu0 0
    %3424 = vmatprep.subr.bf16.mxu0 0
    %3425 = vmatpush1.bf16.msra.mxu0 0
    %3426 = vmatprep.subr.bf16.mxu0 0
    %3427 = vmatpush1.bf16.msra.mxu0 0
    %3428 = vmatprep.mubr.bf16.mxu0 0
    %3429 = vmatmul.mubr.bf16.gmra.mrb[0].mxu0 %v3235
    %v3430 = vpop.f32.mrb[0].mxu0
    %v3431 = vadd.f32 0.0, %v3430
    %v3432 = vpop.f32.mrb[0].mxu0
    %v3433 = vadd.f32 0.0, %v3432
    %v3434 = vpop.f32.mrb[0].mxu0
    %v3435 = vpop.f32.mrb[0].mxu0
    %3436 = vdwg.mxu0
    %3437 = vmatprep.subr.bf16.mxu0 0
    %3438 = vmatpush1.bf16.msra.mxu0 %v3350
    %3439 = vmatprep.subr.bf16.mxu0 0
    %3440 = vmatpush1.bf16.msra.mxu0 %v3353
    %3441 = vmatprep.subr.bf16.mxu0 0
    %3442 = vmatpush1.bf16.msra.mxu0 %v3356
    %3443 = vmatprep.subr.bf16.mxu0 0
    %3444 = vmatpush1.bf16.msra.mxu0 %v3359
    %3445 = vmatprep.subr.bf16.mxu0 0
    %3446 = vmatpush1.bf16.msra.mxu0 %v3362
    %3447 = vmatprep.subr.bf16.mxu0 0
    %3448 = vmatpush1.bf16.msra.mxu0 %v3365
    %3449 = vmatprep.subr.bf16.mxu0 0
    %3450 = vmatpush1.bf16.msra.mxu0 %v3368
    %3451 = vmatprep.subr.bf16.mxu0 0
    %3452 = vmatpush1.bf16.msra.mxu0 %v3371
    %3453 = vmatprep.subr.bf16.mxu0 0
    %3454 = vmatpush1.bf16.msra.mxu0 0
    %3455 = vmatprep.subr.bf16.mxu0 0
    %3456 = vmatpush1.bf16.msra.mxu0 0
    %3457 = vmatprep.subr.bf16.mxu0 0
    %3458 = vmatpush1.bf16.msra.mxu0 0
    %3459 = vmatprep.subr.bf16.mxu0 0
    %3460 = vmatpush1.bf16.msra.mxu0 0
    %3461 = vmatprep.subr.bf16.mxu0 0
    %3462 = vmatpush1.bf16.msra.mxu0 0
    %3463 = vmatprep.subr.bf16.mxu0 0
    %3464 = vmatpush1.bf16.msra.mxu0 0
    %3465 = vmatprep.subr.bf16.mxu0 0
    %3466 = vmatpush1.bf16.msra.mxu0 0
    %3467 = vmatprep.subr.bf16.mxu0 0
    %3468 = vmatpush1.bf16.msra.mxu0 0
    %3469 = vmatprep.mubr.bf16.mxu0 0
    %3470 = vmatmul.mubr.bf16.gmra.mrb[0].mxu0 %v3235
    %v3471 = vpop.f32.mrb[0].mxu0
    %v3472 = vadd.f32 0.0, %v3471
    %v3473 = vpop.f32.mrb[0].mxu0
    %v3474 = vpop.f32.mrb[0].mxu0
    %v3475 = vpop.f32.mrb[0].mxu0
    %3476 = vdwg.mxu0
    %v3477 = vadd.f32 %v2987, %v3189
    %v3478 = vxor.u32 %v3477, 2147483648
    %v3479 = vmul.f32 %v3478, 1.442695
    %v3480 = vpow.pop %v3479
    %v3481 = vadd.f32 %v3480, 1.0
    %v3482 = vrcp.pop %v3481
    %v3483 = vmul.f32 1.0, %v3482
    %v3484 = vadd.f32 %v2988, %v3191
    %v3485 = vxor.u32 %v3484, 2147483648
    %v3486 = vmul.f32 %v3485, 1.442695
    %v3487 = vpow.pop %v3486
    %v3488 = vadd.f32 %v3487, 1.0
    %v3489 = vrcp.pop %v3488
    %v3490 = vmul.f32 1.0, %v3489
    %v3491 = vadd.f32 %v3230, %v1228
    %v3492 = vmul.f32 %v3483, %v3491
    %v3493 = vadd.f32 %v2989, %v3492
    %v3494 = vtanh.pop %v3493
    %v3495 = vsub.f32 1.0, %v3490
    %v3496 = vsub.f32 %v3494, %v2970
    %v3497 = vmul.f32 %v3495, %v3496
    %v3498 = vadd.f32 %v2970, %v3497
    %v3499 = vadd.f32 %v2990, %v3431
    %v3500 = vxor.u32 %v3499, 2147483648
    %v3501 = vmul.f32 %v3500, 1.442695
    %v3502 = vpow.pop %v3501
    %v3503 = vadd.f32 %v3502, 1.0
    %v3504 = vrcp.pop %v3503
    %v3505 = vmul.f32 1.0, %v3504
    %v3506 = vadd.f32 %v2991, %v3433
    %v3507 = vxor.u32 %v3506, 2147483648
    %v3508 = vmul.f32 %v3507, 1.442695
    %v3509 = vpow.pop %v3508
    %v3510 = vadd.f32 %v3509, 1.0
    %v3511 = vrcp.pop %v3510
    %v3512 = vmul.f32 1.0, %v3511
    %v3513 = vadd.f32 %v3472, %v1256
    %v3514 = vmul.f32 %v3505, %v3513
    %v3515 = vadd.f32 %v2992, %v3514
    %v3516 = vtanh.pop %v3515
    %v3517 = vsub.f32 1.0, %v3512
    %v3518 = vsub.f32 %v3516, %v2978
    %v3519 = vmul.f32 %v3517, %v3518
    %v3520 = vadd.f32 %v2978, %v3519
    %v3521 = vsub.f32 %v3498, %v2970
    %v3522 = vmul.f32 %v2975, %v3521
    %v3523 = vadd.f32 %v2970, %v3522
    %v3524 = vsub.f32 %v3520, %v2978
    %v3525 = vmul.f32 %v2967, %v3524
    %v3526 = vadd.f32 %v2978, %v3525
    %v3527 = vmul.f32 %v2975, %v3523
    %v3528 = vpack.c.bf16 %v3527, %v3527
    %3529 = vst [vmem:[%s2985] sm:$0xf] %v3528
    %v3530 = vmul.f32 %v2967, %v3526
    %v3531 = vpack.c.bf16 %v3530, %v3530
    %3532 = vst [vmem:[%s2981 + $0x4] sm:$0xf] %v3531
    %v3533 = vld [vmem:[%s1859] sm:$0xff]
    %v3534 = vld [vmem:[%s1859 + $0x8] sm:$0xff]
    %v3535 = vld [vmem:[%s1859 + $0x10] sm:$0xff]
    %v3536 = vld [vmem:[%s1855 + $0x18] sm:$0xff]
    %v3537 = vld [vmem:[%s1855 + $0x20] sm:$0xff]
    %v3538 = vld [vmem:[%s1855 + $0x28] sm:$0xff]
    %v3539 = vpack.c.bf16 %v3523, %v3523
    %v3540 = vld [vmem:[#allocation8] sm:$0xff]
    %v3541 = vld [vmem:[#allocation8 + $0x8] sm:$0xf]
    %v3542 = vld [vmem:[#allocation8 + $0xc] sm:$0xff]
    %v3543 = vld [vmem:[#allocation8 + $0x14] sm:$0xf]
    %v3544 = vld [vmem:[#allocation8 + $0x18] sm:$0xff]
    %v3545 = vld [vmem:[#allocation8 + $0x20] sm:$0xf]
    %v3546 = vld [vmem:[#allocation8 + $0x24] sm:$0xff]
    %v3547 = vld [vmem:[#allocation8 + $0x2c] sm:$0xf]
    %v3548 = vld [vmem:[#allocation8 + $0x30] sm:$0xff]
    %v3549 = vld [vmem:[#allocation8 + $0x38] sm:$0xf]
    %v3550 = vld [vmem:[#allocation8 + $0x3c] sm:$0xff]
    %v3551 = vld [vmem:[#allocation8 + $0x44] sm:$0xf]
    %v3552 = vld [vmem:[#allocation8 + $0x48] sm:$0xff]
    %v3553 = vld [vmem:[#allocation8 + $0x50] sm:$0xf]
    %v3554 = vld [vmem:[#allocation8 + $0x54] sm:$0xff]
    %v3555 = vld [vmem:[#allocation8 + $0x5c] sm:$0xf]
    %v3556 = vld [vmem:[#allocation8 + $0x60] sm:$0xff]
    %v3557 = vld [vmem:[#allocation8 + $0x68] sm:$0xf]
    %v3558 = vld [vmem:[#allocation8 + $0x6c] sm:$0xff]
    %v3559 = vld [vmem:[#allocation8 + $0x74] sm:$0xf]
    %v3560 = vld [vmem:[#allocation8 + $0x78] sm:$0xff]
    %v3561 = vld [vmem:[#allocation8 + $0x80] sm:$0xf]
    %v3562 = vld [vmem:[#allocation8 + $0x84] sm:$0xff]
    %v3563 = vld [vmem:[#allocation8 + $0x8c] sm:$0xf]
    %v3564 = vld [vmem:[#allocation8 + $0x90] sm:$0xff]
    %v3565 = vld [vmem:[#allocation8 + $0x98] sm:$0xf]
    %v3566 = vld [vmem:[#allocation8 + $0x9c] sm:$0xff]
    %v3567 = vld [vmem:[#allocation8 + $0xa4] sm:$0xf]
    %v3568 = vld [vmem:[#allocation8 + $0xa8] sm:$0xff]
    %v3569 = vld [vmem:[#allocation8 + $0xb0] sm:$0xf]
    %v3570 = vld [vmem:[#allocation8 + $0xb4] sm:$0xff]
    %v3571 = vld [vmem:[#allocation8 + $0xbc] sm:$0xf]
    %v3604 = vunpack.c.l.b16 %v3540
    %v3605 = vunpack.c.h.b16 %v3540
    %v3606 = vunpack.c.l.b16 %v3541
    %v3607 = vunpack.c.l.b16 %v3542
    %v3608 = vunpack.c.h.b16 %v3542
    %v3609 = vunpack.c.l.b16 %v3543
    %v3610 = vunpack.c.l.b16 %v3544
    %v3611 = vunpack.c.h.b16 %v3544
    %v3612 = vunpack.c.l.b16 %v3545
    %v3613 = vunpack.c.l.b16 %v3546
    %v3614 = vunpack.c.h.b16 %v3546
    %v3615 = vunpack.c.l.b16 %v3547
    %v3616 = vunpack.c.l.b16 %v3548
    %v3617 = vunpack.c.h.b16 %v3548
    %v3618 = vunpack.c.l.b16 %v3549
    %v3619 = vunpack.c.l.b16 %v3550
    %v3620 = vunpack.c.h.b16 %v3550
    %v3621 = vunpack.c.l.b16 %v3551
    %v3622 = vunpack.c.l.b16 %v3552
    %v3623 = vunpack.c.h.b16 %v3552
    %v3624 = vunpack.c.l.b16 %v3553
    %v3625 = vunpack.c.l.b16 %v3554
    %v3626 = vunpack.c.h.b16 %v3554
    %v3627 = vunpack.c.l.b16 %v3555
    %v3628 = vunpack.c.l.b16 %v3556
    %v3629 = vunpack.c.h.b16 %v3556
    %v3630 = vunpack.c.l.b16 %v3557
    %v3631 = vunpack.c.l.b16 %v3558
    %v3632 = vunpack.c.h.b16 %v3558
    %v3633 = vunpack.c.l.b16 %v3559
    %v3634 = vunpack.c.l.b16 %v3560
    %v3635 = vunpack.c.h.b16 %v3560
    %v3636 = vunpack.c.l.b16 %v3561
    %v3637 = vunpack.c.l.b16 %v3562
    %v3638 = vunpack.c.h.b16 %v3562
    %v3639 = vunpack.c.l.b16 %v3563
    %v3640 = vunpack.c.l.b16 %v3564
    %v3641 = vunpack.c.h.b16 %v3564
    %v3642 = vunpack.c.l.b16 %v3565
    %v3643 = vunpack.c.l.b16 %v3566
    %v3644 = vunpack.c.h.b16 %v3566
    %v3645 = vunpack.c.l.b16 %v3567
    %v3646 = vunpack.c.l.b16 %v3568
    %v3647 = vunpack.c.h.b16 %v3568
    %v3648 = vunpack.c.l.b16 %v3569
    %v3649 = vunpack.c.l.b16 %v3570
    %v3650 = vunpack.c.h.b16 %v3570
    %v3651 = vunpack.c.l.b16 %v3571
    %v3652 = vpack.c.b16 %v3607, %v3604
    %v3653 = vpack.c.b16 %v3608, %v3605
    %v3654 = vpack.c.b16 %v3609, %v3606
    %v3655 = vpack.c.b16 %v3613, %v3610
    %v3656 = vpack.c.b16 %v3614, %v3611
    %v3657 = vpack.c.b16 %v3615, %v3612
    %v3658 = vpack.c.b16 %v3619, %v3616
    %v3659 = vpack.c.b16 %v3620, %v3617
    %v3660 = vpack.c.b16 %v3621, %v3618
    %v3661 = vpack.c.b16 %v3625, %v3622
    %v3662 = vpack.c.b16 %v3626, %v3623
    %v3663 = vpack.c.b16 %v3627, %v3624
    %v3664 = vpack.c.b16 %v3631, %v3628
    %v3665 = vpack.c.b16 %v3632, %v3629
    %v3666 = vpack.c.b16 %v3633, %v3630
    %v3667 = vpack.c.b16 %v3637, %v3634
    %v3668 = vpack.c.b16 %v3638, %v3635
    %v3669 = vpack.c.b16 %v3639, %v3636
    %v3670 = vpack.c.b16 %v3643, %v3640
    %v3671 = vpack.c.b16 %v3644, %v3641
    %v3672 = vpack.c.b16 %v3645, %v3642
    %v3673 = vpack.c.b16 %v3649, %v3646
    %v3674 = vpack.c.b16 %v3650, %v3647
    %v3675 = vpack.c.b16 %v3651, %v3648
    %3700 = vmatprep.subr.bf16.mxu0 %v3653
    %3701 = vmatpush1.bf16.msra.mxu0 %v3652
    %3702 = vmatprep.subr.bf16.mxu0 %v3656
    %3703 = vmatpush1.bf16.msra.mxu0 %v3655
    %3704 = vmatprep.subr.bf16.mxu0 %v3659
    %3705 = vmatpush1.bf16.msra.mxu0 %v3658
    %3706 = vmatprep.subr.bf16.mxu0 %v3662
    %3707 = vmatpush1.bf16.msra.mxu0 %v3661
    %3708 = vmatprep.subr.bf16.mxu0 %v3665
    %3709 = vmatpush1.bf16.msra.mxu0 %v3664
    %3710 = vmatprep.subr.bf16.mxu0 %v3668
    %3711 = vmatpush1.bf16.msra.mxu0 %v3667
    %3712 = vmatprep.subr.bf16.mxu0 %v3671
    %3713 = vmatpush1.bf16.msra.mxu0 %v3670
    %3714 = vmatprep.subr.bf16.mxu0 %v3674
    %3715 = vmatpush1.bf16.msra.mxu0 %v3673
    %3716 = vmatprep.subr.bf16.mxu0 0
    %3717 = vmatpush1.bf16.msra.mxu0 0
    %3718 = vmatprep.subr.bf16.mxu0 0
    %3719 = vmatpush1.bf16.msra.mxu0 0
    %3720 = vmatprep.subr.bf16.mxu0 0
    %3721 = vmatpush1.bf16.msra.mxu0 0
    %3722 = vmatprep.subr.bf16.mxu0 0
    %3723 = vmatpush1.bf16.msra.mxu0 0
    %3724 = vmatprep.subr.bf16.mxu0 0
    %3725 = vmatpush1.bf16.msra.mxu0 0
    %3726 = vmatprep.subr.bf16.mxu0 0
    %3727 = vmatpush1.bf16.msra.mxu0 0
    %3728 = vmatprep.subr.bf16.mxu0 0
    %3729 = vmatpush1.bf16.msra.mxu0 0
    %3730 = vmatprep.subr.bf16.mxu0 0
    %3731 = vmatpush1.bf16.msra.mxu0 0
    %3732 = vmatprep.mubr.bf16.mxu0 0
    %3733 = vmatmul.mubr.bf16.gmra.mrb[0].mxu0 %v3539
    %v3734 = vpop.f32.mrb[0].mxu0
    %v3735 = vadd.f32 0.0, %v3734
    %v3736 = vpop.f32.mrb[0].mxu0
    %v3737 = vadd.f32 0.0, %v3736
    %v3738 = vpop.f32.mrb[0].mxu0
    %v3739 = vpop.f32.mrb[0].mxu0
    %3740 = vdwg.mxu0
    %3741 = vmatprep.subr.bf16.mxu0 0
    %3742 = vmatpush1.bf16.msra.mxu0 %v3654
    %3743 = vmatprep.subr.bf16.mxu0 0
    %3744 = vmatpush1.bf16.msra.mxu0 %v3657
    %3745 = vmatprep.subr.bf16.mxu0 0
    %3746 = vmatpush1.bf16.msra.mxu0 %v3660
    %3747 = vmatprep.subr.bf16.mxu0 0
    %3748 = vmatpush1.bf16.msra.mxu0 %v3663
    %3749 = vmatprep.subr.bf16.mxu0 0
    %3750 = vmatpush1.bf16.msra.mxu0 %v3666
    %3751 = vmatprep.subr.bf16.mxu0 0
    %3752 = vmatpush1.bf16.msra.mxu0 %v3669
    %3753 = vmatprep.subr.bf16.mxu0 0
    %3754 = vmatpush1.bf16.msra.mxu0 %v3672
    %3755 = vmatprep.subr.bf16.mxu0 0
    %3756 = vmatpush1.bf16.msra.mxu0 %v3675
    %3757 = vmatprep.subr.bf16.mxu0 0
    %3758 = vmatpush1.bf16.msra.mxu0 0
    %3759 = vmatprep.subr.bf16.mxu0 0
    %3760 = vmatpush1.bf16.msra.mxu0 0
    %3761 = vmatprep.subr.bf16.mxu0 0
    %3762 = vmatpush1.bf16.msra.mxu0 0
    %3763 = vmatprep.subr.bf16.mxu0 0
    %3764 = vmatpush1.bf16.msra.mxu0 0
    %3765 = vmatprep.subr.bf16.mxu0 0
    %3766 = vmatpush1.bf16.msra.mxu0 0
    %3767 = vmatprep.subr.bf16.mxu0 0
    %3768 = vmatpush1.bf16.msra.mxu0 0
    %3769 = vmatprep.subr.bf16.mxu0 0
    %3770 = vmatpush1.bf16.msra.mxu0 0
    %3771 = vmatprep.subr.bf16.mxu0 0
    %3772 = vmatpush1.bf16.msra.mxu0 0
    %3773 = vmatprep.mubr.bf16.mxu0 0
    %3774 = vmatmul.mubr.bf16.gmra.mrb[0].mxu0 %v3539
    %v3775 = vpop.f32.mrb[0].mxu0
    %v3776 = vadd.f32 0.0, %v3775
    %v3777 = vpop.f32.mrb[0].mxu0
    %v3778 = vpop.f32.mrb[0].mxu0
    %v3779 = vpop.f32.mrb[0].mxu0
    %3780 = vdwg.mxu0
    %v3781 = vpack.c.bf16 %v3526, %v3526
    %v3782 = vld [vmem:[#allocation9] sm:$0xff]
    %v3783 = vld [vmem:[#allocation9 + $0x8] sm:$0xf]
    %v3784 = vld [vmem:[#allocation9 + $0xc] sm:$0xff]
    %v3785 = vld [vmem:[#allocation9 + $0x14] sm:$0xf]
    %v3786 = vld [vmem:[#allocation9 + $0x18] sm:$0xff]
    %v3787 = vld [vmem:[#allocation9 + $0x20] sm:$0xf]
    %v3788 = vld [vmem:[#allocation9 + $0x24] sm:$0xff]
    %v3789 = vld [vmem:[#allocation9 + $0x2c] sm:$0xf]
    %v3790 = vld [vmem:[#allocation9 + $0x30] sm:$0xff]
    %v3791 = vld [vmem:[#allocation9 + $0x38] sm:$0xf]
    %v3792 = vld [vmem:[#allocation9 + $0x3c] sm:$0xff]
    %v3793 = vld [vmem:[#allocation9 + $0x44] sm:$0xf]
    %v3794 = vld [vmem:[#allocation9 + $0x48] sm:$0xff]
    %v3795 = vld [vmem:[#allocation9 + $0x50] sm:$0xf]
    %v3796 = vld [vmem:[#allocation9 + $0x54] sm:$0xff]
    %v3797 = vld [vmem:[#allocation9 + $0x5c] sm:$0xf]
    %v3798 = vld [vmem:[#allocation9 + $0x60] sm:$0xff]
    %v3799 = vld [vmem:[#allocation9 + $0x68] sm:$0xf]
    %v3800 = vld [vmem:[#allocation9 + $0x6c] sm:$0xff]
    %v3801 = vld [vmem:[#allocation9 + $0x74] sm:$0xf]
    %v3802 = vld [vmem:[#allocation9 + $0x78] sm:$0xff]
    %v3803 = vld [vmem:[#allocation9 + $0x80] sm:$0xf]
    %v3804 = vld [vmem:[#allocation9 + $0x84] sm:$0xff]
    %v3805 = vld [vmem:[#allocation9 + $0x8c] sm:$0xf]
    %v3806 = vld [vmem:[#allocation9 + $0x90] sm:$0xff]
    %v3807 = vld [vmem:[#allocation9 + $0x98] sm:$0xf]
    %v3808 = vld [vmem:[#allocation9 + $0x9c] sm:$0xff]
    %v3809 = vld [vmem:[#allocation9 + $0xa4] sm:$0xf]
    %v3810 = vld [vmem:[#allocation9 + $0xa8] sm:$0xff]
    %v3811 = vld [vmem:[#allocation9 + $0xb0] sm:$0xf]
    %v3812 = vld [vmem:[#allocation9 + $0xb4] sm:$0xff]
    %v3813 = vld [vmem:[#allocation9 + $0xbc] sm:$0xf]
    %v3846 = vunpack.c.l.b16 %v3782
    %v3847 = vunpack.c.h.b16 %v3782
    %v3848 = vunpack.c.l.b16 %v3783
    %v3849 = vunpack.c.l.b16 %v3784
    %v3850 = vunpack.c.h.b16 %v3784
    %v3851 = vunpack.c.l.b16 %v3785
    %v3852 = vunpack.c.l.b16 %v3786
    %v3853 = vunpack.c.h.b16 %v3786
    %v3854 = vunpack.c.l.b16 %v3787
    %v3855 = vunpack.c.l.b16 %v3788
    %v3856 = vunpack.c.h.b16 %v3788
    %v3857 = vunpack.c.l.b16 %v3789
    %v3858 = vunpack.c.l.b16 %v3790
    %v3859 = vunpack.c.h.b16 %v3790
    %v3860 = vunpack.c.l.b16 %v3791
    %v3861 = vunpack.c.l.b16 %v3792
    %v3862 = vunpack.c.h.b16 %v3792
    %v3863 = vunpack.c.l.b16 %v3793
    %v3864 = vunpack.c.l.b16 %v3794
    %v3865 = vunpack.c.h.b16 %v3794
    %v3866 = vunpack.c.l.b16 %v3795
    %v3867 = vunpack.c.l.b16 %v3796
    %v3868 = vunpack.c.h.b16 %v3796
    %v3869 = vunpack.c.l.b16 %v3797
    %v3870 = vunpack.c.l.b16 %v3798
    %v3871 = vunpack.c.h.b16 %v3798
    %v3872 = vunpack.c.l.b16 %v3799
    %v3873 = vunpack.c.l.b16 %v3800
    %v3874 = vunpack.c.h.b16 %v3800
    %v3875 = vunpack.c.l.b16 %v3801
    %v3876 = vunpack.c.l.b16 %v3802
    %v3877 = vunpack.c.h.b16 %v3802
    %v3878 = vunpack.c.l.b16 %v3803
    %v3879 = vunpack.c.l.b16 %v3804
    %v3880 = vunpack.c.h.b16 %v3804
    %v3881 = vunpack.c.l.b16 %v3805
    %v3882 = vunpack.c.l.b16 %v3806
    %v3883 = vunpack.c.h.b16 %v3806
    %v3884 = vunpack.c.l.b16 %v3807
    %v3885 = vunpack.c.l.b16 %v3808
    %v3886 = vunpack.c.h.b16 %v3808
    %v3887 = vunpack.c.l.b16 %v3809
    %v3888 = vunpack.c.l.b16 %v3810
    %v3889 = vunpack.c.h.b16 %v3810
    %v3890 = vunpack.c.l.b16 %v3811
    %v3891 = vunpack.c.l.b16 %v3812
    %v3892 = vunpack.c.h.b16 %v3812
    %v3893 = vunpack.c.l.b16 %v3813
    %v3894 = vpack.c.b16 %v3849, %v3846
    %v3895 = vpack.c.b16 %v3850, %v3847
    %v3896 = vpack.c.b16 %v3851, %v3848
    %v3897 = vpack.c.b16 %v3855, %v3852
    %v3898 = vpack.c.b16 %v3856, %v3853
    %v3899 = vpack.c.b16 %v3857, %v3854
    %v3900 = vpack.c.b16 %v3861, %v3858
    %v3901 = vpack.c.b16 %v3862, %v3859
    %v3902 = vpack.c.b16 %v3863, %v3860
    %v3903 = vpack.c.b16 %v3867, %v3864
    %v3904 = vpack.c.b16 %v3868, %v3865
    %v3905 = vpack.c.b16 %v3869, %v3866
    %v3906 = vpack.c.b16 %v3873, %v3870
    %v3907 = vpack.c.b16 %v3874, %v3871
    %v3908 = vpack.c.b16 %v3875, %v3872
    %v3909 = vpack.c.b16 %v3879, %v3876
    %v3910 = vpack.c.b16 %v3880, %v3877
    %v3911 = vpack.c.b16 %v3881, %v3878
    %v3912 = vpack.c.b16 %v3885, %v3882
    %v3913 = vpack.c.b16 %v3886, %v3883
    %v3914 = vpack.c.b16 %v3887, %v3884
    %v3915 = vpack.c.b16 %v3891, %v3888
    %v3916 = vpack.c.b16 %v3892, %v3889
    %v3917 = vpack.c.b16 %v3893, %v3890
    %3942 = vmatprep.subr.bf16.mxu0 %v3895
    %3943 = vmatpush1.bf16.msra.mxu0 %v3894
    %3944 = vmatprep.subr.bf16.mxu0 %v3898
    %3945 = vmatpush1.bf16.msra.mxu0 %v3897
    %3946 = vmatprep.subr.bf16.mxu0 %v3901
    %3947 = vmatpush1.bf16.msra.mxu0 %v3900
    %3948 = vmatprep.subr.bf16.mxu0 %v3904
    %3949 = vmatpush1.bf16.msra.mxu0 %v3903
    %3950 = vmatprep.subr.bf16.mxu0 %v3907
    %3951 = vmatpush1.bf16.msra.mxu0 %v3906
    %3952 = vmatprep.subr.bf16.mxu0 %v3910
    %3953 = vmatpush1.bf16.msra.mxu0 %v3909
    %3954 = vmatprep.subr.bf16.mxu0 %v3913
    %3955 = vmatpush1.bf16.msra.mxu0 %v3912
    %3956 = vmatprep.subr.bf16.mxu0 %v3916
    %3957 = vmatpush1.bf16.msra.mxu0 %v3915
    %3958 = vmatprep.subr.bf16.mxu0 0
    %3959 = vmatpush1.bf16.msra.mxu0 0
    %3960 = vmatprep.subr.bf16.mxu0 0
    %3961 = vmatpush1.bf16.msra.mxu0 0
    %3962 = vmatprep.subr.bf16.mxu0 0
    %3963 = vmatpush1.bf16.msra.mxu0 0
    %3964 = vmatprep.subr.bf16.mxu0 0
    %3965 = vmatpush1.bf16.msra.mxu0 0
    %3966 = vmatprep.subr.bf16.mxu0 0
    %3967 = vmatpush1.bf16.msra.mxu0 0
    %3968 = vmatprep.subr.bf16.mxu0 0
    %3969 = vmatpush1.bf16.msra.mxu0 0
    %3970 = vmatprep.subr.bf16.mxu0 0
    %3971 = vmatpush1.bf16.msra.mxu0 0
    %3972 = vmatprep.subr.bf16.mxu0 0
    %3973 = vmatpush1.bf16.msra.mxu0 0
    %3974 = vmatprep.mubr.bf16.mxu0 0
    %3975 = vmatmul.mubr.bf16.gmra.mrb[0].mxu0 %v3781
    %v3976 = vpop.f32.mrb[0].mxu0
    %v3977 = vadd.f32 0.0, %v3976
    %v3978 = vpop.f32.mrb[0].mxu0
    %v3979 = vadd.f32 0.0, %v3978
    %v3980 = vpop.f32.mrb[0].mxu0
    %v3981 = vpop.f32.mrb[0].mxu0
    %3982 = vdwg.mxu0
    %3983 = vmatprep.subr.bf16.mxu0 0
    %3984 = vmatpush1.bf16.msra.mxu0 %v3896
    %3985 = vmatprep.subr.bf16.mxu0 0
    %3986 = vmatpush1.bf16.msra.mxu0 %v3899
    %3987 = vmatprep.subr.bf16.mxu0 0
    %3988 = vmatpush1.bf16.msra.mxu0 %v3902
    %3989 = vmatprep.subr.bf16.mxu0 0
    %3990 = vmatpush1.bf16.msra.mxu0 %v3905
    %3991 = vmatprep.subr.bf16.mxu0 0
    %3992 = vmatpush1.bf16.msra.mxu0 %v3908
    %3993 = vmatprep.subr.bf16.mxu0 0
    %3994 = vmatpush1.bf16.msra.mxu0 %v3911
    %3995 = vmatprep.subr.bf16.mxu0 0
    %3996 = vmatpush1.bf16.msra.mxu0 %v3914
    %3997 = vmatprep.subr.bf16.mxu0 0
    %3998 = vmatpush1.bf16.msra.mxu0 %v3917
    %3999 = vmatprep.subr.bf16.mxu0 0
    %4000 = vmatpush1.bf16.msra.mxu0 0
    %4001 = vmatprep.subr.bf16.mxu0 0
    %4002 = vmatpush1.bf16.msra.mxu0 0
    %4003 = vmatprep.subr.bf16.mxu0 0
    %4004 = vmatpush1.bf16.msra.mxu0 0
    %4005 = vmatprep.subr.bf16.mxu0 0
    %4006 = vmatpush1.bf16.msra.mxu0 0
    %4007 = vmatprep.subr.bf16.mxu0 0
    %4008 = vmatpush1.bf16.msra.mxu0 0
    %4009 = vmatprep.subr.bf16.mxu0 0
    %4010 = vmatpush1.bf16.msra.mxu0 0
    %4011 = vmatprep.subr.bf16.mxu0 0
    %4012 = vmatpush1.bf16.msra.mxu0 0
    %4013 = vmatprep.subr.bf16.mxu0 0
    %4014 = vmatpush1.bf16.msra.mxu0 0
    %4015 = vmatprep.mubr.bf16.mxu0 0
    %4016 = vmatmul.mubr.bf16.gmra.mrb[0].mxu0 %v3781
    %v4017 = vpop.f32.mrb[0].mxu0
    %v4018 = vadd.f32 0.0, %v4017
    %v4019 = vpop.f32.mrb[0].mxu0
    %v4020 = vpop.f32.mrb[0].mxu0
    %v4021 = vpop.f32.mrb[0].mxu0
    %4022 = vdwg.mxu0
    %v4023 = vadd.f32 %v3533, %v3735
    %v4024 = vxor.u32 %v4023, 2147483648
    %v4025 = vmul.f32 %v4024, 1.442695
    %v4026 = vpow.pop %v4025
    %v4027 = vadd.f32 %v4026, 1.0
    %v4028 = vrcp.pop %v4027
    %v4029 = vmul.f32 1.0, %v4028
    %v4030 = vadd.f32 %v3534, %v3737
    %v4031 = vxor.u32 %v4030, 2147483648
    %v4032 = vmul.f32 %v4031, 1.442695
    %v4033 = vpow.pop %v4032
    %v4034 = vadd.f32 %v4033, 1.0
    %v4035 = vrcp.pop %v4034
    %v4036 = vmul.f32 1.0, %v4035
    %v4037 = vadd.f32 %v3776, %v1228
    %v4038 = vmul.f32 %v4029, %v4037
    %v4039 = vadd.f32 %v3535, %v4038
    %v4040 = vtanh.pop %v4039
    %v4041 = vsub.f32 1.0, %v4036
    %v4042 = vsub.f32 %v4040, %v3523
    %v4043 = vmul.f32 %v4041, %v4042
    %v4044 = vadd.f32 %v3523, %v4043
    %v4045 = vadd.f32 %v3536, %v3977
    %v4046 = vxor.u32 %v4045, 2147483648
    %v4047 = vmul.f32 %v4046, 1.442695
    %v4048 = vpow.pop %v4047
    %v4049 = vadd.f32 %v4048, 1.0
    %v4050 = vrcp.pop %v4049
    %v4051 = vmul.f32 1.0, %v4050
    %v4052 = vadd.f32 %v3537, %v3979
    %v4053 = vxor.u32 %v4052, 2147483648
    %v4054 = vmul.f32 %v4053, 1.442695
    %v4055 = vpow.pop %v4054
    %v4056 = vadd.f32 %v4055, 1.0
    %v4057 = vrcp.pop %v4056
    %v4058 = vmul.f32 1.0, %v4057
    %v4059 = vadd.f32 %v4018, %v1256
    %v4060 = vmul.f32 %v4051, %v4059
    %v4061 = vadd.f32 %v3538, %v4060
    %v4062 = vtanh.pop %v4061
    %v4063 = vsub.f32 1.0, %v4058
    %v4064 = vsub.f32 %v4062, %v3526
    %v4065 = vmul.f32 %v4063, %v4064
    %v4066 = vadd.f32 %v3526, %v4065
    %v4067 = vsub.f32 %v4044, %v3523
    %v4068 = vmul.f32 %v2409, %v4067
    %v4069 = vadd.f32 %v3523, %v4068
    %v4070 = vsub.f32 %v4066, %v3526
    %v4071 = vmul.f32 %v2401, %v4070
    %v4072 = vadd.f32 %v3526, %v4071
    %v4073 = vmul.f32 %v2409, %v4069
    %v4074 = vpack.c.bf16 %v4073, %v4073
    %4075 = vst [vmem:[%s2419] sm:$0xf] %v4074
    %v4076 = vmul.f32 %v2401, %v4072
    %v4077 = vpack.c.bf16 %v4076, %v4076
    %4078 = vst [vmem:[%s2415 + $0x4] sm:$0xf] %v4077
    %v4079 = vld [vmem:[%s1293] sm:$0xff]
    %v4080 = vld [vmem:[%s1293 + $0x8] sm:$0xff]
    %v4081 = vld [vmem:[%s1293 + $0x10] sm:$0xff]
    %v4082 = vld [vmem:[%s1289 + $0x18] sm:$0xff]
    %v4083 = vld [vmem:[%s1289 + $0x20] sm:$0xff]
    %v4084 = vld [vmem:[%s1289 + $0x28] sm:$0xff]
    %v4085 = vpack.c.bf16 %v4069, %v4069
    %v4086 = vld [vmem:[#allocation8] sm:$0xff]
    %v4087 = vld [vmem:[#allocation8 + $0x8] sm:$0xf]
    %v4088 = vld [vmem:[#allocation8 + $0xc] sm:$0xff]
    %v4089 = vld [vmem:[#allocation8 + $0x14] sm:$0xf]
    %v4090 = vld [vmem:[#allocation8 + $0x18] sm:$0xff]
    %v4091 = vld [vmem:[#allocation8 + $0x20] sm:$0xf]
    %v4092 = vld [vmem:[#allocation8 + $0x24] sm:$0xff]
    %v4093 = vld [vmem:[#allocation8 + $0x2c] sm:$0xf]
    %v4094 = vld [vmem:[#allocation8 + $0x30] sm:$0xff]
    %v4095 = vld [vmem:[#allocation8 + $0x38] sm:$0xf]
    %v4096 = vld [vmem:[#allocation8 + $0x3c] sm:$0xff]
    %v4097 = vld [vmem:[#allocation8 + $0x44] sm:$0xf]
    %v4098 = vld [vmem:[#allocation8 + $0x48] sm:$0xff]
    %v4099 = vld [vmem:[#allocation8 + $0x50] sm:$0xf]
    %v4100 = vld [vmem:[#allocation8 + $0x54] sm:$0xff]
    %v4101 = vld [vmem:[#allocation8 + $0x5c] sm:$0xf]
    %v4102 = vld [vmem:[#allocation8 + $0x60] sm:$0xff]
    %v4103 = vld [vmem:[#allocation8 + $0x68] sm:$0xf]
    %v4104 = vld [vmem:[#allocation8 + $0x6c] sm:$0xff]
    %v4105 = vld [vmem:[#allocation8 + $0x74] sm:$0xf]
    %v4106 = vld [vmem:[#allocation8 + $0x78] sm:$0xff]
    %v4107 = vld [vmem:[#allocation8 + $0x80] sm:$0xf]
    %v4108 = vld [vmem:[#allocation8 + $0x84] sm:$0xff]
    %v4109 = vld [vmem:[#allocation8 + $0x8c] sm:$0xf]
    %v4110 = vld [vmem:[#allocation8 + $0x90] sm:$0xff]
    %v4111 = vld [vmem:[#allocation8 + $0x98] sm:$0xf]
    %v4112 = vld [vmem:[#allocation8 + $0x9c] sm:$0xff]
    %v4113 = vld [vmem:[#allocation8 + $0xa4] sm:$0xf]
    %v4114 = vld [vmem:[#allocation8 + $0xa8] sm:$0xff]
    %v4115 = vld [vmem:[#allocation8 + $0xb0] sm:$0xf]
    %v4116 = vld [vmem:[#allocation8 + $0xb4] sm:$0xff]
    %v4117 = vld [vmem:[#allocation8 + $0xbc] sm:$0xf]
    %v4150 = vunpack.c.l.b16 %v4086
    %v4151 = vunpack.c.h.b16 %v4086
    %v4152 = vunpack.c.l.b16 %v4087
    %v4153 = vunpack.c.l.b16 %v4088
    %v4154 = vunpack.c.h.b16 %v4088
    %v4155 = vunpack.c.l.b16 %v4089
    %v4156 = vunpack.c.l.b16 %v4090
    %v4157 = vunpack.c.h.b16 %v4090
    %v4158 = vunpack.c.l.b16 %v4091
    %v4159 = vunpack.c.l.b16 %v4092
    %v4160 = vunpack.c.h.b16 %v4092
    %v4161 = vunpack.c.l.b16 %v4093
    %v4162 = vunpack.c.l.b16 %v4094
    %v4163 = vunpack.c.h.b16 %v4094
    %v4164 = vunpack.c.l.b16 %v4095
    %v4165 = vunpack.c.l.b16 %v4096
    %v4166 = vunpack.c.h.b16 %v4096
    %v4167 = vunpack.c.l.b16 %v4097
    %v4168 = vunpack.c.l.b16 %v4098
    %v4169 = vunpack.c.h.b16 %v4098
    %v4170 = vunpack.c.l.b16 %v4099
    %v4171 = vunpack.c.l.b16 %v4100
    %v4172 = vunpack.c.h.b16 %v4100
    %v4173 = vunpack.c.l.b16 %v4101
    %v4174 = vunpack.c.l.b16 %v4102
    %v4175 = vunpack.c.h.b16 %v4102
    %v4176 = vunpack.c.l.b16 %v4103
    %v4177 = vunpack.c.l.b16 %v4104
    %v4178 = vunpack.c.h.b16 %v4104
    %v4179 = vunpack.c.l.b16 %v4105
    %v4180 = vunpack.c.l.b16 %v4106
    %v4181 = vunpack.c.h.b16 %v4106
    %v4182 = vunpack.c.l.b16 %v4107
    %v4183 = vunpack.c.l.b16 %v4108
    %v4184 = vunpack.c.h.b16 %v4108
    %v4185 = vunpack.c.l.b16 %v4109
    %v4186 = vunpack.c.l.b16 %v4110
    %v4187 = vunpack.c.h.b16 %v4110
    %v4188 = vunpack.c.l.b16 %v4111
    %v4189 = vunpack.c.l.b16 %v4112
    %v4190 = vunpack.c.h.b16 %v4112
    %v4191 = vunpack.c.l.b16 %v4113
    %v4192 = vunpack.c.l.b16 %v4114
    %v4193 = vunpack.c.h.b16 %v4114
    %v4194 = vunpack.c.l.b16 %v4115
    %v4195 = vunpack.c.l.b16 %v4116
    %v4196 = vunpack.c.h.b16 %v4116
    %v4197 = vunpack.c.l.b16 %v4117
    %v4198 = vpack.c.b16 %v4153, %v4150
    %v4199 = vpack.c.b16 %v4154, %v4151
    %v4200 = vpack.c.b16 %v4155, %v4152
    %v4201 = vpack.c.b16 %v4159, %v4156
    %v4202 = vpack.c.b16 %v4160, %v4157
    %v4203 = vpack.c.b16 %v4161, %v4158
    %v4204 = vpack.c.b16 %v4165, %v4162
    %v4205 = vpack.c.b16 %v4166, %v4163
    %v4206 = vpack.c.b16 %v4167, %v4164
    %v4207 = vpack.c.b16 %v4171, %v4168
    %v4208 = vpack.c.b16 %v4172, %v4169
    %v4209 = vpack.c.b16 %v4173, %v4170
    %v4210 = vpack.c.b16 %v4177, %v4174
    %v4211 = vpack.c.b16 %v4178, %v4175
    %v4212 = vpack.c.b16 %v4179, %v4176
    %v4213 = vpack.c.b16 %v4183, %v4180
    %v4214 = vpack.c.b16 %v4184, %v4181
    %v4215 = vpack.c.b16 %v4185, %v4182
    %v4216 = vpack.c.b16 %v4189, %v4186
    %v4217 = vpack.c.b16 %v4190, %v4187
    %v4218 = vpack.c.b16 %v4191, %v4188
    %v4219 = vpack.c.b16 %v4195, %v4192
    %v4220 = vpack.c.b16 %v4196, %v4193
    %v4221 = vpack.c.b16 %v4197, %v4194
    %4246 = vmatprep.subr.bf16.mxu0 %v4199
    %4247 = vmatpush1.bf16.msra.mxu0 %v4198
    %4248 = vmatprep.subr.bf16.mxu0 %v4202
    %4249 = vmatpush1.bf16.msra.mxu0 %v4201
    %4250 = vmatprep.subr.bf16.mxu0 %v4205
    %4251 = vmatpush1.bf16.msra.mxu0 %v4204
    %4252 = vmatprep.subr.bf16.mxu0 %v4208
    %4253 = vmatpush1.bf16.msra.mxu0 %v4207
    %4254 = vmatprep.subr.bf16.mxu0 %v4211
    %4255 = vmatpush1.bf16.msra.mxu0 %v4210
    %4256 = vmatprep.subr.bf16.mxu0 %v4214
    %4257 = vmatpush1.bf16.msra.mxu0 %v4213
    %4258 = vmatprep.subr.bf16.mxu0 %v4217
    %4259 = vmatpush1.bf16.msra.mxu0 %v4216
    %4260 = vmatprep.subr.bf16.mxu0 %v4220
    %4261 = vmatpush1.bf16.msra.mxu0 %v4219
    %4262 = vmatprep.subr.bf16.mxu0 0
    %4263 = vmatpush1.bf16.msra.mxu0 0
    %4264 = vmatprep.subr.bf16.mxu0 0
    %4265 = vmatpush1.bf16.msra.mxu0 0
    %4266 = vmatprep.subr.bf16.mxu0 0
    %4267 = vmatpush1.bf16.msra.mxu0 0
    %4268 = vmatprep.subr.bf16.mxu0 0
    %4269 = vmatpush1.bf16.msra.mxu0 0
    %4270 = vmatprep.subr.bf16.mxu0 0
    %4271 = vmatpush1.bf16.msra.mxu0 0
    %4272 = vmatprep.subr.bf16.mxu0 0
    %4273 = vmatpush1.bf16.msra.mxu0 0
    %4274 = vmatprep.subr.bf16.mxu0 0
    %4275 = vmatpush1.bf16.msra.mxu0 0
    %4276 = vmatprep.subr.bf16.mxu0 0
    %4277 = vmatpush1.bf16.msra.mxu0 0
    %4278 = vmatprep.mubr.bf16.mxu0 0
    %4279 = vmatmul.mubr.bf16.gmra.mrb[0].mxu0 %v4085
    %v4280 = vpop.f32.mrb[0].mxu0
    %v4281 = vadd.f32 0.0, %v4280
    %v4282 = vpop.f32.mrb[0].mxu0
    %v4283 = vadd.f32 0.0, %v4282
    %v4284 = vpop.f32.mrb[0].mxu0
    %v4285 = vpop.f32.mrb[0].mxu0
    %4286 = vdwg.mxu0
    %4287 = vmatprep.subr.bf16.mxu0 0
    %4288 = vmatpush1.bf16.msra.mxu0 %v4200
    %4289 = vmatprep.subr.bf16.mxu0 0
    %4290 = vmatpush1.bf16.msra.mxu0 %v4203
    %4291 = vmatprep.subr.bf16.mxu0 0
    %4292 = vmatpush1.bf16.msra.mxu0 %v4206
    %4293 = vmatprep.subr.bf16.mxu0 0
    %4294 = vmatpush1.bf16.msra.mxu0 %v4209
    %4295 = vmatprep.subr.bf16.mxu0 0
    %4296 = vmatpush1.bf16.msra.mxu0 %v4212
    %4297 = vmatprep.subr.bf16.mxu0 0
    %4298 = vmatpush1.bf16.msra.mxu0 %v4215
    %4299 = vmatprep.subr.bf16.mxu0 0
    %4300 = vmatpush1.bf16.msra.mxu0 %v4218
    %4301 = vmatprep.subr.bf16.mxu0 0
    %4302 = vmatpush1.bf16.msra.mxu0 %v4221
    %4303 = vmatprep.subr.bf16.mxu0 0
    %4304 = vmatpush1.bf16.msra.mxu0 0
    %4305 = vmatprep.subr.bf16.mxu0 0
    %4306 = vmatpush1.bf16.msra.mxu0 0
    %4307 = vmatprep.subr.bf16.mxu0 0
    %4308 = vmatpush1.bf16.msra.mxu0 0
    %4309 = vmatprep.subr.bf16.mxu0 0
    %4310 = vmatpush1.bf16.msra.mxu0 0
    %4311 = vmatprep.subr.bf16.mxu0 0
    %4312 = vmatpush1.bf16.msra.mxu0 0
    %4313 = vmatprep.subr.bf16.mxu0 0
    %4314 = vmatpush1.bf16.msra.mxu0 0
    %4315 = vmatprep.subr.bf16.mxu0 0
    %4316 = vmatpush1.bf16.msra.mxu0 0
    %4317 = vmatprep.subr.bf16.mxu0 0
    %4318 = vmatpush1.bf16.msra.mxu0 0
    %4319 = vmatprep.mubr.bf16.mxu0 0
    %4320 = vmatmul.mubr.bf16.gmra.mrb[0].mxu0 %v4085
    %v4321 = vpop.f32.mrb[0].mxu0
    %v4322 = vadd.f32 0.0, %v4321
    %v4323 = vpop.f32.mrb[0].mxu0
    %v4324 = vpop.f32.mrb[0].mxu0
    %v4325 = vpop.f32.mrb[0].mxu0
    %4326 = vdwg.mxu0
    %v4327 = vpack.c.bf16 %v4072, %v4072
    %v4328 = vld [vmem:[#allocation9] sm:$0xff]
    %v4329 = vld [vmem:[#allocation9 + $0x8] sm:$0xf]
    %v4330 = vld [vmem:[#allocation9 + $0xc] sm:$0xff]
    %v4331 = vld [vmem:[#allocation9 + $0x14] sm:$0xf]
    %v4332 = vld [vmem:[#allocation9 + $0x18] sm:$0xff]
    %v4333 = vld [vmem:[#allocation9 + $0x20] sm:$0xf]
    %v4334 = vld [vmem:[#allocation9 + $0x24] sm:$0xff]
    %v4335 = vld [vmem:[#allocation9 + $0x2c] sm:$0xf]
    %v4336 = vld [vmem:[#allocation9 + $0x30] sm:$0xff]
    %v4337 = vld [vmem:[#allocation9 + $0x38] sm:$0xf]
    %v4338 = vld [vmem:[#allocation9 + $0x3c] sm:$0xff]
    %v4339 = vld [vmem:[#allocation9 + $0x44] sm:$0xf]
    %v4340 = vld [vmem:[#allocation9 + $0x48] sm:$0xff]
    %v4341 = vld [vmem:[#allocation9 + $0x50] sm:$0xf]
    %v4342 = vld [vmem:[#allocation9 + $0x54] sm:$0xff]
    %v4343 = vld [vmem:[#allocation9 + $0x5c] sm:$0xf]
    %v4344 = vld [vmem:[#allocation9 + $0x60] sm:$0xff]
    %v4345 = vld [vmem:[#allocation9 + $0x68] sm:$0xf]
    %v4346 = vld [vmem:[#allocation9 + $0x6c] sm:$0xff]
    %v4347 = vld [vmem:[#allocation9 + $0x74] sm:$0xf]
    %v4348 = vld [vmem:[#allocation9 + $0x78] sm:$0xff]
    %v4349 = vld [vmem:[#allocation9 + $0x80] sm:$0xf]
    %v4350 = vld [vmem:[#allocation9 + $0x84] sm:$0xff]
    %v4351 = vld [vmem:[#allocation9 + $0x8c] sm:$0xf]
    %v4352 = vld [vmem:[#allocation9 + $0x90] sm:$0xff]
    %v4353 = vld [vmem:[#allocation9 + $0x98] sm:$0xf]
    %v4354 = vld [vmem:[#allocation9 + $0x9c] sm:$0xff]
    %v4355 = vld [vmem:[#allocation9 + $0xa4] sm:$0xf]
    %v4356 = vld [vmem:[#allocation9 + $0xa8] sm:$0xff]
    %v4357 = vld [vmem:[#allocation9 + $0xb0] sm:$0xf]
    %v4358 = vld [vmem:[#allocation9 + $0xb4] sm:$0xff]
    %v4359 = vld [vmem:[#allocation9 + $0xbc] sm:$0xf]
    %v4392 = vunpack.c.l.b16 %v4328
    %v4393 = vunpack.c.h.b16 %v4328
    %v4394 = vunpack.c.l.b16 %v4329
    %v4395 = vunpack.c.l.b16 %v4330
    %v4396 = vunpack.c.h.b16 %v4330
    %v4397 = vunpack.c.l.b16 %v4331
    %v4398 = vunpack.c.l.b16 %v4332
    %v4399 = vunpack.c.h.b16 %v4332
    %v4400 = vunpack.c.l.b16 %v4333
    %v4401 = vunpack.c.l.b16 %v4334
    %v4402 = vunpack.c.h.b16 %v4334
    %v4403 = vunpack.c.l.b16 %v4335
    %v4404 = vunpack.c.l.b16 %v4336
    %v4405 = vunpack.c.h.b16 %v4336
    %v4406 = vunpack.c.l.b16 %v4337
    %v4407 = vunpack.c.l.b16 %v4338
    %v4408 = vunpack.c.h.b16 %v4338
    %v4409 = vunpack.c.l.b16 %v4339
    %v4410 = vunpack.c.l.b16 %v4340
    %v4411 = vunpack.c.h.b16 %v4340
    %v4412 = vunpack.c.l.b16 %v4341
    %v4413 = vunpack.c.l.b16 %v4342
    %v4414 = vunpack.c.h.b16 %v4342
    %v4415 = vunpack.c.l.b16 %v4343
    %v4416 = vunpack.c.l.b16 %v4344
    %v4417 = vunpack.c.h.b16 %v4344
    %v4418 = vunpack.c.l.b16 %v4345
    %v4419 = vunpack.c.l.b16 %v4346
    %v4420 = vunpack.c.h.b16 %v4346
    %v4421 = vunpack.c.l.b16 %v4347
    %v4422 = vunpack.c.l.b16 %v4348
    %v4423 = vunpack.c.h.b16 %v4348
    %v4424 = vunpack.c.l.b16 %v4349
    %v4425 = vunpack.c.l.b16 %v4350
    %v4426 = vunpack.c.h.b16 %v4350
    %v4427 = vunpack.c.l.b16 %v4351
    %v4428 = vunpack.c.l.b16 %v4352
    %v4429 = vunpack.c.h.b16 %v4352
    %v4430 = vunpack.c.l.b16 %v4353
    %v4431 = vunpack.c.l.b16 %v4354
    %v4432 = vunpack.c.h.b16 %v4354
    %v4433 = vunpack.c.l.b16 %v4355
    %v4434 = vunpack.c.l.b16 %v4356
    %v4435 = vunpack.c.h.b16 %v4356
    %v4436 = vunpack.c.l.b16 %v4357
    %v4437 = vunpack.c.l.b16 %v4358
    %v4438 = vunpack.c.h.b16 %v4358
    %v4439 = vunpack.c.l.b16 %v4359
    %v4440 = vpack.c.b16 %v4395, %v4392
    %v4441 = vpack.c.b16 %v4396, %v4393
    %v4442 = vpack.c.b16 %v4397, %v4394
    %v4443 = vpack.c.b16 %v4401, %v4398
    %v4444 = vpack.c.b16 %v4402, %v4399
    %v4445 = vpack.c.b16 %v4403, %v4400
    %v4446 = vpack.c.b16 %v4407, %v4404
    %v4447 = vpack.c.b16 %v4408, %v4405
    %v4448 = vpack.c.b16 %v4409, %v4406
    %v4449 = vpack.c.b16 %v4413, %v4410
    %v4450 = vpack.c.b16 %v4414, %v4411
    %v4451 = vpack.c.b16 %v4415, %v4412
    %v4452 = vpack.c.b16 %v4419, %v4416
    %v4453 = vpack.c.b16 %v4420, %v4417
    %v4454 = vpack.c.b16 %v4421, %v4418
    %v4455 = vpack.c.b16 %v4425, %v4422
    %v4456 = vpack.c.b16 %v4426, %v4423
    %v4457 = vpack.c.b16 %v4427, %v4424
    %v4458 = vpack.c.b16 %v4431, %v4428
    %v4459 = vpack.c.b16 %v4432, %v4429
    %v4460 = vpack.c.b16 %v4433, %v4430
    %v4461 = vpack.c.b16 %v4437, %v4434
    %v4462 = vpack.c.b16 %v4438, %v4435
    %v4463 = vpack.c.b16 %v4439, %v4436
    %4488 = vmatprep.subr.bf16.mxu0 %v4441
    %4489 = vmatpush1.bf16.msra.mxu0 %v4440
    %4490 = vmatprep.subr.bf16.mxu0 %v4444
    %4491 = vmatpush1.bf16.msra.mxu0 %v4443
    %4492 = vmatprep.subr.bf16.mxu0 %v4447
    %4493 = vmatpush1.bf16.msra.mxu0 %v4446
    %4494 = vmatprep.subr.bf16.mxu0 %v4450
    %4495 = vmatpush1.bf16.msra.mxu0 %v4449
    %4496 = vmatprep.subr.bf16.mxu0 %v4453
    %4497 = vmatpush1.bf16.msra.mxu0 %v4452
    %4498 = vmatprep.subr.bf16.mxu0 %v4456
    %4499 = vmatpush1.bf16.msra.mxu0 %v4455
    %4500 = vmatprep.subr.bf16.mxu0 %v4459
    %4501 = vmatpush1.bf16.msra.mxu0 %v4458
    %4502 = vmatprep.subr.bf16.mxu0 %v4462
    %4503 = vmatpush1.bf16.msra.mxu0 %v4461
    %4504 = vmatprep.subr.bf16.mxu0 0
    %4505 = vmatpush1.bf16.msra.mxu0 0
    %4506 = vmatprep.subr.bf16.mxu0 0
    %4507 = vmatpush1.bf16.msra.mxu0 0
    %4508 = vmatprep.subr.bf16.mxu0 0
    %4509 = vmatpush1.bf16.msra.mxu0 0
    %4510 = vmatprep.subr.bf16.mxu0 0
    %4511 = vmatpush1.bf16.msra.mxu0 0
    %4512 = vmatprep.subr.bf16.mxu0 0
    %4513 = vmatpush1.bf16.msra.mxu0 0
    %4514 = vmatprep.subr.bf16.mxu0 0
    %4515 = vmatpush1.bf16.msra.mxu0 0
    %4516 = vmatprep.subr.bf16.mxu0 0
    %4517 = vmatpush1.bf16.msra.mxu0 0
    %4518 = vmatprep.subr.bf16.mxu0 0
    %4519 = vmatpush1.bf16.msra.mxu0 0
    %4520 = vmatprep.mubr.bf16.mxu0 0
    %4521 = vmatmul.mubr.bf16.gmra.mrb[0].mxu0 %v4327
    %v4522 = vpop.f32.mrb[0].mxu0
    %v4523 = vadd.f32 0.0, %v4522
    %v4524 = vpop.f32.mrb[0].mxu0
    %v4525 = vadd.f32 0.0, %v4524
    %v4526 = vpop.f32.mrb[0].mxu0
    %v4527 = vpop.f32.mrb[0].mxu0
    %4528 = vdwg.mxu0
    %4529 = vmatprep.subr.bf16.mxu0 0
    %4530 = vmatpush1.bf16.msra.mxu0 %v4442
    %4531 = vmatprep.subr.bf16.mxu0 0
    %4532 = vmatpush1.bf16.msra.mxu0 %v4445
    %4533 = vmatprep.subr.bf16.mxu0 0
    %4534 = vmatpush1.bf16.msra.mxu0 %v4448
    %4535 = vmatprep.subr.bf16.mxu0 0
    %4536 = vmatpush1.bf16.msra.mxu0 %v4451
    %4537 = vmatprep.subr.bf16.mxu0 0
    %4538 = vmatpush1.bf16.msra.mxu0 %v4454
    %4539 = vmatprep.subr.bf16.mxu0 0
    %4540 = vmatpush1.bf16.msra.mxu0 %v4457
    %4541 = vmatprep.subr.bf16.mxu0 0
    %4542 = vmatpush1.bf16.msra.mxu0 %v4460
    %4543 = vmatprep.subr.bf16.mxu0 0
    %4544 = vmatpush1.bf16.msra.mxu0 %v4463
    %4545 = vmatprep.subr.bf16.mxu0 0
    %4546 = vmatpush1.bf16.msra.mxu0 0
    %4547 = vmatprep.subr.bf16.mxu0 0
    %4548 = vmatpush1.bf16.msra.mxu0 0
    %4549 = vmatprep.subr.bf16.mxu0 0
    %4550 = vmatpush1.bf16.msra.mxu0 0
    %4551 = vmatprep.subr.bf16.mxu0 0
    %4552 = vmatpush1.bf16.msra.mxu0 0
    %4553 = vmatprep.subr.bf16.mxu0 0
    %4554 = vmatpush1.bf16.msra.mxu0 0
    %4555 = vmatprep.subr.bf16.mxu0 0
    %4556 = vmatpush1.bf16.msra.mxu0 0
    %4557 = vmatprep.subr.bf16.mxu0 0
    %4558 = vmatpush1.bf16.msra.mxu0 0
    %4559 = vmatprep.subr.bf16.mxu0 0
    %4560 = vmatpush1.bf16.msra.mxu0 0
    %4561 = vmatprep.mubr.bf16.mxu0 0
    %4562 = vmatmul.mubr.bf16.gmra.mrb[0].mxu0 %v4327
    %v4563 = vpop.f32.mrb[0].mxu0
    %v4564 = vadd.f32 0.0, %v4563
    %v4565 = vpop.f32.mrb[0].mxu0
    %v4566 = vpop.f32.mrb[0].mxu0
    %v4567 = vpop.f32.mrb[0].mxu0
    %4568 = vdwg.mxu0
    %v4569 = vadd.f32 %v4079, %v4281
    %v4570 = vxor.u32 %v4569, 2147483648
    %v4571 = vmul.f32 %v4570, 1.442695
    %v4572 = vpow.pop %v4571
    %v4573 = vadd.f32 %v4572, 1.0
    %v4574 = vrcp.pop %v4573
    %v4575 = vmul.f32 1.0, %v4574
    %v4576 = vadd.f32 %v4080, %v4283
    %v4577 = vxor.u32 %v4576, 2147483648
    %v4578 = vmul.f32 %v4577, 1.442695
    %v4579 = vpow.pop %v4578
    %v4580 = vadd.f32 %v4579, 1.0
    %v4581 = vrcp.pop %v4580
    %v4582 = vmul.f32 1.0, %v4581
    %v4583 = vadd.f32 %v4322, %v1228
    %v4584 = vmul.f32 %v4575, %v4583
    %v4585 = vadd.f32 %v4081, %v4584
    %v4586 = vtanh.pop %v4585
    %v4587 = vsub.f32 1.0, %v4582
    %v4588 = vsub.f32 %v4586, %v4069
    %v4589 = vmul.f32 %v4587, %v4588
    %v4590 = vadd.f32 %v4069, %v4589
    %v4591 = vadd.f32 %v4082, %v4523
    %v4592 = vxor.u32 %v4591, 2147483648
    %v4593 = vmul.f32 %v4592, 1.442695
    %v4594 = vpow.pop %v4593
    %v4595 = vadd.f32 %v4594, 1.0
    %v4596 = vrcp.pop %v4595
    %v4597 = vmul.f32 1.0, %v4596
    %v4598 = vadd.f32 %v4083, %v4525
    %v4599 = vxor.u32 %v4598, 2147483648
    %v4600 = vmul.f32 %v4599, 1.442695
    %v4601 = vpow.pop %v4600
    %v4602 = vadd.f32 %v4601, 1.0
    %v4603 = vrcp.pop %v4602
    %v4604 = vmul.f32 1.0, %v4603
    %v4605 = vadd.f32 %v4564, %v1256
    %v4606 = vmul.f32 %v4597, %v4605
    %v4607 = vadd.f32 %v4084, %v4606
    %v4608 = vtanh.pop %v4607
    %v4609 = vsub.f32 1.0, %v4604
    %v4610 = vsub.f32 %v4608, %v4072
    %v4611 = vmul.f32 %v4609, %v4610
    %v4612 = vadd.f32 %v4072, %v4611
    %v4613 = vsub.f32 %v4590, %v4069
    %v4614 = vmul.f32 %v1843, %v4613
    %v4615 = vadd.f32 %v4069, %v4614
    %v4616 = vsub.f32 %v4612, %v4072
    %v4617 = vmul.f32 %v1835, %v4616
    %v4618 = vadd.f32 %v4072, %v4617
    %v4619 = vmul.f32 %v1843, %v4615
    %v4620 = vpack.c.bf16 %v4619, %v4619
    %4621 = vst [vmem:[%s1853] sm:$0xf] %v4620
    %v4622 = vmul.f32 %v1835, %v4618
    %v4623 = vpack.c.bf16 %v4622, %v4622
    %4624 = vst [vmem:[%s1849 + $0x4] sm:$0xf] %v4623
    %v4625 = vld [vmem:[%s716] sm:$0xff]
    %v4626 = vld [vmem:[%s716 + $0x8] sm:$0xff]
    %v4627 = vld [vmem:[%s716 + $0x10] sm:$0xff]
    %v4628 = vld [vmem:[#allocation2 + $0x18] sm:$0xff]
    %v4629 = vld [vmem:[#allocation2 + $0x20] sm:$0xff]
    %v4630 = vld [vmem:[#allocation2 + $0x28] sm:$0xff]
    %v4631 = vpack.c.bf16 %v4615, %v4615
    %v4632 = vld [vmem:[#allocation8] sm:$0xff]
    %v4633 = vld [vmem:[#allocation8 + $0x8] sm:$0xf]
    %v4634 = vld [vmem:[#allocation8 + $0xc] sm:$0xff]
    %v4635 = vld [vmem:[#allocation8 + $0x14] sm:$0xf]
    %v4636 = vld [vmem:[#allocation8 + $0x18] sm:$0xff]
    %v4637 = vld [vmem:[#allocation8 + $0x20] sm:$0xf]
    %v4638 = vld [vmem:[#allocation8 + $0x24] sm:$0xff]
    %v4639 = vld [vmem:[#allocation8 + $0x2c] sm:$0xf]
    %v4640 = vld [vmem:[#allocation8 + $0x30] sm:$0xff]
    %v4641 = vld [vmem:[#allocation8 + $0x38] sm:$0xf]
    %v4642 = vld [vmem:[#allocation8 + $0x3c] sm:$0xff]
    %v4643 = vld [vmem:[#allocation8 + $0x44] sm:$0xf]
    %v4644 = vld [vmem:[#allocation8 + $0x48] sm:$0xff]
    %v4645 = vld [vmem:[#allocation8 + $0x50] sm:$0xf]
    %v4646 = vld [vmem:[#allocation8 + $0x54] sm:$0xff]
    %v4647 = vld [vmem:[#allocation8 + $0x5c] sm:$0xf]
    %v4648 = vld [vmem:[#allocation8 + $0x60] sm:$0xff]
    %v4649 = vld [vmem:[#allocation8 + $0x68] sm:$0xf]
    %v4650 = vld [vmem:[#allocation8 + $0x6c] sm:$0xff]
    %v4651 = vld [vmem:[#allocation8 + $0x74] sm:$0xf]
    %v4652 = vld [vmem:[#allocation8 + $0x78] sm:$0xff]
    %v4653 = vld [vmem:[#allocation8 + $0x80] sm:$0xf]
    %v4654 = vld [vmem:[#allocation8 + $0x84] sm:$0xff]
    %v4655 = vld [vmem:[#allocation8 + $0x8c] sm:$0xf]
    %v4656 = vld [vmem:[#allocation8 + $0x90] sm:$0xff]
    %v4657 = vld [vmem:[#allocation8 + $0x98] sm:$0xf]
    %v4658 = vld [vmem:[#allocation8 + $0x9c] sm:$0xff]
    %v4659 = vld [vmem:[#allocation8 + $0xa4] sm:$0xf]
    %v4660 = vld [vmem:[#allocation8 + $0xa8] sm:$0xff]
    %v4661 = vld [vmem:[#allocation8 + $0xb0] sm:$0xf]
    %v4662 = vld [vmem:[#allocation8 + $0xb4] sm:$0xff]
    %v4663 = vld [vmem:[#allocation8 + $0xbc] sm:$0xf]
    %v4696 = vunpack.c.l.b16 %v4632
    %v4697 = vunpack.c.h.b16 %v4632
    %v4698 = vunpack.c.l.b16 %v4633
    %v4699 = vunpack.c.l.b16 %v4634
    %v4700 = vunpack.c.h.b16 %v4634
    %v4701 = vunpack.c.l.b16 %v4635
    %v4702 = vunpack.c.l.b16 %v4636
    %v4703 = vunpack.c.h.b16 %v4636
    %v4704 = vunpack.c.l.b16 %v4637
    %v4705 = vunpack.c.l.b16 %v4638
    %v4706 = vunpack.c.h.b16 %v4638
    %v4707 = vunpack.c.l.b16 %v4639
    %v4708 = vunpack.c.l.b16 %v4640
    %v4709 = vunpack.c.h.b16 %v4640
    %v4710 = vunpack.c.l.b16 %v4641
    %v4711 = vunpack.c.l.b16 %v4642
    %v4712 = vunpack.c.h.b16 %v4642
    %v4713 = vunpack.c.l.b16 %v4643
    %v4714 = vunpack.c.l.b16 %v4644
    %v4715 = vunpack.c.h.b16 %v4644
    %v4716 = vunpack.c.l.b16 %v4645
    %v4717 = vunpack.c.l.b16 %v4646
    %v4718 = vunpack.c.h.b16 %v4646
    %v4719 = vunpack.c.l.b16 %v4647
    %v4720 = vunpack.c.l.b16 %v4648
    %v4721 = vunpack.c.h.b16 %v4648
    %v4722 = vunpack.c.l.b16 %v4649
    %v4723 = vunpack.c.l.b16 %v4650
    %v4724 = vunpack.c.h.b16 %v4650
    %v4725 = vunpack.c.l.b16 %v4651
    %v4726 = vunpack.c.l.b16 %v4652
    %v4727 = vunpack.c.h.b16 %v4652
    %v4728 = vunpack.c.l.b16 %v4653
    %v4729 = vunpack.c.l.b16 %v4654
    %v4730 = vunpack.c.h.b16 %v4654
    %v4731 = vunpack.c.l.b16 %v4655
    %v4732 = vunpack.c.l.b16 %v4656
    %v4733 = vunpack.c.h.b16 %v4656
    %v4734 = vunpack.c.l.b16 %v4657
    %v4735 = vunpack.c.l.b16 %v4658
    %v4736 = vunpack.c.h.b16 %v4658
    %v4737 = vunpack.c.l.b16 %v4659
    %v4738 = vunpack.c.l.b16 %v4660
    %v4739 = vunpack.c.h.b16 %v4660
    %v4740 = vunpack.c.l.b16 %v4661
    %v4741 = vunpack.c.l.b16 %v4662
    %v4742 = vunpack.c.h.b16 %v4662
    %v4743 = vunpack.c.l.b16 %v4663
    %v4744 = vpack.c.b16 %v4699, %v4696
    %v4745 = vpack.c.b16 %v4700, %v4697
    %v4746 = vpack.c.b16 %v4701, %v4698
    %v4747 = vpack.c.b16 %v4705, %v4702
    %v4748 = vpack.c.b16 %v4706, %v4703
    %v4749 = vpack.c.b16 %v4707, %v4704
    %v4750 = vpack.c.b16 %v4711, %v4708
    %v4751 = vpack.c.b16 %v4712, %v4709
    %v4752 = vpack.c.b16 %v4713, %v4710
    %v4753 = vpack.c.b16 %v4717, %v4714
    %v4754 = vpack.c.b16 %v4718, %v4715
    %v4755 = vpack.c.b16 %v4719, %v4716
    %v4756 = vpack.c.b16 %v4723, %v4720
    %v4757 = vpack.c.b16 %v4724, %v4721
    %v4758 = vpack.c.b16 %v4725, %v4722
    %v4759 = vpack.c.b16 %v4729, %v4726
    %v4760 = vpack.c.b16 %v4730, %v4727
    %v4761 = vpack.c.b16 %v4731, %v4728
    %v4762 = vpack.c.b16 %v4735, %v4732
    %v4763 = vpack.c.b16 %v4736, %v4733
    %v4764 = vpack.c.b16 %v4737, %v4734
    %v4765 = vpack.c.b16 %v4741, %v4738
    %v4766 = vpack.c.b16 %v4742, %v4739
    %v4767 = vpack.c.b16 %v4743, %v4740
    %4792 = vmatprep.subr.bf16.mxu0 %v4745
    %4793 = vmatpush1.bf16.msra.mxu0 %v4744
    %4794 = vmatprep.subr.bf16.mxu0 %v4748
    %4795 = vmatpush1.bf16.msra.mxu0 %v4747
    %4796 = vmatprep.subr.bf16.mxu0 %v4751
    %4797 = vmatpush1.bf16.msra.mxu0 %v4750
    %4798 = vmatprep.subr.bf16.mxu0 %v4754
    %4799 = vmatpush1.bf16.msra.mxu0 %v4753
    %4800 = vmatprep.subr.bf16.mxu0 %v4757
    %4801 = vmatpush1.bf16.msra.mxu0 %v4756
    %4802 = vmatprep.subr.bf16.mxu0 %v4760
    %4803 = vmatpush1.bf16.msra.mxu0 %v4759
    %4804 = vmatprep.subr.bf16.mxu0 %v4763
    %4805 = vmatpush1.bf16.msra.mxu0 %v4762
    %4806 = vmatprep.subr.bf16.mxu0 %v4766
    %4807 = vmatpush1.bf16.msra.mxu0 %v4765
    %4808 = vmatprep.subr.bf16.mxu0 0
    %4809 = vmatpush1.bf16.msra.mxu0 0
    %4810 = vmatprep.subr.bf16.mxu0 0
    %4811 = vmatpush1.bf16.msra.mxu0 0
    %4812 = vmatprep.subr.bf16.mxu0 0
    %4813 = vmatpush1.bf16.msra.mxu0 0
    %4814 = vmatprep.subr.bf16.mxu0 0
    %4815 = vmatpush1.bf16.msra.mxu0 0
    %4816 = vmatprep.subr.bf16.mxu0 0
    %4817 = vmatpush1.bf16.msra.mxu0 0
    %4818 = vmatprep.subr.bf16.mxu0 0
    %4819 = vmatpush1.bf16.msra.mxu0 0
    %4820 = vmatprep.subr.bf16.mxu0 0
    %4821 = vmatpush1.bf16.msra.mxu0 0
    %4822 = vmatprep.subr.bf16.mxu0 0
    %4823 = vmatpush1.bf16.msra.mxu0 0
    %4824 = vmatprep.mubr.bf16.mxu0 0
    %4825 = vmatmul.mubr.bf16.gmra.mrb[0].mxu0 %v4631
    %v4826 = vpop.f32.mrb[0].mxu0
    %v4827 = vadd.f32 0.0, %v4826
    %v4828 = vpop.f32.mrb[0].mxu0
    %v4829 = vadd.f32 0.0, %v4828
    %v4830 = vpop.f32.mrb[0].mxu0
    %v4831 = vpop.f32.mrb[0].mxu0
    %4832 = vdwg.mxu0
    %4833 = vmatprep.subr.bf16.mxu0 0
    %4834 = vmatpush1.bf16.msra.mxu0 %v4746
    %4835 = vmatprep.subr.bf16.mxu0 0
    %4836 = vmatpush1.bf16.msra.mxu0 %v4749
    %4837 = vmatprep.subr.bf16.mxu0 0
    %4838 = vmatpush1.bf16.msra.mxu0 %v4752
    %4839 = vmatprep.subr.bf16.mxu0 0
    %4840 = vmatpush1.bf16.msra.mxu0 %v4755
    %4841 = vmatprep.subr.bf16.mxu0 0
    %4842 = vmatpush1.bf16.msra.mxu0 %v4758
    %4843 = vmatprep.subr.bf16.mxu0 0
    %4844 = vmatpush1.bf16.msra.mxu0 %v4761
    %4845 = vmatprep.subr.bf16.mxu0 0
    %4846 = vmatpush1.bf16.msra.mxu0 %v4764
    %4847 = vmatprep.subr.bf16.mxu0 0
    %4848 = vmatpush1.bf16.msra.mxu0 %v4767
    %4849 = vmatprep.subr.bf16.mxu0 0
    %4850 = vmatpush1.bf16.msra.mxu0 0
    %4851 = vmatprep.subr.bf16.mxu0 0
    %4852 = vmatpush1.bf16.msra.mxu0 0
    %4853 = vmatprep.subr.bf16.mxu0 0
    %4854 = vmatpush1.bf16.msra.mxu0 0
    %4855 = vmatprep.subr.bf16.mxu0 0
    %4856 = vmatpush1.bf16.msra.mxu0 0
    %4857 = vmatprep.subr.bf16.mxu0 0
    %4858 = vmatpush1.bf16.msra.mxu0 0
    %4859 = vmatprep.subr.bf16.mxu0 0
    %4860 = vmatpush1.bf16.msra.mxu0 0
    %4861 = vmatprep.subr.bf16.mxu0 0
    %4862 = vmatpush1.bf16.msra.mxu0 0
    %4863 = vmatprep.subr.bf16.mxu0 0
    %4864 = vmatpush1.bf16.msra.mxu0 0
    %4865 = vmatprep.mubr.bf16.mxu0 0
    %4866 = vmatmul.mubr.bf16.gmra.mrb[0].mxu0 %v4631
    %v4867 = vpop.f32.mrb[0].mxu0
    %v4868 = vadd.f32 0.0, %v4867
    %v4869 = vpop.f32.mrb[0].mxu0
    %v4870 = vpop.f32.mrb[0].mxu0
    %v4871 = vpop.f32.mrb[0].mxu0
    %4872 = vdwg.mxu0
    %v4873 = vpack.c.bf16 %v4618, %v4618
    %v4874 = vld [vmem:[#allocation9] sm:$0xff]
    %v4875 = vld [vmem:[#allocation9 + $0x8] sm:$0xf]
    %v4876 = vld [vmem:[#allocation9 + $0xc] sm:$0xff]
    %v4877 = vld [vmem:[#allocation9 + $0x14] sm:$0xf]
    %v4878 = vld [vmem:[#allocation9 + $0x18] sm:$0xff]
    %v4879 = vld [vmem:[#allocation9 + $0x20] sm:$0xf]
    %v4880 = vld [vmem:[#allocation9 + $0x24] sm:$0xff]
    %v4881 = vld [vmem:[#allocation9 + $0x2c] sm:$0xf]
    %v4882 = vld [vmem:[#allocation9 + $0x30] sm:$0xff]
    %v4883 = vld [vmem:[#allocation9 + $0x38] sm:$0xf]
    %v4884 = vld [vmem:[#allocation9 + $0x3c] sm:$0xff]
    %v4885 = vld [vmem:[#allocation9 + $0x44] sm:$0xf]
    %v4886 = vld [vmem:[#allocation9 + $0x48] sm:$0xff]
    %v4887 = vld [vmem:[#allocation9 + $0x50] sm:$0xf]
    %v4888 = vld [vmem:[#allocation9 + $0x54] sm:$0xff]
    %v4889 = vld [vmem:[#allocation9 + $0x5c] sm:$0xf]
    %v4890 = vld [vmem:[#allocation9 + $0x60] sm:$0xff]
    %v4891 = vld [vmem:[#allocation9 + $0x68] sm:$0xf]
    %v4892 = vld [vmem:[#allocation9 + $0x6c] sm:$0xff]
    %v4893 = vld [vmem:[#allocation9 + $0x74] sm:$0xf]
    %v4894 = vld [vmem:[#allocation9 + $0x78] sm:$0xff]
    %v4895 = vld [vmem:[#allocation9 + $0x80] sm:$0xf]
    %v4896 = vld [vmem:[#allocation9 + $0x84] sm:$0xff]
    %v4897 = vld [vmem:[#allocation9 + $0x8c] sm:$0xf]
    %v4898 = vld [vmem:[#allocation9 + $0x90] sm:$0xff]
    %v4899 = vld [vmem:[#allocation9 + $0x98] sm:$0xf]
    %v4900 = vld [vmem:[#allocation9 + $0x9c] sm:$0xff]
    %v4901 = vld [vmem:[#allocation9 + $0xa4] sm:$0xf]
    %v4902 = vld [vmem:[#allocation9 + $0xa8] sm:$0xff]
    %v4903 = vld [vmem:[#allocation9 + $0xb0] sm:$0xf]
    %v4904 = vld [vmem:[#allocation9 + $0xb4] sm:$0xff]
    %v4905 = vld [vmem:[#allocation9 + $0xbc] sm:$0xf]
    %v4938 = vunpack.c.l.b16 %v4874
    %v4939 = vunpack.c.h.b16 %v4874
    %v4940 = vunpack.c.l.b16 %v4875
    %v4941 = vunpack.c.l.b16 %v4876
    %v4942 = vunpack.c.h.b16 %v4876
    %v4943 = vunpack.c.l.b16 %v4877
    %v4944 = vunpack.c.l.b16 %v4878
    %v4945 = vunpack.c.h.b16 %v4878
    %v4946 = vunpack.c.l.b16 %v4879
    %v4947 = vunpack.c.l.b16 %v4880
    %v4948 = vunpack.c.h.b16 %v4880
    %v4949 = vunpack.c.l.b16 %v4881
    %v4950 = vunpack.c.l.b16 %v4882
    %v4951 = vunpack.c.h.b16 %v4882
    %v4952 = vunpack.c.l.b16 %v4883
    %v4953 = vunpack.c.l.b16 %v4884
    %v4954 = vunpack.c.h.b16 %v4884
    %v4955 = vunpack.c.l.b16 %v4885
    %v4956 = vunpack.c.l.b16 %v4886
    %v4957 = vunpack.c.h.b16 %v4886
    %v4958 = vunpack.c.l.b16 %v4887
    %v4959 = vunpack.c.l.b16 %v4888
    %v4960 = vunpack.c.h.b16 %v4888
    %v4961 = vunpack.c.l.b16 %v4889
    %v4962 = vunpack.c.l.b16 %v4890
    %v4963 = vunpack.c.h.b16 %v4890
    %v4964 = vunpack.c.l.b16 %v4891
    %v4965 = vunpack.c.l.b16 %v4892
    %v4966 = vunpack.c.h.b16 %v4892
    %v4967 = vunpack.c.l.b16 %v4893
    %v4968 = vunpack.c.l.b16 %v4894
    %v4969 = vunpack.c.h.b16 %v4894
    %v4970 = vunpack.c.l.b16 %v4895
    %v4971 = vunpack.c.l.b16 %v4896
    %v4972 = vunpack.c.h.b16 %v4896
    %v4973 = vunpack.c.l.b16 %v4897
    %v4974 = vunpack.c.l.b16 %v4898
    %v4975 = vunpack.c.h.b16 %v4898
    %v4976 = vunpack.c.l.b16 %v4899
    %v4977 = vunpack.c.l.b16 %v4900
    %v4978 = vunpack.c.h.b16 %v4900
    %v4979 = vunpack.c.l.b16 %v4901
    %v4980 = vunpack.c.l.b16 %v4902
    %v4981 = vunpack.c.h.b16 %v4902
    %v4982 = vunpack.c.l.b16 %v4903
    %v4983 = vunpack.c.l.b16 %v4904
    %v4984 = vunpack.c.h.b16 %v4904
    %v4985 = vunpack.c.l.b16 %v4905
    %v4986 = vpack.c.b16 %v4941, %v4938
    %v4987 = vpack.c.b16 %v4942, %v4939
    %v4988 = vpack.c.b16 %v4943, %v4940
    %v4989 = vpack.c.b16 %v4947, %v4944
    %v4990 = vpack.c.b16 %v4948, %v4945
    %v4991 = vpack.c.b16 %v4949, %v4946
    %v4992 = vpack.c.b16 %v4953, %v4950
    %v4993 = vpack.c.b16 %v4954, %v4951
    %v4994 = vpack.c.b16 %v4955, %v4952
    %v4995 = vpack.c.b16 %v4959, %v4956
    %v4996 = vpack.c.b16 %v4960, %v4957
    %v4997 = vpack.c.b16 %v4961, %v4958
    %v4998 = vpack.c.b16 %v4965, %v4962
    %v4999 = vpack.c.b16 %v4966, %v4963
    %v5000 = vpack.c.b16 %v4967, %v4964
    %v5001 = vpack.c.b16 %v4971, %v4968
    %v5002 = vpack.c.b16 %v4972, %v4969
    %v5003 = vpack.c.b16 %v4973, %v4970
    %v5004 = vpack.c.b16 %v4977, %v4974
    %v5005 = vpack.c.b16 %v4978, %v4975
    %v5006 = vpack.c.b16 %v4979, %v4976
    %v5007 = vpack.c.b16 %v4983, %v4980
    %v5008 = vpack.c.b16 %v4984, %v4981
    %v5009 = vpack.c.b16 %v4985, %v4982
    %5034 = vmatprep.subr.bf16.mxu0 %v4987
    %5035 = vmatpush1.bf16.msra.mxu0 %v4986
    %5036 = vmatprep.subr.bf16.mxu0 %v4990
    %5037 = vmatpush1.bf16.msra.mxu0 %v4989
    %5038 = vmatprep.subr.bf16.mxu0 %v4993
    %5039 = vmatpush1.bf16.msra.mxu0 %v4992
    %5040 = vmatprep.subr.bf16.mxu0 %v4996
    %5041 = vmatpush1.bf16.msra.mxu0 %v4995
    %5042 = vmatprep.subr.bf16.mxu0 %v4999
    %5043 = vmatpush1.bf16.msra.mxu0 %v4998
    %5044 = vmatprep.subr.bf16.mxu0 %v5002
    %5045 = vmatpush1.bf16.msra.mxu0 %v5001
    %5046 = vmatprep.subr.bf16.mxu0 %v5005
    %5047 = vmatpush1.bf16.msra.mxu0 %v5004
    %5048 = vmatprep.subr.bf16.mxu0 %v5008
    %5049 = vmatpush1.bf16.msra.mxu0 %v5007
    %5050 = vmatprep.subr.bf16.mxu0 0
    %5051 = vmatpush1.bf16.msra.mxu0 0
    %5052 = vmatprep.subr.bf16.mxu0 0
    %5053 = vmatpush1.bf16.msra.mxu0 0
    %5054 = vmatprep.subr.bf16.mxu0 0
    %5055 = vmatpush1.bf16.msra.mxu0 0
    %5056 = vmatprep.subr.bf16.mxu0 0
    %5057 = vmatpush1.bf16.msra.mxu0 0
    %5058 = vmatprep.subr.bf16.mxu0 0
    %5059 = vmatpush1.bf16.msra.mxu0 0
    %5060 = vmatprep.subr.bf16.mxu0 0
    %5061 = vmatpush1.bf16.msra.mxu0 0
    %5062 = vmatprep.subr.bf16.mxu0 0
    %5063 = vmatpush1.bf16.msra.mxu0 0
    %5064 = vmatprep.subr.bf16.mxu0 0
    %5065 = vmatpush1.bf16.msra.mxu0 0
    %5066 = vmatprep.mubr.bf16.mxu0 0
    %5067 = vmatmul.mubr.bf16.gmra.mrb[0].mxu0 %v4873
    %v5068 = vpop.f32.mrb[0].mxu0
    %v5069 = vadd.f32 0.0, %v5068
    %v5070 = vpop.f32.mrb[0].mxu0
    %v5071 = vadd.f32 0.0, %v5070
    %v5072 = vpop.f32.mrb[0].mxu0
    %v5073 = vpop.f32.mrb[0].mxu0
    %5074 = vdwg.mxu0
    %5075 = vmatprep.subr.bf16.mxu0 0
    %5076 = vmatpush1.bf16.msra.mxu0 %v4988
    %5077 = vmatprep.subr.bf16.mxu0 0
    %5078 = vmatpush1.bf16.msra.mxu0 %v4991
    %5079 = vmatprep.subr.bf16.mxu0 0
    %5080 = vmatpush1.bf16.msra.mxu0 %v4994
    %5081 = vmatprep.subr.bf16.mxu0 0
    %5082 = vmatpush1.bf16.msra.mxu0 %v4997
    %5083 = vmatprep.subr.bf16.mxu0 0
    %5084 = vmatpush1.bf16.msra.mxu0 %v5000
    %5085 = vmatprep.subr.bf16.mxu0 0
    %5086 = vmatpush1.bf16.msra.mxu0 %v5003
    %5087 = vmatprep.subr.bf16.mxu0 0
    %5088 = vmatpush1.bf16.msra.mxu0 %v5006
    %5089 = vmatprep.subr.bf16.mxu0 0
    %5090 = vmatpush1.bf16.msra.mxu0 %v5009
    %5091 = vmatprep.subr.bf16.mxu0 0
    %5092 = vmatpush1.bf16.msra.mxu0 0
    %5093 = vmatprep.subr.bf16.mxu0 0
    %5094 = vmatpush1.bf16.msra.mxu0 0
    %5095 = vmatprep.subr.bf16.mxu0 0
    %5096 = vmatpush1.bf16.msra.mxu0 0
    %5097 = vmatprep.subr.bf16.mxu0 0
    %5098 = vmatpush1.bf16.msra.mxu0 0
    %5099 = vmatprep.subr.bf16.mxu0 0
    %5100 = vmatpush1.bf16.msra.mxu0 0
    %5101 = vmatprep.subr.bf16.mxu0 0
    %5102 = vmatpush1.bf16.msra.mxu0 0
    %5103 = vmatprep.subr.bf16.mxu0 0
    %5104 = vmatpush1.bf16.msra.mxu0 0
    %5105 = vmatprep.subr.bf16.mxu0 0
    %5106 = vmatpush1.bf16.msra.mxu0 0
    %5107 = vmatprep.mubr.bf16.mxu0 0
    %5108 = vmatmul.mubr.bf16.gmra.mrb[0].mxu0 %v4873
    %v5109 = vpop.f32.mrb[0].mxu0
    %v5110 = vadd.f32 0.0, %v5109
    %v5111 = vpop.f32.mrb[0].mxu0
    %v5112 = vpop.f32.mrb[0].mxu0
    %v5113 = vpop.f32.mrb[0].mxu0
    %5114 = vdwg.mxu0
    %v5115 = vadd.f32 %v4625, %v4827
    %v5116 = vxor.u32 %v5115, 2147483648
    %v5117 = vmul.f32 %v5116, 1.442695
    %v5118 = vpow.pop %v5117
    %v5119 = vadd.f32 %v5118, 1.0
    %v5120 = vrcp.pop %v5119
    %v5121 = vmul.f32 1.0, %v5120
    %v5122 = vadd.f32 %v4626, %v4829
    %v5123 = vxor.u32 %v5122, 2147483648
    %v5124 = vmul.f32 %v5123, 1.442695
    %v5125 = vpow.pop %v5124
    %v5126 = vadd.f32 %v5125, 1.0
    %v5127 = vrcp.pop %v5126
    %v5128 = vmul.f32 1.0, %v5127
    %v5129 = vadd.f32 %v4868, %v1228
    %v5130 = vmul.f32 %v5121, %v5129
    %v5131 = vadd.f32 %v4627, %v5130
    %v5132 = vtanh.pop %v5131
    %v5133 = vsub.f32 1.0, %v5128
    %v5134 = vsub.f32 %v5132, %v4615
    %v5135 = vmul.f32 %v5133, %v5134
    %v5136 = vadd.f32 %v4615, %v5135
    %v5137 = vadd.f32 %v4628, %v5069
    %v5138 = vxor.u32 %v5137, 2147483648
    %v5139 = vmul.f32 %v5138, 1.442695
    %v5140 = vpow.pop %v5139
    %v5141 = vadd.f32 %v5140, 1.0
    %v5142 = vrcp.pop %v5141
    %v5143 = vmul.f32 1.0, %v5142
    %v5144 = vadd.f32 %v4629, %v5071
    %v5145 = vxor.u32 %v5144, 2147483648
    %v5146 = vmul.f32 %v5145, 1.442695
    %v5147 = vpow.pop %v5146
    %v5148 = vadd.f32 %v5147, 1.0
    %v5149 = vrcp.pop %v5148
    %v5150 = vmul.f32 1.0, %v5149
    %v5151 = vadd.f32 %v5110, %v1256
    %v5152 = vmul.f32 %v5143, %v5151
    %v5153 = vadd.f32 %v4630, %v5152
    %v5154 = vtanh.pop %v5153
    %v5155 = vsub.f32 1.0, %v5150
    %v5156 = vsub.f32 %v5154, %v4618
    %v5157 = vmul.f32 %v5155, %v5156
    %v5158 = vadd.f32 %v4618, %v5157
    %v5159 = vsub.f32 %v5136, %v4615
    %v5160 = vmul.f32 %v1278, %v5159
    %v5161 = vadd.f32 %v4615, %v5160
    %v5162 = vsub.f32 %v5158, %v4618
    %v5163 = vmul.f32 %v1270, %v5162
    %v5164 = vadd.f32 %v4618, %v5163
    %v5165 = vmul.f32 %v1278, %v5161
    %v5166 = vpack.c.bf16 %v5165, %v5165
    %5167 = vst [vmem:[%s1287] sm:$0xf] %v5166
    %v5168 = vmul.f32 %v1270, %v5164
    %v5169 = vpack.c.bf16 %v5168, %v5168
    %5170 = vst [vmem:[#allocation11 + $0x4] sm:$0xf] %v5169
    %5171 = vst [vmem:[#allocation12] sm:$0xff] %v5161
    %s5172 = scalar_lea.vmem [#allocation12], 8
    %5173 = vst [vmem:[%s5172] sm:$0xff] %v5164
    // Predicated region
    $region50: #{tpu_custom_call.1} parent=1 // pred_check
      _
    $region51: #{tpu_custom_call.1} parent=1 // pred_check_branch
      %5175 = sbr.rel (0) target = $region53
    $region52: #{tpu_custom_call.1} parent=1 // pred_region
      %s5177 = ssub.s32 1024, 1024
      %5178 = vsyncadd [#allocation5], %s5177
      %s5179 = sshll.u32 [#allocation11], 4
      %s5180 = int_to_ptr.vmem [resolvable:$true] %s5179
      %5185 = dma.vmem_to_hbm [thread:$0]  %s5180, 1024, %s8, [#allocation5], 128, 128, 8
    $region53: #{tpu_custom_call.1} parent=1 // pred_fallthru
      _
    // Predicated region
    $region54: #{tpu_custom_call.1} parent=1 // pred_check
      _
    $region55: #{tpu_custom_call.1} parent=1 // pred_check_branch
      %5187 = sbr.rel (0) target = $region57
    $region56: #{tpu_custom_call.1} parent=1 // pred_region
      %s5189 = ssub.s32 256, 256
      %5190 = vsyncadd [#allocation13], %s5189
      %s5191 = sshll.u32 [#allocation12], 4
      %s5192 = int_to_ptr.vmem [resolvable:$true] %s5191
      %5197 = dma.vmem_to_hbm [thread:$0]  %s5192, 256, %s9, [#allocation13], 128, 128, 8
    $region57: #{tpu_custom_call.1} parent=1 // pred_fallthru
      _
    // Predicated region
    $region58: #{tpu_custom_call.1} parent=1 // pred_check
      _
    $region59: #{tpu_custom_call.1} parent=1 // pred_check_branch
      %5199 = sbr.rel (0) target = $region61
    $region60: #{tpu_custom_call.1} parent=1 // pred_region
      %5200 = dma.done [#allocation5], 1024
    $region61: #{tpu_custom_call.1} parent=1 // pred_fallthru
      _
    // Predicated region
    $region62: #{tpu_custom_call.1} parent=1 // pred_check
      _
    $region63: #{tpu_custom_call.1} parent=1 // pred_check_branch
      %5202 = sbr.rel (0) target = $region65
    $region64: #{tpu_custom_call.1} parent=1 // pred_region
      %5203 = dma.done [#allocation13], 256
    $region65: #{tpu_custom_call.1} parent=1 // pred_fallthru
      _
    %5204 = vsyncpa [#allocation4], 1
    %5205 = vsyncpa [#allocation7], 1
    %5206 = vsyncpa [#allocation10], 1
    %5207 = vsyncpa [#allocation5], 1
    %5208 = vsyncpa [#allocation13], 1

</llo_original>
